<compile_context>
chip_gen: v6e
topology: v6e:2x2x1
jax: 0.10.0
libtpu: 0.0.40
codegen_flags: <defaults>
</compile_context>

<pallas_src>
import jax
import jax.numpy as jnp
from jax import lax
from jax.experimental import pallas as pl
from jax.experimental.pallas import tpu as pltpu

# ----------------------------- model config (small, synthetic, lane-dense) -----
VOCAB = 128
HIDDEN = 256                 # multiple of 128 -> lane-dense activations/weights
N_LAYERS = 2
N_HEADS = 2
HEAD_DIM = HIDDEN // N_HEADS # 128 -> head slices are exact lane-aligned vreg widths
INTERMEDIATE = 512
MAX_POS = 16
TYPE_VOCAB = 2
N_CLASS = 2
LN_EPS = 1e-12
CLS_PAD = 128                # lane-dense classifier output width (sliced to N_CLASS)

BATCH = 2
SEQ = 8

# packed per-layer small-vector layout: one [VEC_ROWS, VEC_W] slab per layer
VEC_ROWS = 8
VEC_W = 3 * HIDDEN           # widest packed row (qkv bias)
# row 0: bqkv | 1: bo | 2: ln1_g | 3: ln1_b | 4: bi | 5: bf | 6: ln2_g | 7: ln2_b


# ----------------------------- in-kernel helpers -------------------------------
def _ln(x, g, b, eps=LN_EPS):
    mean = jnp.mean(x, axis=-1, keepdims=True)
    d = x - mean
    var = jnp.mean(d * d, axis=-1, keepdims=True)
    return d * lax.rsqrt(var + eps) * g + b


def _gelu(x):
    # BERT GELU (tanh approximation).
    # TODO(synk): HuggingFace bert-base-chinese uses exact erf GELU (~1e-3 diff).
    return 0.5 * x * (1.0 + jnp.tanh(0.7978845608028654 * (x + 0.044715 * x * x * x)))


# ----------------------------- fused encoder + head kernel ---------------------
def _encoder_head_kernel(emb_ref, mask_ref, eg_ref, eb_ref,
                         wqkv_ref, wo_ref, wi_ref, wf_ref, vec_ref,
                         pw_ref, pb_ref, cw_ref, cb_ref,
                         logits_ref, h_sc):
    """grid = (batch, layer).  One step == one transformer layer for one batch
    row-tile.  h_sc (VMEM scratch, [SEQ, H]) is the resident hidden state; the
    pooler + classifier run fused on the last layer step and write logits."""
    layer = pl.program_id(1)
    last = pl.num_programs(1) - 1

    # Layer 0: initialize the resident state with the embedding LayerNorm.
    # TODO(synk): at real B*S keep emb out of VMEM residency (layer-0 prologue /
    # input_output_aliases) to free VMEM on v7x's 64 MiB; trivial at toy sizes.
    @pl.when(layer == 0)
    def _():
        h_sc[...] = _ln(emb_ref[...], eg_ref[...], eb_ref[...])
        logits_ref[...] = jnp.zeros_like(logits_ref)

    x = h_sc[...]                                                    # [S, H] f32

    # ---- one packed DMA for all small per-layer vectors ----
    v = vec_ref[0]                                                   # [8, 3H] f32
    bqkv = v[0:1, :]
    bo = v[1:2, :HIDDEN]
    ln1g = v[2:3, :HIDDEN]
    ln1b = v[3:4, :HIDDEN]
    bi = v[4:5, :INTERMEDIATE]
    bff = v[5:6, :HIDDEN]
    ln2g = v[6:7, :HIDDEN]
    ln2b = v[7:8, :HIDDEN]

    wqkv = wqkv_ref[0]                                               # [H, 3H] bf16
    wo = wo_ref[0]                                                   # [H, H]  bf16
    wi = wi_ref[0]                                                   # [H, I]  bf16
    wf = wf_ref[0]                                                   # [I, H]  bf16

    # ---- fused QKV projection: one MXU call, [S, 3H] (bf16 ops, f32 acc) ----
    qkv = jnp.dot(x.astype(jnp.bfloat16), wqkv,
                  preferred_element_type=jnp.float32) + bqkv

    # ---- multi-head self-attention: heads are 128-lane-aligned slices ----
    scale = 1.0 / (HEAD_DIM ** 0.5)
    bias = mask_ref[0]                                               # [1, S] additive key mask

    attn = jnp.zeros((SEQ, HIDDEN), jnp.float32)
    for h in range(N_HEADS):                                         # tiny static loop
        c = h * HEAD_DIM
        q = qkv[:, c:c + HEAD_DIM].astype(jnp.bfloat16)              # [S, 128]
        k = qkv[:, HIDDEN + c:HIDDEN + c + HEAD_DIM].astype(jnp.bfloat16)
        vv = qkv[:, 2 * HIDDEN + c:2 * HIDDEN + c + HEAD_DIM].astype(jnp.bfloat16)
        # q @ k^T without an explicit transpose: contract last axes.
        s = lax.dot_general(q, k, (((1,), (1,)), ((), ())),
                            preferred_element_type=jnp.float32) * scale + bias
        s = s - jnp.max(s, axis=-1, keepdims=True)
        p = jnp.exp(s)
        p = p * pl.reciprocal(jnp.sum(p, axis=-1, keepdims=True), approx=True)
        ctx = jnp.dot(p.astype(jnp.bfloat16), vv,
                      preferred_element_type=jnp.float32)            # [S, 128]
        # fold the output projection per head -> no lane-axis concat of heads
        attn = attn + jnp.dot(ctx.astype(jnp.bfloat16), wo[c:c + HEAD_DIM, :],
                              preferred_element_type=jnp.float32)

    # ---- residual + LN1 ----
    h1 = _ln(attn + bo + x, ln1g, ln1b)

    # ---- FFN (GELU) + residual + LN2 ----
    inter = _gelu(jnp.dot(h1.astype(jnp.bfloat16), wi,
                          preferred_element_type=jnp.float32) + bi)
    ffn = jnp.dot(inter.astype(jnp.bfloat16), wf,
                  preferred_element_type=jnp.float32) + bff
    h_new = _ln(ffn + h1, ln2g, ln2b)
    h_sc[...] = h_new

    # ---- fused pooler + classifier on the final layer step ----
    @pl.when(layer == last)
    def _():
        cls = h_new[0:1, :]                                          # [CLS] row of this batch tile
        pooled = jnp.tanh(jnp.dot(cls.astype(jnp.bfloat16), pw_ref[...],
                                  preferred_element_type=jnp.float32) + pb_ref[...])
        # TODO(synk): nn.Dropout(0.5) is stochastic in train mode; eval-mode identity here.
        logits = jnp.dot(pooled.astype(jnp.bfloat16), cw_ref[...],
                         preferred_element_type=jnp.float32) + cb_ref[...]
        logits_ref[...] = logits.reshape(1, 1, CLS_PAD)


def bert_encoder_and_head(emb, mask_bias, params):
    """emb: [B*S, H] (pre-LN embedding sum, f32), mask_bias: [B, 1, S] additive bias."""
    H, I = HIDDEN, INTERMEDIATE

    def full(shape):
        n = len(shape)
        return pl.BlockSpec(shape, lambda b, l: (0,) * n)

    def per_layer(shape):
        n = len(shape)
        return pl.BlockSpec((1,) + shape, lambda b, l: (l,) + (0,) * n)

    logits_pad = pl.pallas_call(
        _encoder_head_kernel,
        out_shape=jax.ShapeDtypeStruct((BATCH, 1, CLS_PAD), jnp.float32),
        grid_spec=pltpu.PrefetchScalarGridSpec(
            num_scalar_prefetch=0,
            grid=(BATCH, N_LAYERS),                        # batch parallel, layers serial
            in_specs=[
                pl.BlockSpec((SEQ, H), lambda b, l: (b, 0)),        # emb rows of batch b
                pl.BlockSpec((1, 1, SEQ), lambda b, l: (b, 0, 0)),  # additive mask bias
                full((1, H)),                                        # emb_ln_g
                full((1, H)),                                        # emb_ln_b
                per_layer((H, 3 * H)),                               # wqkv (bf16)
                per_layer((H, H)),                                   # wo   (bf16)
                per_layer((H, I)),                                   # wi   (bf16)
                per_layer((I, H)),                                   # wf   (bf16)
                per_layer((VEC_ROWS, VEC_W)),                        # packed small vectors (f32)
                full((H, H)),                                        # pooler w (bf16)
                full((1, H)),                                        # pooler b
                full((H, CLS_PAD)),                                  # classifier w (pre-padded, bf16)
                full((1, CLS_PAD)),                                  # classifier b (pre-padded)
            ],
            out_specs=pl.BlockSpec((1, 1, CLS_PAD), lambda b, l: (b, 0, 0)),
            scratch_shapes=[pltpu.VMEM((SEQ, H), jnp.float32)],      # resident hidden state
        ),
        compiler_params=pltpu.CompilerParams(
            dimension_semantics=("parallel", "arbitrary"),
            vmem_limit_bytes=32 * 1024 * 1024,
        ),
    )(emb, mask_bias,
      params["emb_ln_g"], params["emb_ln_b"],
      params["wqkv"], params["wo"], params["wi"], params["wf"], params["layer_vecs"],
      params["pool_w"], params["pool_b"], params["cls_w_pad"], params["cls_b_pad"])

    return logits_pad.reshape(BATCH, CLS_PAD)[:, :N_CLASS]


# ----------------------------- parameter init ----------------------------------
def init_params(key):
    def nrm(k, shape, scale=0.02):
        return scale * jax.random.normal(k, shape, dtype=jnp.float32)

    keys = iter(jax.random.split(key, 16))
    L, H, I = N_LAYERS, HIDDEN, INTERMEDIATE

    # packed per-layer vectors (all biases/betas zero, LN gammas one at init)
    layer_vecs = jnp.zeros((L, VEC_ROWS, VEC_W), jnp.float32)
    layer_vecs = layer_vecs.at[:, 2, :H].set(1.0)   # ln1 gamma
    layer_vecs = layer_vecs.at[:, 6, :H].set(1.0)   # ln2 gamma

    # classifier head: nn.Linear(hidden_size, n_class), pre-padded to CLS_PAD once
    cls_w = nrm(next(keys), (H, N_CLASS))
    cls_b = jnp.zeros((N_CLASS,), jnp.float32)
    cls_w_pad = jnp.zeros((H, CLS_PAD), jnp.float32).at[:, :N_CLASS].set(cls_w)
    cls_b_pad = jnp.zeros((1, CLS_PAD), jnp.float32).at[:, :N_CLASS].set(cls_b[None, :])

    return {
        "word_emb": nrm(next(keys), (VOCAB, H)),
        "pos_emb": nrm(next(keys), (MAX_POS, H)),
        "type_emb": nrm(next(keys), (TYPE_VOCAB, H)),
        "emb_ln_g": jnp.ones((1, H), jnp.float32),
        "emb_ln_b": jnp.zeros((1, H), jnp.float32),
        # stacked per-layer matmul weights, stored bf16 (f32 accumulation in-kernel)
        "wqkv": nrm(next(keys), (L, H, 3 * H)).astype(jnp.bfloat16),
        "wo": nrm(next(keys), (L, H, H)).astype(jnp.bfloat16),
        "wi": nrm(next(keys), (L, H, I)).astype(jnp.bfloat16),
        "wf": nrm(next(keys), (L, I, H)).astype(jnp.bfloat16),
        "layer_vecs": layer_vecs,
        # pooler: dense(H,H) + tanh
        "pool_w": nrm(next(keys), (H, H)).astype(jnp.bfloat16),
        "pool_b": jnp.zeros((1, H), jnp.float32),
        "cls_w_pad": cls_w_pad.astype(jnp.bfloat16),
        "cls_b_pad": cls_b_pad,
    }


# ----------------------------- forward pass -------------------------------------
def bert_classify_forward(params, input_ids, attention_mask, token_type_ids):
    B, S = input_ids.shape
    # embeddings (gather is XLA glue; everything downstream runs in the fused kernel)
    emb = (params["word_emb"][input_ids]
           + params["pos_emb"][jnp.arange(S)][None, :, :]
           + params["type_emb"][token_type_ids]).reshape(B * S, HIDDEN)
    # HF extended-attention-mask semantics: key masking only (pad rows not zeroed;
    # harmless since only the [CLS] row feeds the classifier).
    mask_bias = ((1.0 - attention_mask.astype(jnp.float32)) * -1e9).reshape(B, 1, S)
    return bert_encoder_and_head(emb, mask_bias, params)             # [B, N_CLASS]


# ----------------------------- main ---------------------------------------------
if __name__ == "__main__":
    key = jax.random.PRNGKey(0)
    k_param, k_ids = jax.random.split(key, 2)

    params = init_params(k_param)

    input_ids = jax.random.randint(k_ids, (BATCH, SEQ), 0, VOCAB, dtype=jnp.int32)
    attention_mask = jnp.array(
        [[1] * SEQ, [1] * (SEQ - 2) + [0, 0]], dtype=jnp.int32)     # pad last 2 of row 1
    token_type_ids = jnp.array(
        [[0] * (SEQ // 2) + [1] * (SEQ // 2)] * BATCH, dtype=jnp.int32)

    logits = bert_classify_forward(params, input_ids, attention_mask, token_type_ids)
    logits = jax.block_until_ready(logits)

    assert logits.shape == (BATCH, N_CLASS), logits.shape
    assert bool(jnp.all(jnp.isfinite(logits)))
    print("KERNEL_OK")
</pallas_src>

<mosaic_0001>
module attributes {stable_mosaic.version = 11 : i64} {
  func.func @_encoder_head_kernel(%arg0: i32, %arg1: i32, %arg2: memref<8x256xf32, #tpu.memory_space<vmem>>, %arg3: memref<1x1x8xf32, #tpu.memory_space<vmem>>, %arg4: memref<1x256xf32, #tpu.memory_space<vmem>>, %arg5: memref<1x256xf32, #tpu.memory_space<vmem>>, %arg6: memref<1x256x768xbf16, #tpu.memory_space<vmem>>, %arg7: memref<1x256x256xbf16, #tpu.memory_space<vmem>>, %arg8: memref<1x256x512xbf16, #tpu.memory_space<vmem>>, %arg9: memref<1x512x256xbf16, #tpu.memory_space<vmem>>, %arg10: memref<1x8x768xf32, #tpu.memory_space<vmem>>, %arg11: memref<256x256xbf16, #tpu.memory_space<vmem>>, %arg12: memref<1x256xf32, #tpu.memory_space<vmem>>, %arg13: memref<256x128xbf16, #tpu.memory_space<vmem>>, %arg14: memref<1x128xf32, #tpu.memory_space<vmem>>, %arg15: memref<1x1x128xf32, #tpu.memory_space<vmem>>, %arg16: memref<8x256xf32, #tpu.memory_space<vmem>>) attributes {dimension_semantics = [#tpu.dimension_semantics<parallel>, #tpu.dimension_semantics<arbitrary>], iteration_bounds = array<i64: 2, 2>, scalar_prefetch = 0 : i64, scratch_operands = 1 : i64, tpu.core_type = #tpu.core_type<tc>, window_params = [{transform_indices = @transform_0, window_bounds = array<i64: 8, 256>}, {transform_indices = @transform_1, window_bounds = array<i64: 1, 1, 8>}, {pipeline_mode = #tpu.pipeline_mode<synchronous>, transform_indices = @transform_2, window_bounds = array<i64: 1, 256>}, {pipeline_mode = #tpu.pipeline_mode<synchronous>, transform_indices = @transform_3, window_bounds = array<i64: 1, 256>}, {transform_indices = @transform_4, window_bounds = array<i64: 1, 256, 768>}, {transform_indices = @transform_5, window_bounds = array<i64: 1, 256, 256>}, {transform_indices = @transform_6, window_bounds = array<i64: 1, 256, 512>}, {transform_indices = @transform_7, window_bounds = array<i64: 1, 512, 256>}, {transform_indices = @transform_8, window_bounds = array<i64: 1, 8, 768>}, {pipeline_mode = #tpu.pipeline_mode<synchronous>, transform_indices = @transform_9, window_bounds = array<i64: 256, 256>}, {pipeline_mode = #tpu.pipeline_mode<synchronous>, transform_indices = @transform_10, window_bounds = array<i64: 1, 256>}, {pipeline_mode = #tpu.pipeline_mode<synchronous>, transform_indices = @transform_11, window_bounds = array<i64: 256, 128>}, {pipeline_mode = #tpu.pipeline_mode<synchronous>, transform_indices = @transform_12, window_bounds = array<i64: 1, 128>}, {transform_indices = @transform_13, window_bounds = array<i64: 1, 1, 128>}]} {
    %c0_i32 = arith.constant 0 : i32
    %0 = arith.cmpi eq, %arg1, %c0_i32 : i32
    %1 = arith.extui %0 : i1 to i32
    %c0_i32_0 = arith.constant 0 : i32
    %2 = arith.cmpi ne, %1, %c0_i32_0 : i32
    scf.if %2 {
      %c0_52 = arith.constant 0 : index
      %c0_53 = arith.constant 0 : index
      %152 = vector.load %arg2[%c0_52, %c0_53] : memref<8x256xf32, #tpu.memory_space<vmem>>, vector<8x256xf32>
      %c0_54 = arith.constant 0 : index
      %c0_55 = arith.constant 0 : index
      %153 = vector.load %arg4[%c0_54, %c0_55] : memref<1x256xf32, #tpu.memory_space<vmem>>, vector<1x256xf32>
      %c0_56 = arith.constant 0 : index
      %c0_57 = arith.constant 0 : index
      %154 = vector.load %arg5[%c0_56, %c0_57] : memref<1x256xf32, #tpu.memory_space<vmem>>, vector<1x256xf32>
      %cst_58 = arith.constant dense<0.000000e+00> : vector<8xf32>
      %155 = vector.multi_reduction <add>, %152, %cst_58 [1] : vector<8x256xf32> to vector<8xf32>
      %156 = vector.shape_cast %155 : vector<8xf32> to vector<8x1xf32>
      %cst_59 = arith.constant 2.560000e+02 : f32
      %157 = vector.broadcast %cst_59 : f32 to vector<8x1xf32>
      %158 = arith.divf %156, %157 : vector<8x1xf32>
      %159 = vector.broadcast %158 : vector<8x1xf32> to vector<8x256xf32>
      %160 = arith.subf %152, %159 : vector<8x256xf32>
      %161 = arith.mulf %160, %160 : vector<8x256xf32>
      %cst_60 = arith.constant dense<0.000000e+00> : vector<8xf32>
      %162 = vector.multi_reduction <add>, %161, %cst_60 [1] : vector<8x256xf32> to vector<8xf32>
      %163 = vector.shape_cast %162 : vector<8xf32> to vector<8x1xf32>
      %cst_61 = arith.constant 2.560000e+02 : f32
      %164 = vector.broadcast %cst_61 : f32 to vector<8x1xf32>
      %165 = arith.divf %163, %164 : vector<8x1xf32>
      %cst_62 = arith.constant 9.99999996E-13 : f32
      %166 = vector.broadcast %cst_62 : f32 to vector<8x1xf32>
      %167 = arith.addf %165, %166 : vector<8x1xf32>
      %168 = math.rsqrt %167 : vector<8x1xf32>
      %169 = vector.broadcast %168 : vector<8x1xf32> to vector<8x256xf32>
      %170 = arith.mulf %160, %169 : vector<8x256xf32>
      %171 = vector.broadcast %153 : vector<1x256xf32> to vector<8x256xf32>
      %172 = arith.mulf %170, %171 : vector<8x256xf32>
      %173 = vector.broadcast %154 : vector<1x256xf32> to vector<8x256xf32>
      %174 = arith.addf %172, %173 : vector<8x256xf32>
      %c0_63 = arith.constant 0 : index
      %c0_64 = arith.constant 0 : index
      %175 = vector.load %arg16[%c0_63, %c0_64] : memref<8x256xf32, #tpu.memory_space<vmem>>, vector<8x256xf32>
      tpu.vector_store %arg16[%c0_63, %c0_64], %174 {strides = array<i32>} : memref<8x256xf32, #tpu.memory_space<vmem>>, vector<8x256xf32>,
      %cst_65 = arith.constant 0.000000e+00 : f32
      %176 = vector.broadcast %cst_65 : f32 to vector<1x1x128xf32>
      %c0_66 = arith.constant 0 : index
      %c0_67 = arith.constant 0 : index
      %c0_68 = arith.constant 0 : index
      %177 = vector.load %arg15[%c0_66, %c0_67, %c0_68] : memref<1x1x128xf32, #tpu.memory_space<vmem>>, vector<1x1x128xf32>
      tpu.vector_store %arg15[%c0_66, %c0_67, %c0_68], %176 {strides = array<i32>} : memref<1x1x128xf32, #tpu.memory_space<vmem>>, vector<1x1x128xf32>,
    } else {
    }
    %c0 = arith.constant 0 : index
    %c0_1 = arith.constant 0 : index
    %3 = vector.load %arg16[%c0, %c0_1] : memref<8x256xf32, #tpu.memory_space<vmem>>, vector<8x256xf32>
    %c0_2 = arith.constant 0 : index
    %c0_3 = arith.constant 0 : index
    %c0_4 = arith.constant 0 : index
    %4 = vector.load %arg10[%c0_2, %c0_3, %c0_4] : memref<1x8x768xf32, #tpu.memory_space<vmem>>, vector<1x8x768xf32>
    %5 = vector.shape_cast %4 : vector<1x8x768xf32> to vector<8x768xf32>
    %6 = vector.extract_strided_slice %5 {offsets = [0, 0], sizes = [1, 768], strides = [1, 1]} : vector<8x768xf32> to vector<1x768xf32>
    %7 = vector.extract_strided_slice %5 {offsets = [1, 0], sizes = [1, 256], strides = [1, 1]} : vector<8x768xf32> to vector<1x256xf32>
    %8 = vector.extract_strided_slice %5 {offsets = [2, 0], sizes = [1, 256], strides = [1, 1]} : vector<8x768xf32> to vector<1x256xf32>
    %9 = vector.extract_strided_slice %5 {offsets = [3, 0], sizes = [1, 256], strides = [1, 1]} : vector<8x768xf32> to vector<1x256xf32>
    %10 = vector.extract_strided_slice %5 {offsets = [4, 0], sizes = [1, 512], strides = [1, 1]} : vector<8x768xf32> to vector<1x512xf32>
    %11 = vector.extract_strided_slice %5 {offsets = [5, 0], sizes = [1, 256], strides = [1, 1]} : vector<8x768xf32> to vector<1x256xf32>
    %12 = vector.extract_strided_slice %5 {offsets = [6, 0], sizes = [1, 256], strides = [1, 1]} : vector<8x768xf32> to vector<1x256xf32>
    %13 = vector.extract_strided_slice %5 {offsets = [7, 0], sizes = [1, 256], strides = [1, 1]} : vector<8x768xf32> to vector<1x256xf32>
    %c0_5 = arith.constant 0 : index
    %c0_6 = arith.constant 0 : index
    %c0_7 = arith.constant 0 : index
    %14 = vector.load %arg6[%c0_5, %c0_6, %c0_7] : memref<1x256x768xbf16, #tpu.memory_space<vmem>>, vector<1x256x768xbf16>
    %15 = vector.shape_cast %14 : vector<1x256x768xbf16> to vector<256x768xbf16>
    %c0_8 = arith.constant 0 : index
    %c0_9 = arith.constant 0 : index
    %c0_10 = arith.constant 0 : index
    %16 = vector.load %arg7[%c0_8, %c0_9, %c0_10] : memref<1x256x256xbf16, #tpu.memory_space<vmem>>, vector<1x256x256xbf16>
    %17 = vector.shape_cast %16 : vector<1x256x256xbf16> to vector<256x256xbf16>
    %c0_11 = arith.constant 0 : index
    %c0_12 = arith.constant 0 : index
    %c0_13 = arith.constant 0 : index
    %18 = vector.load %arg8[%c0_11, %c0_12, %c0_13] : memref<1x256x512xbf16, #tpu.memory_space<vmem>>, vector<1x256x512xbf16>
    %19 = vector.shape_cast %18 : vector<1x256x512xbf16> to vector<256x512xbf16>
    %c0_14 = arith.constant 0 : index
    %c0_15 = arith.constant 0 : index
    %c0_16 = arith.constant 0 : index
    %20 = vector.load %arg9[%c0_14, %c0_15, %c0_16] : memref<1x512x256xbf16, #tpu.memory_space<vmem>>, vector<1x512x256xbf16>
    %21 = vector.shape_cast %20 : vector<1x512x256xbf16> to vector<512x256xbf16>
    %22 = arith.truncf %3 : vector<8x256xf32> to vector<8x256xbf16>
    %cst = arith.constant dense<0.000000e+00> : vector<8x768xf32>
    %23 = tpu.matmul %22, %15, %cst {dimension_numbers = #tpu.dot_dimension_numbers<[1], [0], [0], [1], [0, 0, 1, 1], [], []>} : vector<8x256xbf16>, vector<256x768xbf16>, vector<8x768xf32> -> vector<8x768xf32>
    %24 = vector.broadcast %6 : vector<1x768xf32> to vector<8x768xf32>
    %25 = arith.addf %23, %24 : vector<8x768xf32>
    %c0_17 = arith.constant 0 : index
    %c0_18 = arith.constant 0 : index
    %c0_19 = arith.constant 0 : index
    %26 = vector.load %arg3[%c0_17, %c0_18, %c0_19] : memref<1x1x8xf32, #tpu.memory_space<vmem>>, vector<1x1x8xf32>
    %27 = vector.shape_cast %26 : vector<1x1x8xf32> to vector<1x8xf32>
    %cst_20 = arith.constant 0.000000e+00 : f32
    %28 = vector.broadcast %cst_20 : f32 to vector<8x256xf32>
    %29 = vector.extract_strided_slice %25 {offsets = [0, 0], sizes = [8, 128], strides = [1, 1]} : vector<8x768xf32> to vector<8x128xf32>
    %30 = arith.truncf %29 : vector<8x128xf32> to vector<8x128xbf16>
    %31 = vector.extract_strided_slice %25 {offsets = [0, 256], sizes = [8, 128], strides = [1, 1]} : vector<8x768xf32> to vector<8x128xf32>
    %32 = arith.truncf %31 : vector<8x128xf32> to vector<8x128xbf16>
    %33 = vector.extract_strided_slice %25 {offsets = [0, 512], sizes = [8, 128], strides = [1, 1]} : vector<8x768xf32> to vector<8x128xf32>
    %34 = arith.truncf %33 : vector<8x128xf32> to vector<8x128xbf16>
    %cst_21 = arith.constant dense<0.000000e+00> : vector<8x8xf32>
    %35 = tpu.matmul %30, %32, %cst_21 {dimension_numbers = #tpu.dot_dimension_numbers<[1], [1], [0], [0], [0, 0, 1, 0], [], []>} : vector<8x128xbf16>, vector<8x128xbf16>, vector<8x8xf32> -> vector<8x8xf32>
    %cst_22 = arith.constant 0.0883883461 : f32
    %36 = vector.broadcast %cst_22 : f32 to vector<8x8xf32>
    %37 = arith.mulf %35, %36 : vector<8x8xf32>
    %38 = vector.broadcast %27 : vector<1x8xf32> to vector<8x8xf32>
    %39 = arith.addf %37, %38 : vector<8x8xf32>
    %cst_23 = arith.constant dense<0xFF800000> : vector<8xf32>
    %40 = vector.multi_reduction <maximumf>, %39, %cst_23 [1] : vector<8x8xf32> to vector<8xf32>
    %41 = vector.shape_cast %40 : vector<8xf32> to vector<8x1xf32>
    %42 = vector.broadcast %41 : vector<8x1xf32> to vector<8x8xf32>
    %43 = arith.subf %39, %42 : vector<8x8xf32>
    %44 = math.exp %43 : vector<8x8xf32>
    %cst_24 = arith.constant dense<0.000000e+00> : vector<8xf32>
    %45 = vector.multi_reduction <add>, %44, %cst_24 [1] : vector<8x8xf32> to vector<8xf32>
    %46 = vector.shape_cast %45 : vector<8xf32> to vector<8x1xf32>
    %47 = tpu.reciprocal %46 {approx = true} : vector<8x1xf32> -> vector<8x1xf32>
    %48 = vector.broadcast %47 : vector<8x1xf32> to vector<8x8xf32>
    %49 = arith.mulf %44, %48 : vector<8x8xf32>
    %50 = arith.truncf %49 : vector<8x8xf32> to vector<8x8xbf16>
    %cst_25 = arith.constant dense<0.000000e+00> : vector<8x128xf32>
    %51 = tpu.matmul %50, %34, %cst_25 {dimension_numbers = #tpu.dot_dimension_numbers<[1], [0], [0], [1], [0, 0, 1, 1], [], []>} : vector<8x8xbf16>, vector<8x128xbf16>, vector<8x128xf32> -> vector<8x128xf32>
    %52 = arith.truncf %51 : vector<8x128xf32> to vector<8x128xbf16>
    %53 = vector.extract_strided_slice %17 {offsets = [0, 0], sizes = [128, 256], strides = [1, 1]} : vector<256x256xbf16> to vector<128x256xbf16>
    %cst_26 = arith.constant dense<0.000000e+00> : vector<8x256xf32>
    %54 = tpu.matmul %52, %53, %cst_26 {dimension_numbers = #tpu.dot_dimension_numbers<[1], [0], [0], [1], [0, 0, 1, 1], [], []>} : vector<8x128xbf16>, vector<128x256xbf16>, vector<8x256xf32> -> vector<8x256xf32>
    %55 = arith.addf %28, %54 : vector<8x256xf32>
    %56 = vector.extract_strided_slice %25 {offsets = [0, 128], sizes = [8, 128], strides = [1, 1]} : vector<8x768xf32> to vector<8x128xf32>
    %57 = arith.truncf %56 : vector<8x128xf32> to vector<8x128xbf16>
    %58 = vector.extract_strided_slice %25 {offsets = [0, 384], sizes = [8, 128], strides = [1, 1]} : vector<8x768xf32> to vector<8x128xf32>
    %59 = arith.truncf %58 : vector<8x128xf32> to vector<8x128xbf16>
    %60 = vector.extract_strided_slice %25 {offsets = [0, 640], sizes = [8, 128], strides = [1, 1]} : vector<8x768xf32> to vector<8x128xf32>
    %61 = arith.truncf %60 : vector<8x128xf32> to vector<8x128xbf16>
    %cst_27 = arith.constant dense<0.000000e+00> : vector<8x8xf32>
    %62 = tpu.matmul %57, %59, %cst_27 {dimension_numbers = #tpu.dot_dimension_numbers<[1], [1], [0], [0], [0, 0, 1, 0], [], []>} : vector<8x128xbf16>, vector<8x128xbf16>, vector<8x8xf32> -> vector<8x8xf32>
    %cst_28 = arith.constant 0.0883883461 : f32
    %63 = vector.broadcast %cst_28 : f32 to vector<8x8xf32>
    %64 = arith.mulf %62, %63 : vector<8x8xf32>
    %65 = vector.broadcast %27 : vector<1x8xf32> to vector<8x8xf32>
    %66 = arith.addf %64, %65 : vector<8x8xf32>
    %cst_29 = arith.constant dense<0xFF800000> : vector<8xf32>
    %67 = vector.multi_reduction <maximumf>, %66, %cst_29 [1] : vector<8x8xf32> to vector<8xf32>
    %68 = vector.shape_cast %67 : vector<8xf32> to vector<8x1xf32>
    %69 = vector.broadcast %68 : vector<8x1xf32> to vector<8x8xf32>
    %70 = arith.subf %66, %69 : vector<8x8xf32>
    %71 = math.exp %70 : vector<8x8xf32>
    %cst_30 = arith.constant dense<0.000000e+00> : vector<8xf32>
    %72 = vector.multi_reduction <add>, %71, %cst_30 [1] : vector<8x8xf32> to vector<8xf32>
    %73 = vector.shape_cast %72 : vector<8xf32> to vector<8x1xf32>
    %74 = tpu.reciprocal %73 {approx = true} : vector<8x1xf32> -> vector<8x1xf32>
    %75 = vector.broadcast %74 : vector<8x1xf32> to vector<8x8xf32>
    %76 = arith.mulf %71, %75 : vector<8x8xf32>
    %77 = arith.truncf %76 : vector<8x8xf32> to vector<8x8xbf16>
    %cst_31 = arith.constant dense<0.000000e+00> : vector<8x128xf32>
    %78 = tpu.matmul %77, %61, %cst_31 {dimension_numbers = #tpu.dot_dimension_numbers<[1], [0], [0], [1], [0, 0, 1, 1], [], []>} : vector<8x8xbf16>, vector<8x128xbf16>, vector<8x128xf32> -> vector<8x128xf32>
    %79 = arith.truncf %78 : vector<8x128xf32> to vector<8x128xbf16>
    %80 = vector.extract_strided_slice %17 {offsets = [128, 0], sizes = [128, 256], strides = [1, 1]} : vector<256x256xbf16> to vector<128x256xbf16>
    %cst_32 = arith.constant dense<0.000000e+00> : vector<8x256xf32>
    %81 = tpu.matmul %79, %80, %cst_32 {dimension_numbers = #tpu.dot_dimension_numbers<[1], [0], [0], [1], [0, 0, 1, 1], [], []>} : vector<8x128xbf16>, vector<128x256xbf16>, vector<8x256xf32> -> vector<8x256xf32>
    %82 = arith.addf %55, %81 : vector<8x256xf32>
    %83 = vector.broadcast %7 : vector<1x256xf32> to vector<8x256xf32>
    %84 = arith.addf %82, %83 : vector<8x256xf32>
    %85 = arith.addf %84, %3 : vector<8x256xf32>
    %cst_33 = arith.constant dense<0.000000e+00> : vector<8xf32>
    %86 = vector.multi_reduction <add>, %85, %cst_33 [1] : vector<8x256xf32> to vector<8xf32>
    %87 = vector.shape_cast %86 : vector<8xf32> to vector<8x1xf32>
    %cst_34 = arith.constant 2.560000e+02 : f32
    %88 = vector.broadcast %cst_34 : f32 to vector<8x1xf32>
    %89 = arith.divf %87, %88 : vector<8x1xf32>
    %90 = vector.broadcast %89 : vector<8x1xf32> to vector<8x256xf32>
    %91 = arith.subf %85, %90 : vector<8x256xf32>
    %92 = arith.mulf %91, %91 : vector<8x256xf32>
    %cst_35 = arith.constant dense<0.000000e+00> : vector<8xf32>
    %93 = vector.multi_reduction <add>, %92, %cst_35 [1] : vector<8x256xf32> to vector<8xf32>
    %94 = vector.shape_cast %93 : vector<8xf32> to vector<8x1xf32>
    %cst_36 = arith.constant 2.560000e+02 : f32
    %95 = vector.broadcast %cst_36 : f32 to vector<8x1xf32>
    %96 = arith.divf %94, %95 : vector<8x1xf32>
    %cst_37 = arith.constant 9.99999996E-13 : f32
    %97 = vector.broadcast %cst_37 : f32 to vector<8x1xf32>
    %98 = arith.addf %96, %97 : vector<8x1xf32>
    %99 = math.rsqrt %98 : vector<8x1xf32>
    %100 = vector.broadcast %99 : vector<8x1xf32> to vector<8x256xf32>
    %101 = arith.mulf %91, %100 : vector<8x256xf32>
    %102 = vector.broadcast %8 : vector<1x256xf32> to vector<8x256xf32>
    %103 = arith.mulf %101, %102 : vector<8x256xf32>
    %104 = vector.broadcast %9 : vector<1x256xf32> to vector<8x256xf32>
    %105 = arith.addf %103, %104 : vector<8x256xf32>
    %106 = arith.truncf %105 : vector<8x256xf32> to vector<8x256xbf16>
    %cst_38 = arith.constant dense<0.000000e+00> : vector<8x512xf32>
    %107 = tpu.matmul %106, %19, %cst_38 {dimension_numbers = #tpu.dot_dimension_numbers<[1], [0], [0], [1], [0, 0, 1, 1], [], []>} : vector<8x256xbf16>, vector<256x512xbf16>, vector<8x512xf32> -> vector<8x512xf32>
    %108 = vector.broadcast %10 : vector<1x512xf32> to vector<8x512xf32>
    %109 = arith.addf %107, %108 : vector<8x512xf32>
    %cst_39 = arith.constant 5.000000e-01 : f32
    %110 = vector.broadcast %cst_39 : f32 to vector<8x512xf32>
    %111 = arith.mulf %110, %109 : vector<8x512xf32>
    %cst_40 = arith.constant 4.471500e-02 : f32
    %112 = vector.broadcast %cst_40 : f32 to vector<8x512xf32>
    %113 = arith.mulf %112, %109 : vector<8x512xf32>
    %114 = arith.mulf %113, %109 : vector<8x512xf32>
    %115 = arith.mulf %114, %109 : vector<8x512xf32>
    %116 = arith.addf %109, %115 : vector<8x512xf32>
    %cst_41 = arith.constant 0.797884583 : f32
    %117 = vector.broadcast %cst_41 : f32 to vector<8x512xf32>
    %118 = arith.mulf %117, %116 : vector<8x512xf32>
    %119 = math.tanh %118 : vector<8x512xf32>
    %cst_42 = arith.constant 1.000000e+00 : f32
    %120 = vector.broadcast %cst_42 : f32 to vector<8x512xf32>
    %121 = arith.addf %120, %119 : vector<8x512xf32>
    %122 = arith.mulf %111, %121 : vector<8x512xf32>
    %123 = arith.truncf %122 : vector<8x512xf32> to vector<8x512xbf16>
    %cst_43 = arith.constant dense<0.000000e+00> : vector<8x256xf32>
    %124 = tpu.matmul %123, %21, %cst_43 {dimension_numbers = #tpu.dot_dimension_numbers<[1], [0], [0], [1], [0, 0, 1, 1], [], []>} : vector<8x512xbf16>, vector<512x256xbf16>, vector<8x256xf32> -> vector<8x256xf32>
    %125 = vector.broadcast %11 : vector<1x256xf32> to vector<8x256xf32>
    %126 = arith.addf %124, %125 : vector<8x256xf32>
    %127 = arith.addf %126, %105 : vector<8x256xf32>
    %cst_44 = arith.constant dense<0.000000e+00> : vector<8xf32>
    %128 = vector.multi_reduction <add>, %127, %cst_44 [1] : vector<8x256xf32> to vector<8xf32>
    %129 = vector.shape_cast %128 : vector<8xf32> to vector<8x1xf32>
    %cst_45 = arith.constant 2.560000e+02 : f32
    %130 = vector.broadcast %cst_45 : f32 to vector<8x1xf32>
    %131 = arith.divf %129, %130 : vector<8x1xf32>
    %132 = vector.broadcast %131 : vector<8x1xf32> to vector<8x256xf32>
    %133 = arith.subf %127, %132 : vector<8x256xf32>
    %134 = arith.mulf %133, %133 : vector<8x256xf32>
    %cst_46 = arith.constant dense<0.000000e+00> : vector<8xf32>
    %135 = vector.multi_reduction <add>, %134, %cst_46 [1] : vector<8x256xf32> to vector<8xf32>
    %136 = vector.shape_cast %135 : vector<8xf32> to vector<8x1xf32>
    %cst_47 = arith.constant 2.560000e+02 : f32
    %137 = vector.broadcast %cst_47 : f32 to vector<8x1xf32>
    %138 = arith.divf %136, %137 : vector<8x1xf32>
    %cst_48 = arith.constant 9.99999996E-13 : f32
    %139 = vector.broadcast %cst_48 : f32 to vector<8x1xf32>
    %140 = arith.addf %138, %139 : vector<8x1xf32>
    %141 = math.rsqrt %140 : vector<8x1xf32>
    %142 = vector.broadcast %141 : vector<8x1xf32> to vector<8x256xf32>
    %143 = arith.mulf %133, %142 : vector<8x256xf32>
    %144 = vector.broadcast %12 : vector<1x256xf32> to vector<8x256xf32>
    %145 = arith.mulf %143, %144 : vector<8x256xf32>
    %146 = vector.broadcast %13 : vector<1x256xf32> to vector<8x256xf32>
    %147 = arith.addf %145, %146 : vector<8x256xf32>
    %c0_49 = arith.constant 0 : index
    %c0_50 = arith.constant 0 : index
    %148 = vector.load %arg16[%c0_49, %c0_50] : memref<8x256xf32, #tpu.memory_space<vmem>>, vector<8x256xf32>
    tpu.vector_store %arg16[%c0_49, %c0_50], %147 {strides = array<i32>} : memref<8x256xf32, #tpu.memory_space<vmem>>, vector<8x256xf32>,
    %c1_i32 = arith.constant 1 : i32
    %149 = arith.cmpi eq, %arg1, %c1_i32 : i32
    %150 = arith.extui %149 : i1 to i32
    %c0_i32_51 = arith.constant 0 : i32
    %151 = arith.cmpi ne, %150, %c0_i32_51 : i32
    scf.if %151 {
      %152 = vector.extract_strided_slice %147 {offsets = [0, 0], sizes = [1, 256], strides = [1, 1]} : vector<8x256xf32> to vector<1x256xf32>
      %153 = arith.truncf %152 : vector<1x256xf32> to vector<1x256xbf16>
      %c0_52 = arith.constant 0 : index
      %c0_53 = arith.constant 0 : index
      %154 = vector.load %arg11[%c0_52, %c0_53] : memref<256x256xbf16, #tpu.memory_space<vmem>>, vector<256x256xbf16>
      %cst_54 = arith.constant dense<0.000000e+00> : vector<1x256xf32>
      %155 = tpu.matmul %153, %154, %cst_54 {dimension_numbers = #tpu.dot_dimension_numbers<[1], [0], [0], [1], [0, 0, 1, 1], [], []>} : vector<1x256xbf16>, vector<256x256xbf16>, vector<1x256xf32> -> vector<1x256xf32>
      %c0_55 = arith.constant 0 : index
      %c0_56 = arith.constant 0 : index
      %156 = vector.load %arg12[%c0_55, %c0_56] : memref<1x256xf32, #tpu.memory_space<vmem>>, vector<1x256xf32>
      %157 = arith.addf %155, %156 : vector<1x256xf32>
      %158 = math.tanh %157 : vector<1x256xf32>
      %159 = arith.truncf %158 : vector<1x256xf32> to vector<1x256xbf16>
      %c0_57 = arith.constant 0 : index
      %c0_58 = arith.constant 0 : index
      %160 = vector.load %arg13[%c0_57, %c0_58] : memref<256x128xbf16, #tpu.memory_space<vmem>>, vector<256x128xbf16>
      %cst_59 = arith.constant dense<0.000000e+00> : vector<1x128xf32>
      %161 = tpu.matmul %159, %160, %cst_59 {dimension_numbers = #tpu.dot_dimension_numbers<[1], [0], [0], [1], [0, 0, 1, 1], [], []>} : vector<1x256xbf16>, vector<256x128xbf16>, vector<1x128xf32> -> vector<1x128xf32>
      %c0_60 = arith.constant 0 : index
      %c0_61 = arith.constant 0 : index
      %162 = vector.load %arg14[%c0_60, %c0_61] : memref<1x128xf32, #tpu.memory_space<vmem>>, vector<1x128xf32>
      %163 = arith.addf %161, %162 : vector<1x128xf32>
      %164 = vector.shape_cast %163 : vector<1x128xf32> to vector<1x1x128xf32>
      %c0_62 = arith.constant 0 : index
      %c0_63 = arith.constant 0 : index
      %c0_64 = arith.constant 0 : index
      %165 = vector.load %arg15[%c0_62, %c0_63, %c0_64] : memref<1x1x128xf32, #tpu.memory_space<vmem>>, vector<1x1x128xf32>
      tpu.vector_store %arg15[%c0_62, %c0_63, %c0_64], %164 {strides = array<i32>} : memref<1x1x128xf32, #tpu.memory_space<vmem>>, vector<1x1x128xf32>,
    } else {
    }
    return
  }
  func.func @transform_0(%arg0: i32, %arg1: i32) -> (i32, i32) {
    %c0_i32 = arith.constant 0 : i32
    %c0_i32_0 = arith.constant 0 : i32
    return %arg0, %c0_i32 : i32, i32
  }
  func.func @transform_1(%arg0: i32, %arg1: i32) -> (i32, i32, i32) {
    %c0_i32 = arith.constant 0 : i32
    %c0_i32_0 = arith.constant 0 : i32
    %c0_i32_1 = arith.constant 0 : i32
    return %arg0, %c0_i32, %c0_i32_0 : i32, i32, i32
  }
  func.func @transform_2(%arg0: i32, %arg1: i32) -> (i32, i32) {
    %c0_i32 = arith.constant 0 : i32
    %c0_i32_0 = arith.constant 0 : i32
    %c0_i32_1 = arith.constant 0 : i32
    return %c0_i32, %c0_i32_0 : i32, i32
  }
  func.func @transform_3(%arg0: i32, %arg1: i32) -> (i32, i32) {
    %c0_i32 = arith.constant 0 : i32
    %c0_i32_0 = arith.constant 0 : i32
    %c0_i32_1 = arith.constant 0 : i32
    return %c0_i32, %c0_i32_0 : i32, i32
  }
  func.func @transform_4(%arg0: i32, %arg1: i32) -> (i32, i32, i32) {
    %c0_i32 = arith.constant 0 : i32
    %c0_i32_0 = arith.constant 0 : i32
    %c0_i32_1 = arith.constant 0 : i32
    return %arg1, %c0_i32, %c0_i32_0 : i32, i32, i32
  }
  func.func @transform_5(%arg0: i32, %arg1: i32) -> (i32, i32, i32) {
    %c0_i32 = arith.constant 0 : i32
    %c0_i32_0 = arith.constant 0 : i32
    %c0_i32_1 = arith.constant 0 : i32
    return %arg1, %c0_i32, %c0_i32_0 : i32, i32, i32
  }
  func.func @transform_6(%arg0: i32, %arg1: i32) -> (i32, i32, i32) {
    %c0_i32 = arith.constant 0 : i32
    %c0_i32_0 = arith.constant 0 : i32
    %c0_i32_1 = arith.constant 0 : i32
    return %arg1, %c0_i32, %c0_i32_0 : i32, i32, i32
  }
  func.func @transform_7(%arg0: i32, %arg1: i32) -> (i32, i32, i32) {
    %c0_i32 = arith.constant 0 : i32
    %c0_i32_0 = arith.constant 0 : i32
    %c0_i32_1 = arith.constant 0 : i32
    return %arg1, %c0_i32, %c0_i32_0 : i32, i32, i32
  }
  func.func @transform_8(%arg0: i32, %arg1: i32) -> (i32, i32, i32) {
    %c0_i32 = arith.constant 0 : i32
    %c0_i32_0 = arith.constant 0 : i32
    %c0_i32_1 = arith.constant 0 : i32
    return %arg1, %c0_i32, %c0_i32_0 : i32, i32, i32
  }
  func.func @transform_9(%arg0: i32, %arg1: i32) -> (i32, i32) {
    %c0_i32 = arith.constant 0 : i32
    %c0_i32_0 = arith.constant 0 : i32
    %c0_i32_1 = arith.constant 0 : i32
    return %c0_i32, %c0_i32_0 : i32, i32
  }
  func.func @transform_10(%arg0: i32, %arg1: i32) -> (i32, i32) {
    %c0_i32 = arith.constant 0 : i32
    %c0_i32_0 = arith.constant 0 : i32
    %c0_i32_1 = arith.constant 0 : i32
    return %c0_i32, %c0_i32_0 : i32, i32
  }
  func.func @transform_11(%arg0: i32, %arg1: i32) -> (i32, i32) {
    %c0_i32 = arith.constant 0 : i32
    %c0_i32_0 = arith.constant 0 : i32
    %c0_i32_1 = arith.constant 0 : i32
    return %c0_i32, %c0_i32_0 : i32, i32
  }
  func.func @transform_12(%arg0: i32, %arg1: i32) -> (i32, i32) {
    %c0_i32 = arith.constant 0 : i32
    %c0_i32_0 = arith.constant 0 : i32
    %c0_i32_1 = arith.constant 0 : i32
    return %c0_i32, %c0_i32_0 : i32, i32
  }
  func.func @transform_13(%arg0: i32, %arg1: i32) -> (i32, i32, i32) {
    %c0_i32 = arith.constant 0 : i32
    %c0_i32_0 = arith.constant 0 : i32
    %c0_i32_1 = arith.constant 0 : i32
    return %arg0, %c0_i32, %c0_i32_0 : i32, i32, i32
  }
}

</mosaic_0001>

<llo_original>
// kernel: tpu_custom_call.1
$region0: #{tpu_custom_call.1}
  #allocation0 [shape = 'u32[]', space=smem, size = 0x4, offset = 0x4, fixed_abs, tag = 'smem constant byte address 0x4 - core index']
  #allocation1 [shape = 'u32[144,128]{1,0:T(1,128)}', space=vmem, size = 0x12000, scoped, tag = 'internal scratch']
  #allocation2 [shape = 'f32[8,256]{1,0:T(8,128)}', space=vmem, size = 0x2000, scoped, tag = 'scratch operand']
  %s0 = inlined_call_operand.hbm [shape: f32[16,256], index: 0, kind: input, shape index: {}]
  %s1 = inlined_call_operand.hbm [shape: f32[2,1,8], index: 1, kind: input, shape index: {}]
  %s2 = inlined_call_operand.vmem [shape: f32[1,256], index: 2, kind: input, shape index: {}]
  %s3 = inlined_call_operand.vmem [shape: f32[1,256], index: 3, kind: input, shape index: {}]
  %s4 = inlined_call_operand.hbm [shape: bf16[2,256,768], index: 4, kind: input, shape index: {}]
  %s5 = inlined_call_operand.hbm [shape: bf16[2,256,256], index: 5, kind: input, shape index: {}]
  %s6 = inlined_call_operand.hbm [shape: bf16[2,256,512], index: 6, kind: input, shape index: {}]
  %s7 = inlined_call_operand.hbm [shape: bf16[2,512,256], index: 7, kind: input, shape index: {}]
  %s8 = inlined_call_operand.hbm [shape: f32[2,8,768], index: 8, kind: input, shape index: {}]
  %s9 = inlined_call_operand.hbm [shape: bf16[256,256], index: 9, kind: input, shape index: {}]
  %s10 = inlined_call_operand.vmem [shape: f32[1,256], index: 10, kind: input, shape index: {}]
  %s11 = inlined_call_operand.hbm [shape: bf16[256,128], index: 11, kind: input, shape index: {}]
  %s12 = inlined_call_operand.vmem [shape: f32[1,128], index: 12, kind: input, shape index: {}]
  %s13 = inlined_call_operand.hbm [shape: f32[2,1,128], index: 13, kind: output, shape index: {}]
  %s14 = sld [smem:[#allocation0]]
  $region129: #{tpu_custom_call.1} parent=0
    _
  %s16 = ssub.s32 1, %s14
  %s17 = scalar_select 0, %s16, %s14
  $region1: #{tpu_custom_call.1} parent=0
    #allocation3 [shape = 'u8[16384]{0}', space=vmem, size = 0x4000, scoped, tag = 'input window, operand 0']
    #allocation4 [shape = 's32[2]{0}', space=sflag, size = 0x8, scoped, tag = 'scoped memory for tpu_custom_call.1']
    #allocation5 [shape = 's32[2]{0}', space=sflag, size = 0x8, scoped, tag = 'scoped memory for tpu_custom_call.1']
    #allocation6 [shape = 'u8[1024]{0}', space=vmem, size = 0x400, scoped, tag = 'input window, operand 1']
    #allocation7 [shape = 's32[2]{0}', space=sflag, size = 0x8, scoped, tag = 'scoped memory for tpu_custom_call.1']
    #allocation8 [shape = 'u8[786432]{0}', space=vmem, size = 0xc0000, scoped, tag = 'input window, operand 4']
    #allocation9 [shape = 'u8[262144]{0}', space=vmem, size = 0x40000, scoped, tag = 'input window, operand 5']
    #allocation10 [shape = 's32[2]{0}', space=sflag, size = 0x8, scoped, tag = 'scoped memory for tpu_custom_call.1']
    #allocation11 [shape = 'u8[524288]{0}', space=vmem, size = 0x80000, scoped, tag = 'input window, operand 6']
    #allocation12 [shape = 'u8[524288]{0}', space=vmem, size = 0x80000, scoped, tag = 'input window, operand 7']
    #allocation13 [shape = 's32[2]{0}', space=sflag, size = 0x8, scoped, tag = 'scoped memory for tpu_custom_call.1']
    #allocation14 [shape = 'u8[49152]{0}', space=vmem, size = 0xc000, scoped, tag = 'input window, operand 8']
    #allocation15 [shape = 'u8[131072]{0}', space=vmem, size = 0x20000, scoped, tag = 'input window, operand 9, single buffered']
    #allocation16 [shape = 's32[1]{0}', space=sflag, size = 0x4, scoped, tag = 'scoped memory for tpu_custom_call.1']
    #allocation17 [shape = 'u8[65536]{0}', space=vmem, size = 0x10000, scoped, tag = 'input window, operand 11, single buffered']
    #allocation18 [shape = 'u8[1024]{0}', space=vmem, size = 0x400, scoped, tag = 'output window, operand 0']
    %18 = vsyncpa [#allocation4], 0
    %s19 = scalar_lea.sflag [#allocation4], 1
    %20 = vsyncpa %s19, 0
    %21 = vsyncpa [#allocation7], 0
    %s22 = scalar_lea.sflag [#allocation7], 1
    %23 = vsyncpa %s22, 0
    %24 = vsyncpa [#allocation10], 0
    %s25 = scalar_lea.sflag [#allocation10], 1
    %26 = vsyncpa %s25, 0
    %27 = vsyncpa [#allocation13], 0
    %s28 = scalar_lea.sflag [#allocation13], 1
    %29 = vsyncpa %s28, 0
    %30 = vsyncpa [#allocation16], 0
    %31 = vsyncpa [#allocation5], 0
    %s32 = scalar_lea.sflag [#allocation5], 1
    %33 = vsyncpa %s32, 0
    loop: start=0, step=1, limit=6
    $region2: #{tpu_custom_call.1} parent=1 // loop_pre_header
      _
    $region3: #{tpu_custom_call.1} parent=1 // loop_header
      %s35 = sphi 0, %s39
      %p36 = scmp.ge.s32.totalorder %s35, 6
      %s42 = sphi 0, %s54
      %s43 = sphi 0, %s50
      %s44 = sphi 0, %s42
      %s45 = sphi 0, %s43
      %s46 = sphi 0, %s44
      %s47 = sphi 0, %s45
      %s57 = sphi 0, %s59
      %s60 = sphi 0, %s57
      %s61 = sphi 0, %s60
      %s77 = sphi 0, %s61
      %s83 = sphi 0, %s85
      %s86 = sphi 0, %s83
      %s87 = sphi 0, %s86
      %s103 = sphi 0, %s87
      %s107 = sphi 0, %s107
      %s109 = sphi 0, %s107
      %s110 = sphi 0, %s109
      %s124 = sphi 0, %s110
      %s128 = sphi 0, %s128
      %s130 = sphi 0, %s128
      %s131 = sphi 0, %s130
      %s145 = sphi 0, %s131
      %s151 = sphi 0, %s153
      %s154 = sphi 0, %s151
      %s155 = sphi 0, %s154
      %s171 = sphi 0, %s155
      %s177 = sphi 0, %s179
      %s180 = sphi 0, %s177
      %s181 = sphi 0, %s180
      %s197 = sphi 0, %s181
      %s203 = sphi 0, %s205
      %s206 = sphi 0, %s203
      %s207 = sphi 0, %s206
      %s223 = sphi 0, %s207
      %s229 = sphi 0, %s231
      %s232 = sphi 0, %s229
      %s233 = sphi 0, %s232
      %s249 = sphi 0, %s233
      %s255 = sphi 0, %s257
      %s258 = sphi 0, %s255
      %s259 = sphi 0, %s258
      %s275 = sphi 0, %s259
      %s279 = sphi 0, %s279
      %s281 = sphi 0, %s279
      %s282 = sphi 0, %s281
      %s296 = sphi 0, %s282
      %s300 = sphi 0, %s300
      %s302 = sphi 0, %s300
      %s303 = sphi 0, %s302
      %s317 = sphi 0, %s303
      %s321 = sphi 0, %s321
      %s323 = sphi 0, %s321
      %s324 = sphi 0, %s323
      %s338 = sphi 0, %s324
      %s342 = sphi 0, %s342
      %s344 = sphi 0, %s342
      %s345 = sphi 0, %s344
      %s359 = sphi 0, %s345
      %s365 = sphi 0, %s367
      %s368 = sphi 0, %s365
      %s369 = sphi 0, %s368
      %s385 = sphi 0, %s369
    $region4: #{tpu_custom_call.1} parent=1 // loop_header_branch
      %38 = sbr.rel (%p36) target = $region8
    $region5: #{tpu_custom_call.1} parent=1 // loop_body
      %s40 = ssub.s32 %s35, 1
      %s41 = ssub.s32 %s35, 2
      %s48 = sadd.s32 1, %s43
      %p49 = scmp.ge.s32.totalorder %s48, 2
      %s50 = scalar_select %p49, 0, %s48
      %s51 = sadd.s32 1, %s42
      %s52 = scalar_select %p49, %s51, %s42
      %p53 = scmp.ge.s32.totalorder %s52, 2
      %s54 = scalar_select %p53, 0, %s52
      %s55 = ssub.s32 %s42, %s54
      %p56 = scmp.eq.s32.totalorder %s55, 0
      %s58 = sadd.s32 %s57, 1
      %s59 = scalar_select %p56, %s57, %s58
      %p62 = pneg %p56
      %p63 = scmp.eq.s32.totalorder %s35, 3
      %p64 = por %p62, %p63
      %p65 = scmp.ne.s32.totalorder %s57, %s60
      %p66 = scmp.eq.s32.totalorder %s35, 0
      %p67 = por %p65, %p66
      %p68 = scmp.ne.s32.totalorder %s57, %s60
      %p69 = scmp.eq.s32.totalorder %s40, 3
      %p70 = por %p68, %p69
      %p71 = scmp.ne.s32.totalorder %s60, %s61
      %p72 = scmp.eq.s32.totalorder %s40, 0
      %p73 = por %p71, %p72
      %p74 = scmp.ne.s32.totalorder %s60, %s61
      %p75 = scmp.eq.s32.totalorder %s41, 3
      %p76 = por %p74, %p75
      %p78 = scmp.ne.s32.totalorder %s61, %s77
      %p79 = scmp.eq.s32.totalorder %s41, 0
      %p80 = por %p78, %p79
      %s81 = ssub.s32 %s42, %s54
      %p82 = scmp.eq.s32.totalorder %s81, 0
      %s84 = sadd.s32 %s83, 1
      %s85 = scalar_select %p82, %s83, %s84
      %p88 = pneg %p82
      %p89 = scmp.eq.s32.totalorder %s35, 3
      %p90 = por %p88, %p89
      %p91 = scmp.ne.s32.totalorder %s83, %s86
      %p92 = scmp.eq.s32.totalorder %s35, 0
      %p93 = por %p91, %p92
      %p94 = scmp.ne.s32.totalorder %s83, %s86
      %p95 = scmp.eq.s32.totalorder %s40, 3
      %p96 = por %p94, %p95
      %p97 = scmp.ne.s32.totalorder %s86, %s87
      %p98 = scmp.eq.s32.totalorder %s40, 0
      %p99 = por %p97, %p98
      %p100 = scmp.ne.s32.totalorder %s86, %s87
      %p101 = scmp.eq.s32.totalorder %s41, 3
      %p102 = por %p100, %p101
      %p104 = scmp.ne.s32.totalorder %s87, %s103
      %p105 = scmp.eq.s32.totalorder %s41, 0
      %p106 = por %p104, %p105
      %s108 = sadd.s32 %s107, 1
      %p111 = scmp.eq.s32.totalorder %s35, 3
      %p112 = scmp.ne.s32.totalorder %s107, %s109
      %p113 = scmp.eq.s32.totalorder %s35, 0
      %p114 = por %p112, %p113
      %p115 = scmp.ne.s32.totalorder %s107, %s109
      %p116 = scmp.eq.s32.totalorder %s40, 3
      %p117 = por %p115, %p116
      %p118 = scmp.ne.s32.totalorder %s109, %s110
      %p119 = scmp.eq.s32.totalorder %s40, 0
      %p120 = por %p118, %p119
      %p121 = scmp.ne.s32.totalorder %s109, %s110
      %p122 = scmp.eq.s32.totalorder %s41, 3
      %p123 = por %p121, %p122
      %p125 = scmp.ne.s32.totalorder %s110, %s124
      %p126 = scmp.eq.s32.totalorder %s41, 0
      %p127 = por %p125, %p126
      %s129 = sadd.s32 %s128, 1
      %p132 = scmp.eq.s32.totalorder %s35, 3
      %p133 = scmp.ne.s32.totalorder %s128, %s130
      %p134 = scmp.eq.s32.totalorder %s35, 0
      %p135 = por %p133, %p134
      %p136 = scmp.ne.s32.totalorder %s128, %s130
      %p137 = scmp.eq.s32.totalorder %s40, 3
      %p138 = por %p136, %p137
      %p139 = scmp.ne.s32.totalorder %s130, %s131
      %p140 = scmp.eq.s32.totalorder %s40, 0
      %p141 = por %p139, %p140
      %p142 = scmp.ne.s32.totalorder %s130, %s131
      %p143 = scmp.eq.s32.totalorder %s41, 3
      %p144 = por %p142, %p143
      %p146 = scmp.ne.s32.totalorder %s131, %s145
      %p147 = scmp.eq.s32.totalorder %s41, 0
      %p148 = por %p146, %p147
      %s149 = ssub.s32 %s43, %s50
      %p150 = scmp.eq.s32.totalorder %s149, 0
      %s152 = sadd.s32 %s151, 1
      %s153 = scalar_select %p150, %s151, %s152
      %p156 = pneg %p150
      %p157 = scmp.eq.s32.totalorder %s35, 3
      %p158 = por %p156, %p157
      %p159 = scmp.ne.s32.totalorder %s151, %s154
      %p160 = scmp.eq.s32.totalorder %s35, 0
      %p161 = por %p159, %p160
      %p162 = scmp.ne.s32.totalorder %s151, %s154
      %p163 = scmp.eq.s32.totalorder %s40, 3
      %p164 = por %p162, %p163
      %p165 = scmp.ne.s32.totalorder %s154, %s155
      %p166 = scmp.eq.s32.totalorder %s40, 0
      %p167 = por %p165, %p166
      %p168 = scmp.ne.s32.totalorder %s154, %s155
      %p169 = scmp.eq.s32.totalorder %s41, 3
      %p170 = por %p168, %p169
      %p172 = scmp.ne.s32.totalorder %s155, %s171
      %p173 = scmp.eq.s32.totalorder %s41, 0
      %p174 = por %p172, %p173
      %s175 = ssub.s32 %s43, %s50
      %p176 = scmp.eq.s32.totalorder %s175, 0
      %s178 = sadd.s32 %s177, 1
      %s179 = scalar_select %p176, %s177, %s178
      %p182 = pneg %p176
      %p183 = scmp.eq.s32.totalorder %s35, 3
      %p184 = por %p182, %p183
      %p185 = scmp.ne.s32.totalorder %s177, %s180
      %p186 = scmp.eq.s32.totalorder %s35, 0
      %p187 = por %p185, %p186
      %p188 = scmp.ne.s32.totalorder %s177, %s180
      %p189 = scmp.eq.s32.totalorder %s40, 3
      %p190 = por %p188, %p189
      %p191 = scmp.ne.s32.totalorder %s180, %s181
      %p192 = scmp.eq.s32.totalorder %s40, 0
      %p193 = por %p191, %p192
      %p194 = scmp.ne.s32.totalorder %s180, %s181
      %p195 = scmp.eq.s32.totalorder %s41, 3
      %p196 = por %p194, %p195
      %p198 = scmp.ne.s32.totalorder %s181, %s197
      %p199 = scmp.eq.s32.totalorder %s41, 0
      %p200 = por %p198, %p199
      %s201 = ssub.s32 %s43, %s50
      %p202 = scmp.eq.s32.totalorder %s201, 0
      %s204 = sadd.s32 %s203, 1
      %s205 = scalar_select %p202, %s203, %s204
      %p208 = pneg %p202
      %p209 = scmp.eq.s32.totalorder %s35, 3
      %p210 = por %p208, %p209
      %p211 = scmp.ne.s32.totalorder %s203, %s206
      %p212 = scmp.eq.s32.totalorder %s35, 0
      %p213 = por %p211, %p212
      %p214 = scmp.ne.s32.totalorder %s203, %s206
      %p215 = scmp.eq.s32.totalorder %s40, 3
      %p216 = por %p214, %p215
      %p217 = scmp.ne.s32.totalorder %s206, %s207
      %p218 = scmp.eq.s32.totalorder %s40, 0
      %p219 = por %p217, %p218
      %p220 = scmp.ne.s32.totalorder %s206, %s207
      %p221 = scmp.eq.s32.totalorder %s41, 3
      %p222 = por %p220, %p221
      %p224 = scmp.ne.s32.totalorder %s207, %s223
      %p225 = scmp.eq.s32.totalorder %s41, 0
      %p226 = por %p224, %p225
      %s227 = ssub.s32 %s43, %s50
      %p228 = scmp.eq.s32.totalorder %s227, 0
      %s230 = sadd.s32 %s229, 1
      %s231 = scalar_select %p228, %s229, %s230
      %p234 = pneg %p228
      %p235 = scmp.eq.s32.totalorder %s35, 3
      %p236 = por %p234, %p235
      %p237 = scmp.ne.s32.totalorder %s229, %s232
      %p238 = scmp.eq.s32.totalorder %s35, 0
      %p239 = por %p237, %p238
      %p240 = scmp.ne.s32.totalorder %s229, %s232
      %p241 = scmp.eq.s32.totalorder %s40, 3
      %p242 = por %p240, %p241
      %p243 = scmp.ne.s32.totalorder %s232, %s233
      %p244 = scmp.eq.s32.totalorder %s40, 0
      %p245 = por %p243, %p244
      %p246 = scmp.ne.s32.totalorder %s232, %s233
      %p247 = scmp.eq.s32.totalorder %s41, 3
      %p248 = por %p246, %p247
      %p250 = scmp.ne.s32.totalorder %s233, %s249
      %p251 = scmp.eq.s32.totalorder %s41, 0
      %p252 = por %p250, %p251
      %s253 = ssub.s32 %s43, %s50
      %p254 = scmp.eq.s32.totalorder %s253, 0
      %s256 = sadd.s32 %s255, 1
      %s257 = scalar_select %p254, %s255, %s256
      %p260 = pneg %p254
      %p261 = scmp.eq.s32.totalorder %s35, 3
      %p262 = por %p260, %p261
      %p263 = scmp.ne.s32.totalorder %s255, %s258
      %p264 = scmp.eq.s32.totalorder %s35, 0
      %p265 = por %p263, %p264
      %p266 = scmp.ne.s32.totalorder %s255, %s258
      %p267 = scmp.eq.s32.totalorder %s40, 3
      %p268 = por %p266, %p267
      %p269 = scmp.ne.s32.totalorder %s258, %s259
      %p270 = scmp.eq.s32.totalorder %s40, 0
      %p271 = por %p269, %p270
      %p272 = scmp.ne.s32.totalorder %s258, %s259
      %p273 = scmp.eq.s32.totalorder %s41, 3
      %p274 = por %p272, %p273
      %p276 = scmp.ne.s32.totalorder %s259, %s275
      %p277 = scmp.eq.s32.totalorder %s41, 0
      %p278 = por %p276, %p277
      %s280 = sadd.s32 %s279, 1
      %p283 = scmp.eq.s32.totalorder %s35, 3
      %p284 = scmp.ne.s32.totalorder %s279, %s281
      %p285 = scmp.eq.s32.totalorder %s35, 0
      %p286 = por %p284, %p285
      %p287 = scmp.ne.s32.totalorder %s279, %s281
      %p288 = scmp.eq.s32.totalorder %s40, 3
      %p289 = por %p287, %p288
      %p290 = scmp.ne.s32.totalorder %s281, %s282
      %p291 = scmp.eq.s32.totalorder %s40, 0
      %p292 = por %p290, %p291
      %p293 = scmp.ne.s32.totalorder %s281, %s282
      %p294 = scmp.eq.s32.totalorder %s41, 3
      %p295 = por %p293, %p294
      %p297 = scmp.ne.s32.totalorder %s282, %s296
      %p298 = scmp.eq.s32.totalorder %s41, 0
      %p299 = por %p297, %p298
      %s301 = sadd.s32 %s300, 1
      %p304 = scmp.eq.s32.totalorder %s35, 3
      %p305 = scmp.ne.s32.totalorder %s300, %s302
      %p306 = scmp.eq.s32.totalorder %s35, 0
      %p307 = por %p305, %p306
      %p308 = scmp.ne.s32.totalorder %s300, %s302
      %p309 = scmp.eq.s32.totalorder %s40, 3
      %p310 = por %p308, %p309
      %p311 = scmp.ne.s32.totalorder %s302, %s303
      %p312 = scmp.eq.s32.totalorder %s40, 0
      %p313 = por %p311, %p312
      %p314 = scmp.ne.s32.totalorder %s302, %s303
      %p315 = scmp.eq.s32.totalorder %s41, 3
      %p316 = por %p314, %p315
      %p318 = scmp.ne.s32.totalorder %s303, %s317
      %p319 = scmp.eq.s32.totalorder %s41, 0
      %p320 = por %p318, %p319
      %s322 = sadd.s32 %s321, 1
      %p325 = scmp.eq.s32.totalorder %s35, 3
      %p326 = scmp.ne.s32.totalorder %s321, %s323
      %p327 = scmp.eq.s32.totalorder %s35, 0
      %p328 = por %p326, %p327
      %p329 = scmp.ne.s32.totalorder %s321, %s323
      %p330 = scmp.eq.s32.totalorder %s40, 3
      %p331 = por %p329, %p330
      %p332 = scmp.ne.s32.totalorder %s323, %s324
      %p333 = scmp.eq.s32.totalorder %s40, 0
      %p334 = por %p332, %p333
      %p335 = scmp.ne.s32.totalorder %s323, %s324
      %p336 = scmp.eq.s32.totalorder %s41, 3
      %p337 = por %p335, %p336
      %p339 = scmp.ne.s32.totalorder %s324, %s338
      %p340 = scmp.eq.s32.totalorder %s41, 0
      %p341 = por %p339, %p340
      %s343 = sadd.s32 %s342, 1
      %p346 = scmp.eq.s32.totalorder %s35, 3
      %p347 = scmp.ne.s32.totalorder %s342, %s344
      %p348 = scmp.eq.s32.totalorder %s35, 0
      %p349 = por %p347, %p348
      %p350 = scmp.ne.s32.totalorder %s342, %s344
      %p351 = scmp.eq.s32.totalorder %s40, 3
      %p352 = por %p350, %p351
      %p353 = scmp.ne.s32.totalorder %s344, %s345
      %p354 = scmp.eq.s32.totalorder %s40, 0
      %p355 = por %p353, %p354
      %p356 = scmp.ne.s32.totalorder %s344, %s345
      %p357 = scmp.eq.s32.totalorder %s41, 3
      %p358 = por %p356, %p357
      %p360 = scmp.ne.s32.totalorder %s345, %s359
      %p361 = scmp.eq.s32.totalorder %s41, 0
      %p362 = por %p360, %p361
      %s363 = ssub.s32 %s42, %s54
      %p364 = scmp.eq.s32.totalorder %s363, 0
      %s366 = sadd.s32 %s365, 1
      %s367 = scalar_select %p364, %s365, %s366
      %p370 = pneg %p364
      %p371 = scmp.eq.s32.totalorder %s35, 3
      %p372 = por %p370, %p371
      %p373 = scmp.ne.s32.totalorder %s365, %s368
      %p374 = scmp.eq.s32.totalorder %s35, 0
      %p375 = por %p373, %p374
      %p376 = scmp.ne.s32.totalorder %s365, %s368
      %p377 = scmp.eq.s32.totalorder %s40, 3
      %p378 = por %p376, %p377
      %p379 = scmp.ne.s32.totalorder %s368, %s369
      %p380 = scmp.eq.s32.totalorder %s40, 0
      %p381 = por %p379, %p380
      %p382 = scmp.ne.s32.totalorder %s368, %s369
      %p383 = scmp.eq.s32.totalorder %s41, 3
      %p384 = por %p382, %p383
      %p386 = scmp.ne.s32.totalorder %s369, %s385
      %p387 = scmp.eq.s32.totalorder %s41, 0
      %p388 = por %p386, %p387
      %p389 = scmp.le.s32.totalorder 1, %s35
      %p390 = scmp.lt.s32.totalorder %s35, 5
      %p391 = pnand %p389, %p390
      %p392 = pneg %p391
      // Predicated region
      $region9: #{tpu_custom_call.1} parent=5 // pred_check
        _
      $region10: #{tpu_custom_call.1} parent=5 // pred_check_branch
        %394 = sbr.rel (%p391) target = $region12
      $region11: #{tpu_custom_call.1} parent=5 // pred_region
        %s395 = ssub.s32 %s35, 1
        // Predicated region
        $region13: #{tpu_custom_call.1} parent=11 // pred_check
          %p396 = pneg %p120
        $region14: #{tpu_custom_call.1} parent=11 // pred_check_branch
          %398 = sbr.rel (%p396) target = $region16
        $region15: #{tpu_custom_call.1} parent=11 // pred_region
          _
        $region16: #{tpu_custom_call.1} parent=11 // pred_fallthru
          _
        // Predicated region
        $region17: #{tpu_custom_call.1} parent=11 // pred_check
          %p399 = pneg %p141
        $region18: #{tpu_custom_call.1} parent=11 // pred_check_branch
          %401 = sbr.rel (%p399) target = $region20
        $region19: #{tpu_custom_call.1} parent=11 // pred_region
          _
        $region20: #{tpu_custom_call.1} parent=11 // pred_fallthru
          _
        // Predicated region
        $region21: #{tpu_custom_call.1} parent=11 // pred_check
          %p402 = pneg %p292
        $region22: #{tpu_custom_call.1} parent=11 // pred_check_branch
          %404 = sbr.rel (%p402) target = $region24
        $region23: #{tpu_custom_call.1} parent=11 // pred_region
          %s406 = ssub.s32 4096, 4096
          %407 = vsyncadd [#allocation16], %s406
          %s408 = sshll.u32 [#allocation15], 4
          %s409 = int_to_ptr.vmem [resolvable:$true] %s408
          %414 = dma.hbm_to_vmem [thread:$0]  %s9, 4096, %s409, [#allocation16], 128, 128, 8
        $region24: #{tpu_custom_call.1} parent=11 // pred_fallthru
          _
        // Predicated region
        $region25: #{tpu_custom_call.1} parent=11 // pred_check
          %p415 = pneg %p313
        $region26: #{tpu_custom_call.1} parent=11 // pred_check_branch
          %417 = sbr.rel (%p415) target = $region28
        $region27: #{tpu_custom_call.1} parent=11 // pred_region
          _
        $region28: #{tpu_custom_call.1} parent=11 // pred_fallthru
          _
        // Predicated region
        $region29: #{tpu_custom_call.1} parent=11 // pred_check
          %p418 = pneg %p334
        $region30: #{tpu_custom_call.1} parent=11 // pred_check_branch
          %420 = sbr.rel (%p418) target = $region32
        $region31: #{tpu_custom_call.1} parent=11 // pred_region
          %s422 = ssub.s32 2048, 2048
          %423 = vsyncadd [#allocation16], %s422
          %s424 = sshll.u32 [#allocation17], 4
          %s425 = int_to_ptr.vmem [resolvable:$true] %s424
          %430 = dma.hbm_to_vmem [thread:$0]  %s11, 2048, %s425, [#allocation16], 64, 64, 4
        $region32: #{tpu_custom_call.1} parent=11 // pred_fallthru
          _
        // Predicated region
        $region33: #{tpu_custom_call.1} parent=11 // pred_check
          %p431 = pneg %p355
        $region34: #{tpu_custom_call.1} parent=11 // pred_check_branch
          %433 = sbr.rel (%p431) target = $region36
        $region35: #{tpu_custom_call.1} parent=11 // pred_region
          _
        $region36: #{tpu_custom_call.1} parent=11 // pred_fallthru
          _
      $region12: #{tpu_custom_call.1} parent=5 // pred_fallthru
        _
      %p434 = scmp.lt.s32.totalorder %s35, 4
      // Predicated region
      $region37: #{tpu_custom_call.1} parent=5 // pred_check
        %p435 = pneg %p434
      $region38: #{tpu_custom_call.1} parent=5 // pred_check_branch
        %437 = sbr.rel (%p435) target = $region40
      $region39: #{tpu_custom_call.1} parent=5 // pred_region
        // Predicated region
        $region41: #{tpu_custom_call.1} parent=39 // pred_check
          %p438 = pneg %p67
        $region42: #{tpu_custom_call.1} parent=39 // pred_check_branch
          %440 = sbr.rel (%p438) target = $region44
        $region43: #{tpu_custom_call.1} parent=39 // pred_region
          %s441 = sand.u32 %s57, 1
          %s442 = scalar_lea.sflag [#allocation4], %s441
          %s443 = sand.u32 %s57, 1
          %s444 = smul.addr %s443, 16
          %s445 = scalar_lea.vmem [#allocation3], %s444
          %s447 = ssub.s32 256, 256
          %448 = vsyncadd %s442, %s447
          %s449 = smul.addr %s42, 2
          %s450 = smul.addr %s449, 128
          %s451 = scalar_lea.hbm %s0, %s450
          %s453 = sshll.u32 %s445, 4
          %s454 = int_to_ptr.vmem [resolvable:$true] %s453
          %456 = dma.hbm_to_vmem [thread:$0]  %s451, 256, %s454, %s442
        $region44: #{tpu_custom_call.1} parent=39 // pred_fallthru
          _
        // Predicated region
        $region45: #{tpu_custom_call.1} parent=39 // pred_check
          %p457 = pneg %p93
        $region46: #{tpu_custom_call.1} parent=39 // pred_check_branch
          %459 = sbr.rel (%p457) target = $region48
        $region47: #{tpu_custom_call.1} parent=39 // pred_region
          %s460 = sand.u32 %s35, 1
          %s461 = scalar_lea.sflag [#allocation7], %s460
          %s462 = sand.u32 %s83, 1
          %s463 = scalar_lea.vmem [#allocation6], %s462
          %s465 = ssub.s32 16, 16
          %466 = vsyncadd %s461, %s465
          %s467 = smul.addr %s42, 16
          %s468 = scalar_lea.hbm %s1, %s467
          %s470 = sshll.u32 %s463, 4
          %s471 = int_to_ptr.vmem [resolvable:$true] %s470
          %473 = dma.hbm_to_vmem [thread:$0]  %s468, 16, %s471, %s461
        $region48: #{tpu_custom_call.1} parent=39 // pred_fallthru
          _
        // Predicated region
        $region49: #{tpu_custom_call.1} parent=39 // pred_check
          %p474 = pneg %p161
        $region50: #{tpu_custom_call.1} parent=39 // pred_check_branch
          %476 = sbr.rel (%p474) target = $region52
        $region51: #{tpu_custom_call.1} parent=39 // pred_region
          %s477 = sand.u32 %s35, 1
          %s478 = scalar_lea.sflag [#allocation7], %s477
          %s479 = sand.u32 %s151, 1
          %s480 = smul.addr %s479, 768
          %s481 = scalar_lea.vmem [#allocation8], %s480
          %s483 = ssub.s32 12288, 12288
          %484 = vsyncadd %s478, %s483
          %s485 = smul.addr %s43, 192
          %s486 = smul.addr %s485, 64
          %s487 = scalar_lea.hbm %s4, %s486
          %s488 = sshll.u32 %s481, 4
          %s489 = int_to_ptr.vmem [resolvable:$true] %s488
          %494 = dma.hbm_to_vmem [thread:$0]  %s487, 12288, %s489, %s478, 384, 384, 24
        $region52: #{tpu_custom_call.1} parent=39 // pred_fallthru
          _
        // Predicated region
        $region53: #{tpu_custom_call.1} parent=39 // pred_check
          %p495 = pneg %p187
        $region54: #{tpu_custom_call.1} parent=39 // pred_check_branch
          %497 = sbr.rel (%p495) target = $region56
        $region55: #{tpu_custom_call.1} parent=39 // pred_region
          %s498 = sand.u32 %s35, 1
          %s499 = scalar_lea.sflag [#allocation10], %s498
          %s500 = sand.u32 %s177, 1
          %s501 = smul.addr %s500, 256
          %s502 = scalar_lea.vmem [#allocation9], %s501
          %s504 = ssub.s32 4096, 4096
          %505 = vsyncadd %s499, %s504
          %s506 = smul.addr %s43, 64
          %s507 = smul.addr %s506, 64
          %s508 = scalar_lea.hbm %s5, %s507
          %s509 = sshll.u32 %s502, 4
          %s510 = int_to_ptr.vmem [resolvable:$true] %s509
          %515 = dma.hbm_to_vmem [thread:$0]  %s508, 4096, %s510, %s499, 128, 128, 8
        $region56: #{tpu_custom_call.1} parent=39 // pred_fallthru
          _
        // Predicated region
        $region57: #{tpu_custom_call.1} parent=39 // pred_check
          %p516 = pneg %p213
        $region58: #{tpu_custom_call.1} parent=39 // pred_check_branch
          %518 = sbr.rel (%p516) target = $region60
        $region59: #{tpu_custom_call.1} parent=39 // pred_region
          %s519 = sand.u32 %s35, 1
          %s520 = scalar_lea.sflag [#allocation10], %s519
          %s521 = sand.u32 %s203, 1
          %s522 = smul.addr %s521, 512
          %s523 = scalar_lea.vmem [#allocation11], %s522
          %s525 = ssub.s32 8192, 8192
          %526 = vsyncadd %s520, %s525
          %s527 = smul.addr %s43, 128
          %s528 = smul.addr %s527, 64
          %s529 = scalar_lea.hbm %s6, %s528
          %s530 = sshll.u32 %s523, 4
          %s531 = int_to_ptr.vmem [resolvable:$true] %s530
          %536 = dma.hbm_to_vmem [thread:$0]  %s529, 8192, %s531, %s520, 256, 256, 16
        $region60: #{tpu_custom_call.1} parent=39 // pred_fallthru
          _
        // Predicated region
        $region61: #{tpu_custom_call.1} parent=39 // pred_check
          %p537 = pneg %p239
        $region62: #{tpu_custom_call.1} parent=39 // pred_check_branch
          %539 = sbr.rel (%p537) target = $region64
        $region63: #{tpu_custom_call.1} parent=39 // pred_region
          %s540 = sand.u32 %s35, 1
          %s541 = scalar_lea.sflag [#allocation13], %s540
          %s542 = sand.u32 %s229, 1
          %s543 = smul.addr %s542, 512
          %s544 = scalar_lea.vmem [#allocation12], %s543
          %s546 = ssub.s32 8192, 8192
          %547 = vsyncadd %s541, %s546
          %s548 = smul.addr %s43, 128
          %s549 = smul.addr %s548, 64
          %s550 = scalar_lea.hbm %s7, %s549
          %s551 = sshll.u32 %s544, 4
          %s552 = int_to_ptr.vmem [resolvable:$true] %s551
          %557 = dma.hbm_to_vmem [thread:$0]  %s550, 8192, %s552, %s541, 128, 128, 8
        $region64: #{tpu_custom_call.1} parent=39 // pred_fallthru
          _
        // Predicated region
        $region65: #{tpu_custom_call.1} parent=39 // pred_check
          %p558 = pneg %p265
        $region66: #{tpu_custom_call.1} parent=39 // pred_check_branch
          %560 = sbr.rel (%p558) target = $region68
        $region67: #{tpu_custom_call.1} parent=39 // pred_region
          %s561 = sand.u32 %s35, 1
          %s562 = scalar_lea.sflag [#allocation13], %s561
          %s563 = sand.u32 %s255, 1
          %s564 = smul.addr %s563, 48
          %s565 = scalar_lea.vmem [#allocation14], %s564
          %s567 = ssub.s32 768, 768
          %568 = vsyncadd %s562, %s567
          %s569 = smul.addr %s43, 6
          %s570 = smul.addr %s569, 128
          %s571 = scalar_lea.hbm %s8, %s570
          %s573 = sshll.u32 %s565, 4
          %s574 = int_to_ptr.vmem [resolvable:$true] %s573
          %576 = dma.hbm_to_vmem [thread:$0]  %s571, 768, %s574, %s562
        $region68: #{tpu_custom_call.1} parent=39 // pred_fallthru
          _
      $region40: #{tpu_custom_call.1} parent=5 // pred_fallthru
        _
      %p577 = scmp.le.s32.totalorder 1, %s35
      %p578 = scmp.lt.s32.totalorder %s35, 5
      %p579 = pnand %p577, %p578
      %p580 = pneg %p579
      // Predicated region
      $region69: #{tpu_custom_call.1} parent=5 // pred_check
        _
      $region70: #{tpu_custom_call.1} parent=5 // pred_check_branch
        %582 = sbr.rel (%p579) target = $region72
      $region71: #{tpu_custom_call.1} parent=5 // pred_region
        %s583 = ssub.s32 %s35, 1
        %s584 = sand.u32 %s60, 1
        %s585 = scalar_lea.sflag [#allocation4], %s584
        %s586 = sand.u32 %s60, 1
        %s587 = smul.addr %s586, 16
        %s588 = scalar_lea.vmem [#allocation3], %s587
        // Predicated region
        $region73: #{tpu_custom_call.1} parent=71 // pred_check
          %p589 = pneg %p73
        $region74: #{tpu_custom_call.1} parent=71 // pred_check_branch
          %591 = sbr.rel (%p589) target = $region76
        $region75: #{tpu_custom_call.1} parent=71 // pred_region
          %592 = dma.done %s585, 256
        $region76: #{tpu_custom_call.1} parent=71 // pred_fallthru
          _
        %s593 = sand.u32 %s40, 1
        %s594 = scalar_lea.sflag [#allocation7], %s593
        %s595 = sand.u32 %s86, 1
        %s596 = scalar_lea.vmem [#allocation6], %s595
        // Predicated region
        $region77: #{tpu_custom_call.1} parent=71 // pred_check
          %p597 = pneg %p99
        $region78: #{tpu_custom_call.1} parent=71 // pred_check_branch
          %599 = sbr.rel (%p597) target = $region80
        $region79: #{tpu_custom_call.1} parent=71 // pred_region
          %600 = dma.done %s594, 16
        $region80: #{tpu_custom_call.1} parent=71 // pred_fallthru
          _
        %s601 = sand.u32 %s40, 1
        %s602 = scalar_lea.sflag [#allocation7], %s601
        %s603 = sand.u32 %s154, 1
        %s604 = smul.addr %s603, 768
        %s605 = scalar_lea.vmem [#allocation8], %s604
        // Predicated region
        $region81: #{tpu_custom_call.1} parent=71 // pred_check
          %p606 = pneg %p167
        $region82: #{tpu_custom_call.1} parent=71 // pred_check_branch
          %608 = sbr.rel (%p606) target = $region84
        $region83: #{tpu_custom_call.1} parent=71 // pred_region
          %609 = dma.done %s602, 12288
        $region84: #{tpu_custom_call.1} parent=71 // pred_fallthru
          _
        %s610 = sand.u32 %s40, 1
        %s611 = scalar_lea.sflag [#allocation10], %s610
        %s612 = sand.u32 %s180, 1
        %s613 = smul.addr %s612, 256
        %s614 = scalar_lea.vmem [#allocation9], %s613
        // Predicated region
        $region85: #{tpu_custom_call.1} parent=71 // pred_check
          %p615 = pneg %p193
        $region86: #{tpu_custom_call.1} parent=71 // pred_check_branch
          %617 = sbr.rel (%p615) target = $region88
        $region87: #{tpu_custom_call.1} parent=71 // pred_region
          %618 = dma.done %s611, 4096
        $region88: #{tpu_custom_call.1} parent=71 // pred_fallthru
          _
        %s619 = sand.u32 %s40, 1
        %s620 = scalar_lea.sflag [#allocation10], %s619
        %s621 = sand.u32 %s206, 1
        %s622 = smul.addr %s621, 512
        %s623 = scalar_lea.vmem [#allocation11], %s622
        // Predicated region
        $region89: #{tpu_custom_call.1} parent=71 // pred_check
          %p624 = pneg %p219
        $region90: #{tpu_custom_call.1} parent=71 // pred_check_branch
          %626 = sbr.rel (%p624) target = $region92
        $region91: #{tpu_custom_call.1} parent=71 // pred_region
          %627 = dma.done %s620, 8192
        $region92: #{tpu_custom_call.1} parent=71 // pred_fallthru
          _
        %s628 = sand.u32 %s40, 1
        %s629 = scalar_lea.sflag [#allocation13], %s628
        %s630 = sand.u32 %s232, 1
        %s631 = smul.addr %s630, 512
        %s632 = scalar_lea.vmem [#allocation12], %s631
        // Predicated region
        $region93: #{tpu_custom_call.1} parent=71 // pred_check
          %p633 = pneg %p245
        $region94: #{tpu_custom_call.1} parent=71 // pred_check_branch
          %635 = sbr.rel (%p633) target = $region96
        $region95: #{tpu_custom_call.1} parent=71 // pred_region
          %636 = dma.done %s629, 8192
        $region96: #{tpu_custom_call.1} parent=71 // pred_fallthru
          _
        %s637 = sand.u32 %s40, 1
        %s638 = scalar_lea.sflag [#allocation13], %s637
        %s639 = sand.u32 %s258, 1
        %s640 = smul.addr %s639, 48
        %s641 = scalar_lea.vmem [#allocation14], %s640
        // Predicated region
        $region97: #{tpu_custom_call.1} parent=71 // pred_check
          %p642 = pneg %p271
        $region98: #{tpu_custom_call.1} parent=71 // pred_check_branch
          %644 = sbr.rel (%p642) target = $region100
        $region99: #{tpu_custom_call.1} parent=71 // pred_region
          %645 = dma.done %s638, 768
        $region100: #{tpu_custom_call.1} parent=71 // pred_fallthru
          _
        // Predicated region
        $region101: #{tpu_custom_call.1} parent=71 // pred_check
          %p646 = pneg %p292
        $region102: #{tpu_custom_call.1} parent=71 // pred_check_branch
          %648 = sbr.rel (%p646) target = $region104
        $region103: #{tpu_custom_call.1} parent=71 // pred_region
          %649 = dma.done [#allocation16], 4096
        $region104: #{tpu_custom_call.1} parent=71 // pred_fallthru
          _
        // Predicated region
        $region105: #{tpu_custom_call.1} parent=71 // pred_check
          %p650 = pneg %p334
        $region106: #{tpu_custom_call.1} parent=71 // pred_check_branch
          %652 = sbr.rel (%p650) target = $region108
        $region107: #{tpu_custom_call.1} parent=71 // pred_region
          %653 = dma.done [#allocation16], 2048
        $region108: #{tpu_custom_call.1} parent=71 // pred_fallthru
          _
        %s654 = sand.u32 %s60, 1
        %s655 = scalar_lea.sflag [#allocation4], %s654
        %s656 = sand.u32 %s60, 1
        %s657 = smul.addr %s656, 16
        %s658 = scalar_lea.vmem [#allocation3], %s657
        %p659 = pneg %p73
        %p660 = pneg %p70
        %s661 = sand.u32 %s40, 1
        %s662 = scalar_lea.sflag [#allocation7], %s661
        %s663 = sand.u32 %s86, 1
        %s664 = scalar_lea.vmem [#allocation6], %s663
        %p665 = pneg %p99
        %p666 = pneg %p96
        %p667 = pneg %p120
        %p668 = pneg %p117
        %p669 = pneg %p141
        %p670 = pneg %p138
        %s671 = sand.u32 %s40, 1
        %s672 = scalar_lea.sflag [#allocation7], %s671
        %s673 = sand.u32 %s154, 1
        %s674 = smul.addr %s673, 768
        %s675 = scalar_lea.vmem [#allocation8], %s674
        %p676 = pneg %p167
        %p677 = pneg %p164
        %s678 = sand.u32 %s40, 1
        %s679 = scalar_lea.sflag [#allocation10], %s678
        %s680 = sand.u32 %s180, 1
        %s681 = smul.addr %s680, 256
        %s682 = scalar_lea.vmem [#allocation9], %s681
        %p683 = pneg %p193
        %p684 = pneg %p190
        %s685 = sand.u32 %s40, 1
        %s686 = scalar_lea.sflag [#allocation10], %s685
        %s687 = sand.u32 %s206, 1
        %s688 = smul.addr %s687, 512
        %s689 = scalar_lea.vmem [#allocation11], %s688
        %p690 = pneg %p219
        %p691 = pneg %p216
        %s692 = sand.u32 %s40, 1
        %s693 = scalar_lea.sflag [#allocation13], %s692
        %s694 = sand.u32 %s232, 1
        %s695 = smul.addr %s694, 512
        %s696 = scalar_lea.vmem [#allocation12], %s695
        %p697 = pneg %p245
        %p698 = pneg %p242
        %s699 = sand.u32 %s40, 1
        %s700 = scalar_lea.sflag [#allocation13], %s699
        %s701 = sand.u32 %s258, 1
        %s702 = smul.addr %s701, 48
        %s703 = scalar_lea.vmem [#allocation14], %s702
        %p704 = pneg %p271
        %p705 = pneg %p268
        %p706 = pneg %p292
        %p707 = pneg %p289
        %p708 = pneg %p313
        %p709 = pneg %p310
        %p710 = pneg %p334
        %p711 = pneg %p331
        %p712 = pneg %p355
        %p713 = pneg %p352
        %p714 = pneg %p381
        %p715 = pneg %p378
        %s716 = sand.u32 %s368, 1
        %s717 = scalar_lea.sflag [#allocation5], %s716
        %s718 = sand.u32 %s368, 1
        %s719 = scalar_lea.vmem [#allocation18], %s718
        %p721 = scmp.eq.s32.totalorder %s45, 0
        // Predicated region
        $region109: #{tpu_custom_call.1} parent=71 // pred_check
          %p722 = pneg %p721
        $region110: #{tpu_custom_call.1} parent=71 // pred_check_branch
          %724 = sbr.rel (%p722) target = $region112
        $region111: #{tpu_custom_call.1} parent=71 // pred_region
          %v725 = vld [vmem:[%s588] sm:$0xff]
          %v726 = vld [vmem:[%s588 + $0x8] sm:$0xff]
          %v727 = vld [vmem:[%s2] sm:$0x3]
          %v728 = vld [vmem:[%s3] sm:$0x3]
          %v729 = vadd.f32 %v725, %v726
          %730 = vadd.xlane.f32.xlu0 %v729
          %v731 = vpop.xlane.xlu0 %730
          %v732 = vrcp.pop 256.0
          %v733 = vmul.f32 %v731, %v732
          %v734 = vsub.f32 %v725, %v733
          %v735 = vsub.f32 %v726, %v733
          %v736 = vmul.f32 %v734, %v734
          %v737 = vmul.f32 %v735, %v735
          %v738 = vadd.f32 %v736, %v737
          %739 = vadd.xlane.f32.xlu0 %v738
          %v740 = vpop.xlane.xlu0 %739
          %v741 = vmul.f32 %v740, %v732
          %v742 = vadd.f32 %v741, 1e-12
          %v743 = vrsqrt.pop %v742
          %v744 = vmul.f32 %v734, %v743
          %v745 = vmul.f32 %v735, %v743
          %v747 = vlaneseq
          %v748 = vshrl.u32 %v747, 7
          %v749 = vsub.s32 0, %v748
          %v750 = vrot.slane %v727, %v749
          %v751 = vlaneseq
          %v752 = vshrl.u32 %v751, 7
          %v753 = vsub.s32 1, %v752
          %v754 = vrot.slane %v727, %v753
          %v757 = vmul.f32 %v744, %v750
          %v758 = vmul.f32 %v745, %v754
          %v760 = vlaneseq
          %v761 = vshrl.u32 %v760, 7
          %v762 = vsub.s32 0, %v761
          %v763 = vrot.slane %v728, %v762
          %v764 = vlaneseq
          %v765 = vshrl.u32 %v764, 7
          %v766 = vsub.s32 1, %v765
          %v767 = vrot.slane %v728, %v766
          %v770 = vadd.f32 %v757, %v763
          %v771 = vadd.f32 %v758, %v767
          %772 = vst [vmem:[#allocation2] sm:$0xff] %v770
          %773 = vst [vmem:[#allocation2 + $0x8] sm:$0xff] %v771
          %774 = vst [vmem:[%s719] sm:$0x1] 0.0
        $region112: #{tpu_custom_call.1} parent=71 // pred_fallthru
          _
        %v775 = vld [vmem:[#allocation2] sm:$0xff]
        %v776 = vld [vmem:[#allocation2 + $0x8] sm:$0xff]
        %v777 = vld [vmem:[%s641] sm:$0xff]
        %v778 = vld [vmem:[%s641 + $0x8] sm:$0xff]
        %v779 = vld [vmem:[%s641 + $0x10] sm:$0xff]
        %v780 = vld [vmem:[%s641 + $0x18] sm:$0xff]
        %v781 = vld [vmem:[%s641 + $0x20] sm:$0xff]
        %v782 = vld [vmem:[%s641 + $0x28] sm:$0xff]
        %v783 = vld [vmem:[%s605] sm:$0xff]
        %v784 = vld [vmem:[%s605 + $0x8] sm:$0xff]
        %v785 = vld [vmem:[%s605 + $0x10] sm:$0xff]
        %v786 = vld [vmem:[%s605 + $0x18] sm:$0xff]
        %v787 = vld [vmem:[%s605 + $0x20] sm:$0xff]
        %v788 = vld [vmem:[%s605 + $0x28] sm:$0xff]
        %v789 = vld [vmem:[%s605 + $0x30] sm:$0xff]
        %v790 = vld [vmem:[%s605 + $0x38] sm:$0xff]
        %v791 = vld [vmem:[%s605 + $0x40] sm:$0xff]
        %v792 = vld [vmem:[%s605 + $0x48] sm:$0xff]
        %v793 = vld [vmem:[%s605 + $0x50] sm:$0xff]
        %v794 = vld [vmem:[%s605 + $0x58] sm:$0xff]
        %v795 = vld [vmem:[%s605 + $0x60] sm:$0xff]
        %v796 = vld [vmem:[%s605 + $0x68] sm:$0xff]
        %v797 = vld [vmem:[%s605 + $0x70] sm:$0xff]
        %v798 = vld [vmem:[%s605 + $0x78] sm:$0xff]
        %v799 = vld [vmem:[%s605 + $0x80] sm:$0xff]
        %v800 = vld [vmem:[%s605 + $0x88] sm:$0xff]
        %v801 = vld [vmem:[%s605 + $0x90] sm:$0xff]
        %v802 = vld [vmem:[%s605 + $0x98] sm:$0xff]
        %v803 = vld [vmem:[%s605 + $0xa0] sm:$0xff]
        %v804 = vld [vmem:[%s605 + $0xa8] sm:$0xff]
        %v805 = vld [vmem:[%s605 + $0xb0] sm:$0xff]
        %v806 = vld [vmem:[%s605 + $0xb8] sm:$0xff]
        %v807 = vld [vmem:[%s605 + $0xc0] sm:$0xff]
        %v808 = vld [vmem:[%s605 + $0xc8] sm:$0xff]
        %v809 = vld [vmem:[%s605 + $0xd0] sm:$0xff]
        %v810 = vld [vmem:[%s605 + $0xd8] sm:$0xff]
        %v811 = vld [vmem:[%s605 + $0xe0] sm:$0xff]
        %v812 = vld [vmem:[%s605 + $0xe8] sm:$0xff]
        %v813 = vld [vmem:[%s605 + $0xf0] sm:$0xff]
        %v814 = vld [vmem:[%s605 + $0xf8] sm:$0xff]
        %v815 = vld [vmem:[%s605 + $0x100] sm:$0xff]
        %v816 = vld [vmem:[%s605 + $0x108] sm:$0xff]
        %v817 = vld [vmem:[%s605 + $0x110] sm:$0xff]
        %v818 = vld [vmem:[%s605 + $0x118] sm:$0xff]
        %v819 = vld [vmem:[%s605 + $0x120] sm:$0xff]
        %v820 = vld [vmem:[%s605 + $0x128] sm:$0xff]
        %v821 = vld [vmem:[%s605 + $0x130] sm:$0xff]
        %v822 = vld [vmem:[%s605 + $0x138] sm:$0xff]
        %v823 = vld [vmem:[%s605 + $0x140] sm:$0xff]
        %v824 = vld [vmem:[%s605 + $0x148] sm:$0xff]
        %v825 = vld [vmem:[%s605 + $0x150] sm:$0xff]
        %v826 = vld [vmem:[%s605 + $0x158] sm:$0xff]
        %v827 = vld [vmem:[%s605 + $0x160] sm:$0xff]
        %v828 = vld [vmem:[%s605 + $0x168] sm:$0xff]
        %v829 = vld [vmem:[%s605 + $0x170] sm:$0xff]
        %v830 = vld [vmem:[%s605 + $0x178] sm:$0xff]
        %v831 = vld [vmem:[%s605 + $0x180] sm:$0xff]
        %v832 = vld [vmem:[%s605 + $0x188] sm:$0xff]
        %v833 = vld [vmem:[%s605 + $0x190] sm:$0xff]
        %v834 = vld [vmem:[%s605 + $0x198] sm:$0xff]
        %v835 = vld [vmem:[%s605 + $0x1a0] sm:$0xff]
        %v836 = vld [vmem:[%s605 + $0x1a8] sm:$0xff]
        %v837 = vld [vmem:[%s605 + $0x1b0] sm:$0xff]
        %v838 = vld [vmem:[%s605 + $0x1b8] sm:$0xff]
        %v839 = vld [vmem:[%s605 + $0x1c0] sm:$0xff]
        %v840 = vld [vmem:[%s605 + $0x1c8] sm:$0xff]
        %v841 = vld [vmem:[%s605 + $0x1d0] sm:$0xff]
        %v842 = vld [vmem:[%s605 + $0x1d8] sm:$0xff]
        %v843 = vld [vmem:[%s605 + $0x1e0] sm:$0xff]
        %v844 = vld [vmem:[%s605 + $0x1e8] sm:$0xff]
        %v845 = vld [vmem:[%s605 + $0x1f0] sm:$0xff]
        %v846 = vld [vmem:[%s605 + $0x1f8] sm:$0xff]
        %v847 = vld [vmem:[%s605 + $0x200] sm:$0xff]
        %v848 = vld [vmem:[%s605 + $0x208] sm:$0xff]
        %v849 = vld [vmem:[%s605 + $0x210] sm:$0xff]
        %v850 = vld [vmem:[%s605 + $0x218] sm:$0xff]
        %v851 = vld [vmem:[%s605 + $0x220] sm:$0xff]
        %v852 = vld [vmem:[%s605 + $0x228] sm:$0xff]
        %v853 = vld [vmem:[%s605 + $0x230] sm:$0xff]
        %v854 = vld [vmem:[%s605 + $0x238] sm:$0xff]
        %v855 = vld [vmem:[%s605 + $0x240] sm:$0xff]
        %v856 = vld [vmem:[%s605 + $0x248] sm:$0xff]
        %v857 = vld [vmem:[%s605 + $0x250] sm:$0xff]
        %v858 = vld [vmem:[%s605 + $0x258] sm:$0xff]
        %v859 = vld [vmem:[%s605 + $0x260] sm:$0xff]
        %v860 = vld [vmem:[%s605 + $0x268] sm:$0xff]
        %v861 = vld [vmem:[%s605 + $0x270] sm:$0xff]
        %v862 = vld [vmem:[%s605 + $0x278] sm:$0xff]
        %v863 = vld [vmem:[%s605 + $0x280] sm:$0xff]
        %v864 = vld [vmem:[%s605 + $0x288] sm:$0xff]
        %v865 = vld [vmem:[%s605 + $0x290] sm:$0xff]
        %v866 = vld [vmem:[%s605 + $0x298] sm:$0xff]
        %v867 = vld [vmem:[%s605 + $0x2a0] sm:$0xff]
        %v868 = vld [vmem:[%s605 + $0x2a8] sm:$0xff]
        %v869 = vld [vmem:[%s605 + $0x2b0] sm:$0xff]
        %v870 = vld [vmem:[%s605 + $0x2b8] sm:$0xff]
        %v871 = vld [vmem:[%s605 + $0x2c0] sm:$0xff]
        %v872 = vld [vmem:[%s605 + $0x2c8] sm:$0xff]
        %v873 = vld [vmem:[%s605 + $0x2d0] sm:$0xff]
        %v874 = vld [vmem:[%s605 + $0x2d8] sm:$0xff]
        %v875 = vld [vmem:[%s605 + $0x2e0] sm:$0xff]
        %v876 = vld [vmem:[%s605 + $0x2e8] sm:$0xff]
        %v877 = vld [vmem:[%s605 + $0x2f0] sm:$0xff]
        %v878 = vld [vmem:[%s605 + $0x2f8] sm:$0xff]
        %v879 = vld [vmem:[%s614] sm:$0xff]
        %v880 = vld [vmem:[%s614 + $0x8] sm:$0xff]
        %v881 = vld [vmem:[%s614 + $0x10] sm:$0xff]
        %v882 = vld [vmem:[%s614 + $0x18] sm:$0xff]
        %v883 = vld [vmem:[%s614 + $0x20] sm:$0xff]
        %v884 = vld [vmem:[%s614 + $0x28] sm:$0xff]
        %v885 = vld [vmem:[%s614 + $0x30] sm:$0xff]
        %v886 = vld [vmem:[%s614 + $0x38] sm:$0xff]
        %v887 = vld [vmem:[%s614 + $0x40] sm:$0xff]
        %v888 = vld [vmem:[%s614 + $0x48] sm:$0xff]
        %v889 = vld [vmem:[%s614 + $0x50] sm:$0xff]
        %v890 = vld [vmem:[%s614 + $0x58] sm:$0xff]
        %v891 = vld [vmem:[%s614 + $0x60] sm:$0xff]
        %v892 = vld [vmem:[%s614 + $0x68] sm:$0xff]
        %v893 = vld [vmem:[%s614 + $0x70] sm:$0xff]
        %v894 = vld [vmem:[%s614 + $0x78] sm:$0xff]
        %v895 = vld [vmem:[%s614 + $0x80] sm:$0xff]
        %v896 = vld [vmem:[%s614 + $0x88] sm:$0xff]
        %v897 = vld [vmem:[%s614 + $0x90] sm:$0xff]
        %v898 = vld [vmem:[%s614 + $0x98] sm:$0xff]
        %v899 = vld [vmem:[%s614 + $0xa0] sm:$0xff]
        %v900 = vld [vmem:[%s614 + $0xa8] sm:$0xff]
        %v901 = vld [vmem:[%s614 + $0xb0] sm:$0xff]
        %v902 = vld [vmem:[%s614 + $0xb8] sm:$0xff]
        %v903 = vld [vmem:[%s614 + $0xc0] sm:$0xff]
        %v904 = vld [vmem:[%s614 + $0xc8] sm:$0xff]
        %v905 = vld [vmem:[%s614 + $0xd0] sm:$0xff]
        %v906 = vld [vmem:[%s614 + $0xd8] sm:$0xff]
        %v907 = vld [vmem:[%s614 + $0xe0] sm:$0xff]
        %v908 = vld [vmem:[%s614 + $0xe8] sm:$0xff]
        %v909 = vld [vmem:[%s614 + $0xf0] sm:$0xff]
        %v910 = vld [vmem:[%s614 + $0xf8] sm:$0xff]
        %v911 = vld [vmem:[%s623] sm:$0xff]
        %v912 = vld [vmem:[%s623 + $0x8] sm:$0xff]
        %v913 = vld [vmem:[%s623 + $0x10] sm:$0xff]
        %v914 = vld [vmem:[%s623 + $0x18] sm:$0xff]
        %v915 = vld [vmem:[%s623 + $0x20] sm:$0xff]
        %v916 = vld [vmem:[%s623 + $0x28] sm:$0xff]
        %v917 = vld [vmem:[%s623 + $0x30] sm:$0xff]
        %v918 = vld [vmem:[%s623 + $0x38] sm:$0xff]
        %v919 = vld [vmem:[%s623 + $0x40] sm:$0xff]
        %v920 = vld [vmem:[%s623 + $0x48] sm:$0xff]
        %v921 = vld [vmem:[%s623 + $0x50] sm:$0xff]
        %v922 = vld [vmem:[%s623 + $0x58] sm:$0xff]
        %v923 = vld [vmem:[%s623 + $0x60] sm:$0xff]
        %v924 = vld [vmem:[%s623 + $0x68] sm:$0xff]
        %v925 = vld [vmem:[%s623 + $0x70] sm:$0xff]
        %v926 = vld [vmem:[%s623 + $0x78] sm:$0xff]
        %v927 = vld [vmem:[%s623 + $0x80] sm:$0xff]
        %v928 = vld [vmem:[%s623 + $0x88] sm:$0xff]
        %v929 = vld [vmem:[%s623 + $0x90] sm:$0xff]
        %v930 = vld [vmem:[%s623 + $0x98] sm:$0xff]
        %v931 = vld [vmem:[%s623 + $0xa0] sm:$0xff]
        %v932 = vld [vmem:[%s623 + $0xa8] sm:$0xff]
        %v933 = vld [vmem:[%s623 + $0xb0] sm:$0xff]
        %v934 = vld [vmem:[%s623 + $0xb8] sm:$0xff]
        %v935 = vld [vmem:[%s623 + $0xc0] sm:$0xff]
        %v936 = vld [vmem:[%s623 + $0xc8] sm:$0xff]
        %v937 = vld [vmem:[%s623 + $0xd0] sm:$0xff]
        %v938 = vld [vmem:[%s623 + $0xd8] sm:$0xff]
        %v939 = vld [vmem:[%s623 + $0xe0] sm:$0xff]
        %v940 = vld [vmem:[%s623 + $0xe8] sm:$0xff]
        %v941 = vld [vmem:[%s623 + $0xf0] sm:$0xff]
        %v942 = vld [vmem:[%s623 + $0xf8] sm:$0xff]
        %v943 = vld [vmem:[%s623 + $0x100] sm:$0xff]
        %v944 = vld [vmem:[%s623 + $0x108] sm:$0xff]
        %v945 = vld [vmem:[%s623 + $0x110] sm:$0xff]
        %v946 = vld [vmem:[%s623 + $0x118] sm:$0xff]
        %v947 = vld [vmem:[%s623 + $0x120] sm:$0xff]
        %v948 = vld [vmem:[%s623 + $0x128] sm:$0xff]
        %v949 = vld [vmem:[%s623 + $0x130] sm:$0xff]
        %v950 = vld [vmem:[%s623 + $0x138] sm:$0xff]
        %v951 = vld [vmem:[%s623 + $0x140] sm:$0xff]
        %v952 = vld [vmem:[%s623 + $0x148] sm:$0xff]
        %v953 = vld [vmem:[%s623 + $0x150] sm:$0xff]
        %v954 = vld [vmem:[%s623 + $0x158] sm:$0xff]
        %v955 = vld [vmem:[%s623 + $0x160] sm:$0xff]
        %v956 = vld [vmem:[%s623 + $0x168] sm:$0xff]
        %v957 = vld [vmem:[%s623 + $0x170] sm:$0xff]
        %v958 = vld [vmem:[%s623 + $0x178] sm:$0xff]
        %v959 = vld [vmem:[%s623 + $0x180] sm:$0xff]
        %v960 = vld [vmem:[%s623 + $0x188] sm:$0xff]
        %v961 = vld [vmem:[%s623 + $0x190] sm:$0xff]
        %v962 = vld [vmem:[%s623 + $0x198] sm:$0xff]
        %v963 = vld [vmem:[%s623 + $0x1a0] sm:$0xff]
        %v964 = vld [vmem:[%s623 + $0x1a8] sm:$0xff]
        %v965 = vld [vmem:[%s623 + $0x1b0] sm:$0xff]
        %v966 = vld [vmem:[%s623 + $0x1b8] sm:$0xff]
        %v967 = vld [vmem:[%s623 + $0x1c0] sm:$0xff]
        %v968 = vld [vmem:[%s623 + $0x1c8] sm:$0xff]
        %v969 = vld [vmem:[%s623 + $0x1d0] sm:$0xff]
        %v970 = vld [vmem:[%s623 + $0x1d8] sm:$0xff]
        %v971 = vld [vmem:[%s623 + $0x1e0] sm:$0xff]
        %v972 = vld [vmem:[%s623 + $0x1e8] sm:$0xff]
        %v973 = vld [vmem:[%s623 + $0x1f0] sm:$0xff]
        %v974 = vld [vmem:[%s623 + $0x1f8] sm:$0xff]
        %v975 = vld [vmem:[%s632] sm:$0xff]
        %v976 = vld [vmem:[%s632 + $0x8] sm:$0xff]
        %v977 = vld [vmem:[%s632 + $0x10] sm:$0xff]
        %v978 = vld [vmem:[%s632 + $0x18] sm:$0xff]
        %v979 = vld [vmem:[%s632 + $0x20] sm:$0xff]
        %v980 = vld [vmem:[%s632 + $0x28] sm:$0xff]
        %v981 = vld [vmem:[%s632 + $0x30] sm:$0xff]
        %v982 = vld [vmem:[%s632 + $0x38] sm:$0xff]
        %v983 = vld [vmem:[%s632 + $0x40] sm:$0xff]
        %v984 = vld [vmem:[%s632 + $0x48] sm:$0xff]
        %v985 = vld [vmem:[%s632 + $0x50] sm:$0xff]
        %v986 = vld [vmem:[%s632 + $0x58] sm:$0xff]
        %v987 = vld [vmem:[%s632 + $0x60] sm:$0xff]
        %v988 = vld [vmem:[%s632 + $0x68] sm:$0xff]
        %v989 = vld [vmem:[%s632 + $0x70] sm:$0xff]
        %v990 = vld [vmem:[%s632 + $0x78] sm:$0xff]
        %v991 = vld [vmem:[%s632 + $0x80] sm:$0xff]
        %v992 = vld [vmem:[%s632 + $0x88] sm:$0xff]
        %v993 = vld [vmem:[%s632 + $0x90] sm:$0xff]
        %v994 = vld [vmem:[%s632 + $0x98] sm:$0xff]
        %v995 = vld [vmem:[%s632 + $0xa0] sm:$0xff]
        %v996 = vld [vmem:[%s632 + $0xa8] sm:$0xff]
        %v997 = vld [vmem:[%s632 + $0xb0] sm:$0xff]
        %v998 = vld [vmem:[%s632 + $0xb8] sm:$0xff]
        %v999 = vld [vmem:[%s632 + $0xc0] sm:$0xff]
        %v1000 = vld [vmem:[%s632 + $0xc8] sm:$0xff]
        %v1001 = vld [vmem:[%s632 + $0xd0] sm:$0xff]
        %v1002 = vld [vmem:[%s632 + $0xd8] sm:$0xff]
        %v1003 = vld [vmem:[%s632 + $0xe0] sm:$0xff]
        %v1004 = vld [vmem:[%s632 + $0xe8] sm:$0xff]
        %v1005 = vld [vmem:[%s632 + $0xf0] sm:$0xff]
        %v1006 = vld [vmem:[%s632 + $0xf8] sm:$0xff]
        %v1007 = vld [vmem:[%s632 + $0x100] sm:$0xff]
        %v1008 = vld [vmem:[%s632 + $0x108] sm:$0xff]
        %v1009 = vld [vmem:[%s632 + $0x110] sm:$0xff]
        %v1010 = vld [vmem:[%s632 + $0x118] sm:$0xff]
        %v1011 = vld [vmem:[%s632 + $0x120] sm:$0xff]
        %v1012 = vld [vmem:[%s632 + $0x128] sm:$0xff]
        %v1013 = vld [vmem:[%s632 + $0x130] sm:$0xff]
        %v1014 = vld [vmem:[%s632 + $0x138] sm:$0xff]
        %v1015 = vld [vmem:[%s632 + $0x140] sm:$0xff]
        %v1016 = vld [vmem:[%s632 + $0x148] sm:$0xff]
        %v1017 = vld [vmem:[%s632 + $0x150] sm:$0xff]
        %v1018 = vld [vmem:[%s632 + $0x158] sm:$0xff]
        %v1019 = vld [vmem:[%s632 + $0x160] sm:$0xff]
        %v1020 = vld [vmem:[%s632 + $0x168] sm:$0xff]
        %v1021 = vld [vmem:[%s632 + $0x170] sm:$0xff]
        %v1022 = vld [vmem:[%s632 + $0x178] sm:$0xff]
        %v1023 = vld [vmem:[%s632 + $0x180] sm:$0xff]
        %v1024 = vld [vmem:[%s632 + $0x188] sm:$0xff]
        %v1025 = vld [vmem:[%s632 + $0x190] sm:$0xff]
        %v1026 = vld [vmem:[%s632 + $0x198] sm:$0xff]
        %v1027 = vld [vmem:[%s632 + $0x1a0] sm:$0xff]
        %v1028 = vld [vmem:[%s632 + $0x1a8] sm:$0xff]
        %v1029 = vld [vmem:[%s632 + $0x1b0] sm:$0xff]
        %v1030 = vld [vmem:[%s632 + $0x1b8] sm:$0xff]
        %v1031 = vld [vmem:[%s632 + $0x1c0] sm:$0xff]
        %v1032 = vld [vmem:[%s632 + $0x1c8] sm:$0xff]
        %v1033 = vld [vmem:[%s632 + $0x1d0] sm:$0xff]
        %v1034 = vld [vmem:[%s632 + $0x1d8] sm:$0xff]
        %v1035 = vld [vmem:[%s632 + $0x1e0] sm:$0xff]
        %v1036 = vld [vmem:[%s632 + $0x1e8] sm:$0xff]
        %v1037 = vld [vmem:[%s632 + $0x1f0] sm:$0xff]
        %v1038 = vld [vmem:[%s632 + $0x1f8] sm:$0xff]
        %v1039 = vpack.c.bf16 %v775, %v775
        %v1040 = vpack.c.bf16 %v776, %v776
        %v1041 = vlaneseq
        %v1042 = vshrl.u32 %v1041, 7
        %v1043 = vsub.s32 0, %v1042
        %v1044 = vrot.slane %v777, %v1043
        %v1045 = vlaneseq
        %v1046 = vshrl.u32 %v1045, 7
        %v1047 = vsub.s32 0, %v1046
        %v1048 = vrot.slane %v778, %v1047
        %v1049 = vlaneseq
        %v1050 = vshrl.u32 %v1049, 7
        %v1051 = vsub.s32 0, %v1050
        %v1052 = vrot.slane %v779, %v1051
        %v1053 = vlaneseq
        %v1054 = vshrl.u32 %v1053, 7
        %v1055 = vsub.s32 0, %v1054
        %v1056 = vrot.slane %v780, %v1055
        %v1057 = vlaneseq
        %v1058 = vshrl.u32 %v1057, 7
        %v1059 = vsub.s32 0, %v1058
        %v1060 = vrot.slane %v781, %v1059
        %v1061 = vlaneseq
        %v1062 = vshrl.u32 %v1061, 7
        %v1063 = vsub.s32 0, %v1062
        %v1064 = vrot.slane %v782, %v1063
        %v1161 = vunpack.c.l.b16 %v783
        %v1162 = vunpack.c.h.b16 %v783
        %v1163 = vunpack.c.l.b16 %v784
        %v1164 = vunpack.c.h.b16 %v784
        %v1165 = vunpack.c.l.b16 %v785
        %v1166 = vunpack.c.h.b16 %v785
        %v1167 = vunpack.c.l.b16 %v786
        %v1168 = vunpack.c.h.b16 %v786
        %v1169 = vunpack.c.l.b16 %v787
        %v1170 = vunpack.c.h.b16 %v787
        %v1171 = vunpack.c.l.b16 %v788
        %v1172 = vunpack.c.h.b16 %v788
        %v1173 = vunpack.c.l.b16 %v789
        %v1174 = vunpack.c.h.b16 %v789
        %v1175 = vunpack.c.l.b16 %v790
        %v1176 = vunpack.c.h.b16 %v790
        %v1177 = vunpack.c.l.b16 %v791
        %v1178 = vunpack.c.h.b16 %v791
        %v1179 = vunpack.c.l.b16 %v792
        %v1180 = vunpack.c.h.b16 %v792
        %v1181 = vunpack.c.l.b16 %v793
        %v1182 = vunpack.c.h.b16 %v793
        %v1183 = vunpack.c.l.b16 %v794
        %v1184 = vunpack.c.h.b16 %v794
        %v1185 = vunpack.c.l.b16 %v795
        %v1186 = vunpack.c.h.b16 %v795
        %v1187 = vunpack.c.l.b16 %v796
        %v1188 = vunpack.c.h.b16 %v796
        %v1189 = vunpack.c.l.b16 %v797
        %v1190 = vunpack.c.h.b16 %v797
        %v1191 = vunpack.c.l.b16 %v798
        %v1192 = vunpack.c.h.b16 %v798
        %v1193 = vunpack.c.l.b16 %v799
        %v1194 = vunpack.c.h.b16 %v799
        %v1195 = vunpack.c.l.b16 %v800
        %v1196 = vunpack.c.h.b16 %v800
        %v1197 = vunpack.c.l.b16 %v801
        %v1198 = vunpack.c.h.b16 %v801
        %v1199 = vunpack.c.l.b16 %v802
        %v1200 = vunpack.c.h.b16 %v802
        %v1201 = vunpack.c.l.b16 %v803
        %v1202 = vunpack.c.h.b16 %v803
        %v1203 = vunpack.c.l.b16 %v804
        %v1204 = vunpack.c.h.b16 %v804
        %v1205 = vunpack.c.l.b16 %v805
        %v1206 = vunpack.c.h.b16 %v805
        %v1207 = vunpack.c.l.b16 %v806
        %v1208 = vunpack.c.h.b16 %v806
        %v1209 = vunpack.c.l.b16 %v807
        %v1210 = vunpack.c.h.b16 %v807
        %v1211 = vunpack.c.l.b16 %v808
        %v1212 = vunpack.c.h.b16 %v808
        %v1213 = vunpack.c.l.b16 %v809
        %v1214 = vunpack.c.h.b16 %v809
        %v1215 = vunpack.c.l.b16 %v810
        %v1216 = vunpack.c.h.b16 %v810
        %v1217 = vunpack.c.l.b16 %v811
        %v1218 = vunpack.c.h.b16 %v811
        %v1219 = vunpack.c.l.b16 %v812
        %v1220 = vunpack.c.h.b16 %v812
        %v1221 = vunpack.c.l.b16 %v813
        %v1222 = vunpack.c.h.b16 %v813
        %v1223 = vunpack.c.l.b16 %v814
        %v1224 = vunpack.c.h.b16 %v814
        %v1225 = vunpack.c.l.b16 %v815
        %v1226 = vunpack.c.h.b16 %v815
        %v1227 = vunpack.c.l.b16 %v816
        %v1228 = vunpack.c.h.b16 %v816
        %v1229 = vunpack.c.l.b16 %v817
        %v1230 = vunpack.c.h.b16 %v817
        %v1231 = vunpack.c.l.b16 %v818
        %v1232 = vunpack.c.h.b16 %v818
        %v1233 = vunpack.c.l.b16 %v819
        %v1234 = vunpack.c.h.b16 %v819
        %v1235 = vunpack.c.l.b16 %v820
        %v1236 = vunpack.c.h.b16 %v820
        %v1237 = vunpack.c.l.b16 %v821
        %v1238 = vunpack.c.h.b16 %v821
        %v1239 = vunpack.c.l.b16 %v822
        %v1240 = vunpack.c.h.b16 %v822
        %v1241 = vunpack.c.l.b16 %v823
        %v1242 = vunpack.c.h.b16 %v823
        %v1243 = vunpack.c.l.b16 %v824
        %v1244 = vunpack.c.h.b16 %v824
        %v1245 = vunpack.c.l.b16 %v825
        %v1246 = vunpack.c.h.b16 %v825
        %v1247 = vunpack.c.l.b16 %v826
        %v1248 = vunpack.c.h.b16 %v826
        %v1249 = vunpack.c.l.b16 %v827
        %v1250 = vunpack.c.h.b16 %v827
        %v1251 = vunpack.c.l.b16 %v828
        %v1252 = vunpack.c.h.b16 %v828
        %v1253 = vunpack.c.l.b16 %v829
        %v1254 = vunpack.c.h.b16 %v829
        %v1255 = vunpack.c.l.b16 %v830
        %v1256 = vunpack.c.h.b16 %v830
        %v1257 = vunpack.c.l.b16 %v831
        %v1258 = vunpack.c.h.b16 %v831
        %v1259 = vunpack.c.l.b16 %v832
        %v1260 = vunpack.c.h.b16 %v832
        %v1261 = vunpack.c.l.b16 %v833
        %v1262 = vunpack.c.h.b16 %v833
        %v1263 = vunpack.c.l.b16 %v834
        %v1264 = vunpack.c.h.b16 %v834
        %v1265 = vunpack.c.l.b16 %v835
        %v1266 = vunpack.c.h.b16 %v835
        %v1267 = vunpack.c.l.b16 %v836
        %v1268 = vunpack.c.h.b16 %v836
        %v1269 = vunpack.c.l.b16 %v837
        %v1270 = vunpack.c.h.b16 %v837
        %v1271 = vunpack.c.l.b16 %v838
        %v1272 = vunpack.c.h.b16 %v838
        %v1273 = vunpack.c.l.b16 %v839
        %v1274 = vunpack.c.h.b16 %v839
        %v1275 = vunpack.c.l.b16 %v840
        %v1276 = vunpack.c.h.b16 %v840
        %v1277 = vunpack.c.l.b16 %v841
        %v1278 = vunpack.c.h.b16 %v841
        %v1279 = vunpack.c.l.b16 %v842
        %v1280 = vunpack.c.h.b16 %v842
        %v1281 = vunpack.c.l.b16 %v843
        %v1282 = vunpack.c.h.b16 %v843
        %v1283 = vunpack.c.l.b16 %v844
        %v1284 = vunpack.c.h.b16 %v844
        %v1285 = vunpack.c.l.b16 %v845
        %v1286 = vunpack.c.h.b16 %v845
        %v1287 = vunpack.c.l.b16 %v846
        %v1288 = vunpack.c.h.b16 %v846
        %v1289 = vunpack.c.l.b16 %v847
        %v1290 = vunpack.c.h.b16 %v847
        %v1291 = vunpack.c.l.b16 %v848
        %v1292 = vunpack.c.h.b16 %v848
        %v1293 = vunpack.c.l.b16 %v849
        %v1294 = vunpack.c.h.b16 %v849
        %v1295 = vunpack.c.l.b16 %v850
        %v1296 = vunpack.c.h.b16 %v850
        %v1297 = vunpack.c.l.b16 %v851
        %v1298 = vunpack.c.h.b16 %v851
        %v1299 = vunpack.c.l.b16 %v852
        %v1300 = vunpack.c.h.b16 %v852
        %v1301 = vunpack.c.l.b16 %v853
        %v1302 = vunpack.c.h.b16 %v853
        %v1303 = vunpack.c.l.b16 %v854
        %v1304 = vunpack.c.h.b16 %v854
        %v1305 = vunpack.c.l.b16 %v855
        %v1306 = vunpack.c.h.b16 %v855
        %v1307 = vunpack.c.l.b16 %v856
        %v1308 = vunpack.c.h.b16 %v856
        %v1309 = vunpack.c.l.b16 %v857
        %v1310 = vunpack.c.h.b16 %v857
        %v1311 = vunpack.c.l.b16 %v858
        %v1312 = vunpack.c.h.b16 %v858
        %v1313 = vunpack.c.l.b16 %v859
        %v1314 = vunpack.c.h.b16 %v859
        %v1315 = vunpack.c.l.b16 %v860
        %v1316 = vunpack.c.h.b16 %v860
        %v1317 = vunpack.c.l.b16 %v861
        %v1318 = vunpack.c.h.b16 %v861
        %v1319 = vunpack.c.l.b16 %v862
        %v1320 = vunpack.c.h.b16 %v862
        %v1321 = vunpack.c.l.b16 %v863
        %v1322 = vunpack.c.h.b16 %v863
        %v1323 = vunpack.c.l.b16 %v864
        %v1324 = vunpack.c.h.b16 %v864
        %v1325 = vunpack.c.l.b16 %v865
        %v1326 = vunpack.c.h.b16 %v865
        %v1327 = vunpack.c.l.b16 %v866
        %v1328 = vunpack.c.h.b16 %v866
        %v1329 = vunpack.c.l.b16 %v867
        %v1330 = vunpack.c.h.b16 %v867
        %v1331 = vunpack.c.l.b16 %v868
        %v1332 = vunpack.c.h.b16 %v868
        %v1333 = vunpack.c.l.b16 %v869
        %v1334 = vunpack.c.h.b16 %v869
        %v1335 = vunpack.c.l.b16 %v870
        %v1336 = vunpack.c.h.b16 %v870
        %v1337 = vunpack.c.l.b16 %v871
        %v1338 = vunpack.c.h.b16 %v871
        %v1339 = vunpack.c.l.b16 %v872
        %v1340 = vunpack.c.h.b16 %v872
        %v1341 = vunpack.c.l.b16 %v873
        %v1342 = vunpack.c.h.b16 %v873
        %v1343 = vunpack.c.l.b16 %v874
        %v1344 = vunpack.c.h.b16 %v874
        %v1345 = vunpack.c.l.b16 %v875
        %v1346 = vunpack.c.h.b16 %v875
        %v1347 = vunpack.c.l.b16 %v876
        %v1348 = vunpack.c.h.b16 %v876
        %v1349 = vunpack.c.l.b16 %v877
        %v1350 = vunpack.c.h.b16 %v877
        %v1351 = vunpack.c.l.b16 %v878
        %v1352 = vunpack.c.h.b16 %v878
        %v1353 = vpack.c.b16 %v1167, %v1161
        %v1354 = vpack.c.b16 %v1168, %v1162
        %v1355 = vpack.c.b16 %v1169, %v1163
        %v1356 = vpack.c.b16 %v1170, %v1164
        %v1357 = vpack.c.b16 %v1171, %v1165
        %v1358 = vpack.c.b16 %v1172, %v1166
        %v1359 = vpack.c.b16 %v1179, %v1173
        %v1360 = vpack.c.b16 %v1180, %v1174
        %v1361 = vpack.c.b16 %v1181, %v1175
        %v1362 = vpack.c.b16 %v1182, %v1176
        %v1363 = vpack.c.b16 %v1183, %v1177
        %v1364 = vpack.c.b16 %v1184, %v1178
        %v1365 = vpack.c.b16 %v1191, %v1185
        %v1366 = vpack.c.b16 %v1192, %v1186
        %v1367 = vpack.c.b16 %v1193, %v1187
        %v1368 = vpack.c.b16 %v1194, %v1188
        %v1369 = vpack.c.b16 %v1195, %v1189
        %v1370 = vpack.c.b16 %v1196, %v1190
        %v1371 = vpack.c.b16 %v1203, %v1197
        %v1372 = vpack.c.b16 %v1204, %v1198
        %v1373 = vpack.c.b16 %v1205, %v1199
        %v1374 = vpack.c.b16 %v1206, %v1200
        %v1375 = vpack.c.b16 %v1207, %v1201
        %v1376 = vpack.c.b16 %v1208, %v1202
        %v1377 = vpack.c.b16 %v1215, %v1209
        %v1378 = vpack.c.b16 %v1216, %v1210
        %v1379 = vpack.c.b16 %v1217, %v1211
        %v1380 = vpack.c.b16 %v1218, %v1212
        %v1381 = vpack.c.b16 %v1219, %v1213
        %v1382 = vpack.c.b16 %v1220, %v1214
        %v1383 = vpack.c.b16 %v1227, %v1221
        %v1384 = vpack.c.b16 %v1228, %v1222
        %v1385 = vpack.c.b16 %v1229, %v1223
        %v1386 = vpack.c.b16 %v1230, %v1224
        %v1387 = vpack.c.b16 %v1231, %v1225
        %v1388 = vpack.c.b16 %v1232, %v1226
        %v1389 = vpack.c.b16 %v1239, %v1233
        %v1390 = vpack.c.b16 %v1240, %v1234
        %v1391 = vpack.c.b16 %v1241, %v1235
        %v1392 = vpack.c.b16 %v1242, %v1236
        %v1393 = vpack.c.b16 %v1243, %v1237
        %v1394 = vpack.c.b16 %v1244, %v1238
        %v1395 = vpack.c.b16 %v1251, %v1245
        %v1396 = vpack.c.b16 %v1252, %v1246
        %v1397 = vpack.c.b16 %v1253, %v1247
        %v1398 = vpack.c.b16 %v1254, %v1248
        %v1399 = vpack.c.b16 %v1255, %v1249
        %v1400 = vpack.c.b16 %v1256, %v1250
        %v1401 = vpack.c.b16 %v1263, %v1257
        %v1402 = vpack.c.b16 %v1264, %v1258
        %v1403 = vpack.c.b16 %v1265, %v1259
        %v1404 = vpack.c.b16 %v1266, %v1260
        %v1405 = vpack.c.b16 %v1267, %v1261
        %v1406 = vpack.c.b16 %v1268, %v1262
        %v1407 = vpack.c.b16 %v1275, %v1269
        %v1408 = vpack.c.b16 %v1276, %v1270
        %v1409 = vpack.c.b16 %v1277, %v1271
        %v1410 = vpack.c.b16 %v1278, %v1272
        %v1411 = vpack.c.b16 %v1279, %v1273
        %v1412 = vpack.c.b16 %v1280, %v1274
        %v1413 = vpack.c.b16 %v1287, %v1281
        %v1414 = vpack.c.b16 %v1288, %v1282
        %v1415 = vpack.c.b16 %v1289, %v1283
        %v1416 = vpack.c.b16 %v1290, %v1284
        %v1417 = vpack.c.b16 %v1291, %v1285
        %v1418 = vpack.c.b16 %v1292, %v1286
        %v1419 = vpack.c.b16 %v1299, %v1293
        %v1420 = vpack.c.b16 %v1300, %v1294
        %v1421 = vpack.c.b16 %v1301, %v1295
        %v1422 = vpack.c.b16 %v1302, %v1296
        %v1423 = vpack.c.b16 %v1303, %v1297
        %v1424 = vpack.c.b16 %v1304, %v1298
        %v1425 = vpack.c.b16 %v1311, %v1305
        %v1426 = vpack.c.b16 %v1312, %v1306
        %v1427 = vpack.c.b16 %v1313, %v1307
        %v1428 = vpack.c.b16 %v1314, %v1308
        %v1429 = vpack.c.b16 %v1315, %v1309
        %v1430 = vpack.c.b16 %v1316, %v1310
        %v1431 = vpack.c.b16 %v1323, %v1317
        %v1432 = vpack.c.b16 %v1324, %v1318
        %v1433 = vpack.c.b16 %v1325, %v1319
        %v1434 = vpack.c.b16 %v1326, %v1320
        %v1435 = vpack.c.b16 %v1327, %v1321
        %v1436 = vpack.c.b16 %v1328, %v1322
        %v1437 = vpack.c.b16 %v1335, %v1329
        %v1438 = vpack.c.b16 %v1336, %v1330
        %v1439 = vpack.c.b16 %v1337, %v1331
        %v1440 = vpack.c.b16 %v1338, %v1332
        %v1441 = vpack.c.b16 %v1339, %v1333
        %v1442 = vpack.c.b16 %v1340, %v1334
        %v1443 = vpack.c.b16 %v1347, %v1341
        %v1444 = vpack.c.b16 %v1348, %v1342
        %v1445 = vpack.c.b16 %v1349, %v1343
        %v1446 = vpack.c.b16 %v1350, %v1344
        %v1447 = vpack.c.b16 %v1351, %v1345
        %v1448 = vpack.c.b16 %v1352, %v1346
        %1545 = vmatprep.subr.bf16.mxu0 %v1396
        %1546 = vmatpush1.bf16.msra.mxu0 %v1395
        %1547 = vmatprep.subr.bf16.mxu0 %v1390
        %1548 = vmatpush1.bf16.msra.mxu0 %v1389
        %1549 = vmatprep.subr.bf16.mxu0 %v1384
        %1550 = vmatpush1.bf16.msra.mxu0 %v1383
        %1551 = vmatprep.subr.bf16.mxu0 %v1378
        %1552 = vmatpush1.bf16.msra.mxu0 %v1377
        %1553 = vmatprep.subr.bf16.mxu0 %v1372
        %1554 = vmatpush1.bf16.msra.mxu0 %v1371
        %1555 = vmatprep.subr.bf16.mxu0 %v1366
        %1556 = vmatpush1.bf16.msra.mxu0 %v1365
        %1557 = vmatprep.subr.bf16.mxu0 %v1360
        %1558 = vmatpush1.bf16.msra.mxu0 %v1359
        %1559 = vmatprep.subr.bf16.mxu0 %v1354
        %1560 = vmatpush1.bf16.msra.mxu0 %v1353
        %1561 = vmatprep.subr.bf16.mxu0 %v1444
        %1562 = vmatpush2.bf16.msra.mxu0 %v1443
        %1563 = vmatprep.subr.bf16.mxu0 %v1438
        %1564 = vmatpush2.bf16.msra.mxu0 %v1437
        %1565 = vmatprep.subr.bf16.mxu0 %v1432
        %1566 = vmatpush2.bf16.msra.mxu0 %v1431
        %1567 = vmatprep.subr.bf16.mxu0 %v1426
        %1568 = vmatpush2.bf16.msra.mxu0 %v1425
        %1569 = vmatprep.subr.bf16.mxu0 %v1420
        %1570 = vmatpush2.bf16.msra.mxu0 %v1419
        %1571 = vmatprep.subr.bf16.mxu0 %v1414
        %1572 = vmatpush2.bf16.msra.mxu0 %v1413
        %1573 = vmatprep.subr.bf16.mxu0 %v1408
        %1574 = vmatpush2.bf16.msra.mxu0 %v1407
        %1575 = vmatprep.subr.bf16.mxu0 %v1402
        %1576 = vmatpush2.bf16.msra.mxu0 %v1401
        %1577 = vmatprep.mubr.bf16.mxu0 %v1040
        %1578 = vmatmul.mubr.bf16.gmra.mxu0 %v1039
        %v1579 = vpop.f32.mrf.mxu0
        %v1580 = vadd.f32 %v1044, %v1579
        %v1581 = vpop.f32.mrf.mxu0
        %v1582 = vadd.f32 %v1048, %v1581
        %v1583 = vpop.f32.mrf.mxu0
        %v1584 = vpop.f32.mrf.mxu0
        %1585 = vdwg.mxu0
        %1586 = vmatprep.subr.bf16.mxu0 %v1398
        %1587 = vmatpush1.bf16.msra.mxu0 %v1397
        %1588 = vmatprep.subr.bf16.mxu0 %v1392
        %1589 = vmatpush1.bf16.msra.mxu0 %v1391
        %1590 = vmatprep.subr.bf16.mxu0 %v1386
        %1591 = vmatpush1.bf16.msra.mxu0 %v1385
        %1592 = vmatprep.subr.bf16.mxu0 %v1380
        %1593 = vmatpush1.bf16.msra.mxu0 %v1379
        %1594 = vmatprep.subr.bf16.mxu0 %v1374
        %1595 = vmatpush1.bf16.msra.mxu0 %v1373
        %1596 = vmatprep.subr.bf16.mxu0 %v1368
        %1597 = vmatpush1.bf16.msra.mxu0 %v1367
        %1598 = vmatprep.subr.bf16.mxu0 %v1362
        %1599 = vmatpush1.bf16.msra.mxu0 %v1361
        %1600 = vmatprep.subr.bf16.mxu0 %v1356
        %1601 = vmatpush1.bf16.msra.mxu0 %v1355
        %1602 = vmatprep.subr.bf16.mxu0 %v1446
        %1603 = vmatpush2.bf16.msra.mxu0 %v1445
        %1604 = vmatprep.subr.bf16.mxu0 %v1440
        %1605 = vmatpush2.bf16.msra.mxu0 %v1439
        %1606 = vmatprep.subr.bf16.mxu0 %v1434
        %1607 = vmatpush2.bf16.msra.mxu0 %v1433
        %1608 = vmatprep.subr.bf16.mxu0 %v1428
        %1609 = vmatpush2.bf16.msra.mxu0 %v1427
        %1610 = vmatprep.subr.bf16.mxu0 %v1422
        %1611 = vmatpush2.bf16.msra.mxu0 %v1421
        %1612 = vmatprep.subr.bf16.mxu0 %v1416
        %1613 = vmatpush2.bf16.msra.mxu0 %v1415
        %1614 = vmatprep.subr.bf16.mxu0 %v1410
        %1615 = vmatpush2.bf16.msra.mxu0 %v1409
        %1616 = vmatprep.subr.bf16.mxu0 %v1404
        %1617 = vmatpush2.bf16.msra.mxu0 %v1403
        %1618 = vmatprep.mubr.bf16.mxu0 %v1040
        %1619 = vmatmul.mubr.bf16.gmra.mxu0 %v1039
        %v1620 = vpop.f32.mrf.mxu0
        %v1621 = vadd.f32 %v1052, %v1620
        %v1622 = vpop.f32.mrf.mxu0
        %v1623 = vadd.f32 %v1056, %v1622
        %v1624 = vpop.f32.mrf.mxu0
        %v1625 = vpop.f32.mrf.mxu0
        %1626 = vdwg.mxu0
        %1627 = vmatprep.subr.bf16.mxu0 %v1400
        %1628 = vmatpush1.bf16.msra.mxu0 %v1399
        %1629 = vmatprep.subr.bf16.mxu0 %v1394
        %1630 = vmatpush1.bf16.msra.mxu0 %v1393
        %1631 = vmatprep.subr.bf16.mxu0 %v1388
        %1632 = vmatpush1.bf16.msra.mxu0 %v1387
        %1633 = vmatprep.subr.bf16.mxu0 %v1382
        %1634 = vmatpush1.bf16.msra.mxu0 %v1381
        %1635 = vmatprep.subr.bf16.mxu0 %v1376
        %1636 = vmatpush1.bf16.msra.mxu0 %v1375
        %1637 = vmatprep.subr.bf16.mxu0 %v1370
        %1638 = vmatpush1.bf16.msra.mxu0 %v1369
        %1639 = vmatprep.subr.bf16.mxu0 %v1364
        %1640 = vmatpush1.bf16.msra.mxu0 %v1363
        %1641 = vmatprep.subr.bf16.mxu0 %v1358
        %1642 = vmatpush1.bf16.msra.mxu0 %v1357
        %1643 = vmatprep.subr.bf16.mxu0 %v1448
        %1644 = vmatpush2.bf16.msra.mxu0 %v1447
        %1645 = vmatprep.subr.bf16.mxu0 %v1442
        %1646 = vmatpush2.bf16.msra.mxu0 %v1441
        %1647 = vmatprep.subr.bf16.mxu0 %v1436
        %1648 = vmatpush2.bf16.msra.mxu0 %v1435
        %1649 = vmatprep.subr.bf16.mxu0 %v1430
        %1650 = vmatpush2.bf16.msra.mxu0 %v1429
        %1651 = vmatprep.subr.bf16.mxu0 %v1424
        %1652 = vmatpush2.bf16.msra.mxu0 %v1423
        %1653 = vmatprep.subr.bf16.mxu0 %v1418
        %1654 = vmatpush2.bf16.msra.mxu0 %v1417
        %1655 = vmatprep.subr.bf16.mxu0 %v1412
        %1656 = vmatpush2.bf16.msra.mxu0 %v1411
        %1657 = vmatprep.subr.bf16.mxu0 %v1406
        %1658 = vmatpush2.bf16.msra.mxu0 %v1405
        %1659 = vmatprep.mubr.bf16.mxu0 %v1040
        %1660 = vmatmul.mubr.bf16.gmra.mxu0 %v1039
        %v1661 = vpop.f32.mrf.mxu0
        %v1662 = vadd.f32 %v1060, %v1661
        %v1663 = vpop.f32.mrf.mxu0
        %v1664 = vadd.f32 %v1064, %v1663
        %v1665 = vpop.f32.mrf.mxu0
        %v1666 = vpop.f32.mrf.mxu0
        %1667 = vdwg.mxu0
        %v1668 = vld [vmem:[%s596] sm:$0x1]
        %v1669 = vpack.c.bf16 %v1580, %v1580
        %v1670 = vpack.c.bf16 %v1621, %v1621
        %v1671 = vpack.c.bf16 %v1662, %v1662
        %1672 = vmatprep.subr.bf16.mxu0 0
        %1673 = vmatpush1.bf16.xpose.msra.mxu0 0
        %1674 = vmatprep.subr.bf16.mxu0 0
        %1675 = vmatpush1.bf16.xpose.msra.mxu0 0
        %1676 = vmatprep.subr.bf16.mxu0 0
        %1677 = vmatpush1.bf16.xpose.msra.mxu0 0
        %1678 = vmatprep.subr.bf16.mxu0 0
        %1679 = vmatpush1.bf16.xpose.msra.mxu0 0
        %1680 = vmatprep.subr.bf16.mxu0 0
        %1681 = vmatpush1.bf16.xpose.msra.mxu0 0
        %1682 = vmatprep.subr.bf16.mxu0 0
        %1683 = vmatpush1.bf16.xpose.msra.mxu0 0
        %1684 = vmatprep.subr.bf16.mxu0 0
        %1685 = vmatpush1.bf16.xpose.msra.mxu0 0
        %1686 = vmatprep.subr.bf16.mxu0 0
        %1687 = vmatpush1.bf16.xpose.msra.mxu0 %v1670
        %1688 = vmatprep.subr.bf16.mxu0 0
        %1689 = vmatpush2.bf16.xpose.msra.mxu0 0
        %1690 = vmatprep.subr.bf16.mxu0 0
        %1691 = vmatpush2.bf16.xpose.msra.mxu0 0
        %1692 = vmatprep.subr.bf16.mxu0 0
        %1693 = vmatpush2.bf16.xpose.msra.mxu0 0
        %1694 = vmatprep.subr.bf16.mxu0 0
        %1695 = vmatpush2.bf16.xpose.msra.mxu0 0
        %1696 = vmatprep.subr.bf16.mxu0 0
        %1697 = vmatpush2.bf16.xpose.msra.mxu0 0
        %1698 = vmatprep.subr.bf16.mxu0 0
        %1699 = vmatpush2.bf16.xpose.msra.mxu0 0
        %1700 = vmatprep.subr.bf16.mxu0 0
        %1701 = vmatpush2.bf16.xpose.msra.mxu0 0
        %1702 = vmatprep.subr.bf16.mxu0 0
        %1703 = vmatpush2.bf16.xpose.msra.mxu0 0
        %1704 = vmatprep.mubr.bf16.mxu0 0
        %1705 = vmatmul.mubr.bf16.gmra.mxu0 %v1669
        %v1706 = vpop.f32.mrf.mxu0
        %v1707 = vadd.f32 0.0, %v1706
        %v1708 = vpop.f32.mrf.mxu0
        %v1709 = vpop.f32.mrf.mxu0
        %v1710 = vpop.f32.mrf.mxu0
        %1711 = vdwg.mxu0
        %v1712 = vmul.f32 %v1707, 0.088388346
        %v1714 = vlaneseq
        %v1715 = vshrl.u32 %v1714, 7
        %v1716 = vsub.s32 0, %v1715
        %v1717 = vrot.slane %v1668, %v1716
        %v1719 = vadd.f32 %v1712, %v1717
        %vm1720 = vcmask 64512
        %v1721 = vsel %vm1720, %v1719, -inf
        %1722 = vmax.xlane.f32.xlu0 %v1721
        %v1723 = vpop.xlane.xlu0 %1722
        %v1724 = vsub.f32 %v1719, %v1723
        %v1725 = vmul.f32 %v1724, 1.442695
        %v1726 = vpow.pop %v1725
        %v1727 = vsel %vm1720, %v1726, 0.0
        %1728 = vadd.xlane.f32.xlu0 %v1727
        %v1729 = vpop.xlane.xlu0 %1728
        %v1730 = vrcp.pop %v1729
        %v1731 = vmul.f32 %v1726, %v1730
        %v1732 = vpack.c.bf16 %v1731, %v1731
        %v1734 = vsel %vm1720, %v1732, 0
        %vm1736 = vcmask 1043456
        %v1738 = vsel %vm1736, %v1671, 0
        %1740 = vmatprep.subr.bf16.mxu0 0
        %1741 = vmatpush1.bf16.msra.mxu0 0
        %1742 = vmatprep.subr.bf16.mxu0 0
        %1743 = vmatpush1.bf16.msra.mxu0 0
        %1744 = vmatprep.subr.bf16.mxu0 0
        %1745 = vmatpush1.bf16.msra.mxu0 0
        %1746 = vmatprep.subr.bf16.mxu0 0
        %1747 = vmatpush1.bf16.msra.mxu0 0
        %1748 = vmatprep.subr.bf16.mxu0 0
        %1749 = vmatpush1.bf16.msra.mxu0 0
        %1750 = vmatprep.subr.bf16.mxu0 0
        %1751 = vmatpush1.bf16.msra.mxu0 0
        %1752 = vmatprep.subr.bf16.mxu0 0
        %1753 = vmatpush1.bf16.msra.mxu0 0
        %1754 = vmatprep.subr.bf16.mxu0 0
        %1755 = vmatpush1.bf16.msra.mxu0 %v1738
        %1756 = vmatprep.subr.bf16.mxu0 0
        %1757 = vmatpush2.bf16.msra.mxu0 0
        %1758 = vmatprep.subr.bf16.mxu0 0
        %1759 = vmatpush2.bf16.msra.mxu0 0
        %1760 = vmatprep.subr.bf16.mxu0 0
        %1761 = vmatpush2.bf16.msra.mxu0 0
        %1762 = vmatprep.subr.bf16.mxu0 0
        %1763 = vmatpush2.bf16.msra.mxu0 0
        %1764 = vmatprep.subr.bf16.mxu0 0
        %1765 = vmatpush2.bf16.msra.mxu0 0
        %1766 = vmatprep.subr.bf16.mxu0 0
        %1767 = vmatpush2.bf16.msra.mxu0 0
        %1768 = vmatprep.subr.bf16.mxu0 0
        %1769 = vmatpush2.bf16.msra.mxu0 0
        %1770 = vmatprep.subr.bf16.mxu0 0
        %1771 = vmatpush2.bf16.msra.mxu0 0
        %1772 = vmatprep.mubr.bf16.mxu0 0
        %1773 = vmatmul.mubr.bf16.gmra.mxu0 %v1734
        %v1774 = vpop.f32.mrf.mxu0
        %v1775 = vadd.f32 0.0, %v1774
        %v1776 = vpop.f32.mrf.mxu0
        %v1777 = vpop.f32.mrf.mxu0
        %v1778 = vpop.f32.mrf.mxu0
        %1779 = vdwg.mxu0
        %v1780 = vpack.c.bf16 %v1775, %v1775
        %v1781 = vpack.c.bf16 %v1582, %v1582
        %v1782 = vpack.c.bf16 %v1623, %v1623
        %v1783 = vpack.c.bf16 %v1664, %v1664
        %1784 = vmatprep.subr.bf16.mxu0 0
        %1785 = vmatpush1.bf16.xpose.msra.mxu0 0
        %1786 = vmatprep.subr.bf16.mxu0 0
        %1787 = vmatpush1.bf16.xpose.msra.mxu0 0
        %1788 = vmatprep.subr.bf16.mxu0 0
        %1789 = vmatpush1.bf16.xpose.msra.mxu0 0
        %1790 = vmatprep.subr.bf16.mxu0 0
        %1791 = vmatpush1.bf16.xpose.msra.mxu0 0
        %1792 = vmatprep.subr.bf16.mxu0 0
        %1793 = vmatpush1.bf16.xpose.msra.mxu0 0
        %1794 = vmatprep.subr.bf16.mxu0 0
        %1795 = vmatpush1.bf16.xpose.msra.mxu0 0
        %1796 = vmatprep.subr.bf16.mxu0 0
        %1797 = vmatpush1.bf16.xpose.msra.mxu0 0
        %1798 = vmatprep.subr.bf16.mxu0 0
        %1799 = vmatpush1.bf16.xpose.msra.mxu0 %v1782
        %1800 = vmatprep.subr.bf16.mxu0 0
        %1801 = vmatpush2.bf16.xpose.msra.mxu0 0
        %1802 = vmatprep.subr.bf16.mxu0 0
        %1803 = vmatpush2.bf16.xpose.msra.mxu0 0
        %1804 = vmatprep.subr.bf16.mxu0 0
        %1805 = vmatpush2.bf16.xpose.msra.mxu0 0
        %1806 = vmatprep.subr.bf16.mxu0 0
        %1807 = vmatpush2.bf16.xpose.msra.mxu0 0
        %1808 = vmatprep.subr.bf16.mxu0 0
        %1809 = vmatpush2.bf16.xpose.msra.mxu0 0
        %1810 = vmatprep.subr.bf16.mxu0 0
        %1811 = vmatpush2.bf16.xpose.msra.mxu0 0
        %1812 = vmatprep.subr.bf16.mxu0 0
        %1813 = vmatpush2.bf16.xpose.msra.mxu0 0
        %1814 = vmatprep.subr.bf16.mxu0 0
        %1815 = vmatpush2.bf16.xpose.msra.mxu0 0
        %1816 = vmatprep.mubr.bf16.mxu0 0
        %1817 = vmatmul.mubr.bf16.gmra.mxu0 %v1781
        %v1818 = vpop.f32.mrf.mxu0
        %v1819 = vadd.f32 0.0, %v1818
        %v1820 = vpop.f32.mrf.mxu0
        %v1821 = vpop.f32.mrf.mxu0
        %v1822 = vpop.f32.mrf.mxu0
        %1823 = vdwg.mxu0
        %v1824 = vmul.f32 %v1819, 0.088388346
        %v1825 = vadd.f32 %v1824, %v1717
        %v1826 = vsel %vm1720, %v1825, -inf
        %1827 = vmax.xlane.f32.xlu0 %v1826
        %v1828 = vpop.xlane.xlu0 %1827
        %v1829 = vsub.f32 %v1825, %v1828
        %v1830 = vmul.f32 %v1829, 1.442695
        %v1831 = vpow.pop %v1830
        %v1832 = vsel %vm1720, %v1831, 0.0
        %1833 = vadd.xlane.f32.xlu0 %v1832
        %v1834 = vpop.xlane.xlu0 %1833
        %v1835 = vrcp.pop %v1834
        %v1836 = vmul.f32 %v1831, %v1835
        %v1837 = vpack.c.bf16 %v1836, %v1836
        %v1839 = vsel %vm1720, %v1837, 0
        %v1842 = vsel %vm1736, %v1783, 0
        %1844 = vmatprep.subr.bf16.mxu0 0
        %1845 = vmatpush1.bf16.msra.mxu0 0
        %1846 = vmatprep.subr.bf16.mxu0 0
        %1847 = vmatpush1.bf16.msra.mxu0 0
        %1848 = vmatprep.subr.bf16.mxu0 0
        %1849 = vmatpush1.bf16.msra.mxu0 0
        %1850 = vmatprep.subr.bf16.mxu0 0
        %1851 = vmatpush1.bf16.msra.mxu0 0
        %1852 = vmatprep.subr.bf16.mxu0 0
        %1853 = vmatpush1.bf16.msra.mxu0 0
        %1854 = vmatprep.subr.bf16.mxu0 0
        %1855 = vmatpush1.bf16.msra.mxu0 0
        %1856 = vmatprep.subr.bf16.mxu0 0
        %1857 = vmatpush1.bf16.msra.mxu0 0
        %1858 = vmatprep.subr.bf16.mxu0 0
        %1859 = vmatpush1.bf16.msra.mxu0 %v1842
        %1860 = vmatprep.subr.bf16.mxu0 0
        %1861 = vmatpush2.bf16.msra.mxu0 0
        %1862 = vmatprep.subr.bf16.mxu0 0
        %1863 = vmatpush2.bf16.msra.mxu0 0
        %1864 = vmatprep.subr.bf16.mxu0 0
        %1865 = vmatpush2.bf16.msra.mxu0 0
        %1866 = vmatprep.subr.bf16.mxu0 0
        %1867 = vmatpush2.bf16.msra.mxu0 0
        %1868 = vmatprep.subr.bf16.mxu0 0
        %1869 = vmatpush2.bf16.msra.mxu0 0
        %1870 = vmatprep.subr.bf16.mxu0 0
        %1871 = vmatpush2.bf16.msra.mxu0 0
        %1872 = vmatprep.subr.bf16.mxu0 0
        %1873 = vmatpush2.bf16.msra.mxu0 0
        %1874 = vmatprep.subr.bf16.mxu0 0
        %1875 = vmatpush2.bf16.msra.mxu0 0
        %1876 = vmatprep.mubr.bf16.mxu0 0
        %1877 = vmatmul.mubr.bf16.gmra.mxu0 %v1839
        %v1878 = vpop.f32.mrf.mxu0
        %v1879 = vadd.f32 0.0, %v1878
        %v1880 = vpop.f32.mrf.mxu0
        %v1881 = vpop.f32.mrf.mxu0
        %v1882 = vpop.f32.mrf.mxu0
        %1883 = vdwg.mxu0
        %v1884 = vpack.c.bf16 %v1879, %v1879
        %v1901 = vunpack.c.l.b16 %v895
        %v1902 = vunpack.c.h.b16 %v895
        %v1903 = vunpack.c.l.b16 %v896
        %v1904 = vunpack.c.h.b16 %v896
        %v1905 = vunpack.c.l.b16 %v897
        %v1906 = vunpack.c.h.b16 %v897
        %v1907 = vunpack.c.l.b16 %v898
        %v1908 = vunpack.c.h.b16 %v898
        %v1909 = vunpack.c.l.b16 %v899
        %v1910 = vunpack.c.h.b16 %v899
        %v1911 = vunpack.c.l.b16 %v900
        %v1912 = vunpack.c.h.b16 %v900
        %v1913 = vunpack.c.l.b16 %v901
        %v1914 = vunpack.c.h.b16 %v901
        %v1915 = vunpack.c.l.b16 %v902
        %v1916 = vunpack.c.h.b16 %v902
        %v1917 = vunpack.c.l.b16 %v903
        %v1918 = vunpack.c.h.b16 %v903
        %v1919 = vunpack.c.l.b16 %v904
        %v1920 = vunpack.c.h.b16 %v904
        %v1921 = vunpack.c.l.b16 %v905
        %v1922 = vunpack.c.h.b16 %v905
        %v1923 = vunpack.c.l.b16 %v906
        %v1924 = vunpack.c.h.b16 %v906
        %v1925 = vunpack.c.l.b16 %v907
        %v1926 = vunpack.c.h.b16 %v907
        %v1927 = vunpack.c.l.b16 %v908
        %v1928 = vunpack.c.h.b16 %v908
        %v1929 = vunpack.c.l.b16 %v909
        %v1930 = vunpack.c.h.b16 %v909
        %v1931 = vunpack.c.l.b16 %v910
        %v1932 = vunpack.c.h.b16 %v910
        %v1933 = vpack.c.b16 %v1903, %v1901
        %v1934 = vpack.c.b16 %v1904, %v1902
        %v1935 = vpack.c.b16 %v1907, %v1905
        %v1936 = vpack.c.b16 %v1908, %v1906
        %v1937 = vpack.c.b16 %v1911, %v1909
        %v1938 = vpack.c.b16 %v1912, %v1910
        %v1939 = vpack.c.b16 %v1915, %v1913
        %v1940 = vpack.c.b16 %v1916, %v1914
        %v1941 = vpack.c.b16 %v1919, %v1917
        %v1942 = vpack.c.b16 %v1920, %v1918
        %v1943 = vpack.c.b16 %v1923, %v1921
        %v1944 = vpack.c.b16 %v1924, %v1922
        %v1945 = vpack.c.b16 %v1927, %v1925
        %v1946 = vpack.c.b16 %v1928, %v1926
        %v1947 = vpack.c.b16 %v1931, %v1929
        %v1948 = vpack.c.b16 %v1932, %v1930
        %1965 = vmatprep.subr.bf16.mxu0 %v1948
        %1966 = vmatpush1.bf16.msra.mxu0 %v1947
        %1967 = vmatprep.subr.bf16.mxu0 %v1946
        %1968 = vmatpush1.bf16.msra.mxu0 %v1945
        %1969 = vmatprep.subr.bf16.mxu0 %v1944
        %1970 = vmatpush1.bf16.msra.mxu0 %v1943
        %1971 = vmatprep.subr.bf16.mxu0 %v1942
        %1972 = vmatpush1.bf16.msra.mxu0 %v1941
        %1973 = vmatprep.subr.bf16.mxu0 %v1940
        %1974 = vmatpush1.bf16.msra.mxu0 %v1939
        %1975 = vmatprep.subr.bf16.mxu0 %v1938
        %1976 = vmatpush1.bf16.msra.mxu0 %v1937
        %1977 = vmatprep.subr.bf16.mxu0 %v1936
        %1978 = vmatpush1.bf16.msra.mxu0 %v1935
        %1979 = vmatprep.subr.bf16.mxu0 %v1934
        %1980 = vmatpush1.bf16.msra.mxu0 %v1933
        %1981 = vmatprep.subr.bf16.mxu0 0
        %1982 = vmatpush2.bf16.msra.mxu0 0
        %1983 = vmatprep.subr.bf16.mxu0 0
        %1984 = vmatpush2.bf16.msra.mxu0 0
        %1985 = vmatprep.subr.bf16.mxu0 0
        %1986 = vmatpush2.bf16.msra.mxu0 0
        %1987 = vmatprep.subr.bf16.mxu0 0
        %1988 = vmatpush2.bf16.msra.mxu0 0
        %1989 = vmatprep.subr.bf16.mxu0 0
        %1990 = vmatpush2.bf16.msra.mxu0 0
        %1991 = vmatprep.subr.bf16.mxu0 0
        %1992 = vmatpush2.bf16.msra.mxu0 0
        %1993 = vmatprep.subr.bf16.mxu0 0
        %1994 = vmatpush2.bf16.msra.mxu0 0
        %1995 = vmatprep.subr.bf16.mxu0 0
        %1996 = vmatpush2.bf16.msra.mxu0 0
        %1997 = vmatprep.mubr.bf16.mxu0 0
        %1998 = vmatmul.mubr.bf16.gmra.mxu0 %v1884
        %v1999 = vpop.f32.mrf.mxu0
        %v2000 = vadd.f32 0.0, %v1999
        %v2001 = vpop.f32.mrf.mxu0
        %v2002 = vadd.f32 0.0, %v2001
        %v2003 = vpop.f32.mrf.mxu0
        %v2004 = vpop.f32.mrf.mxu0
        %2005 = vdwg.mxu0
        %v2022 = vunpack.c.l.b16 %v879
        %v2023 = vunpack.c.h.b16 %v879
        %v2024 = vunpack.c.l.b16 %v880
        %v2025 = vunpack.c.h.b16 %v880
        %v2026 = vunpack.c.l.b16 %v881
        %v2027 = vunpack.c.h.b16 %v881
        %v2028 = vunpack.c.l.b16 %v882
        %v2029 = vunpack.c.h.b16 %v882
        %v2030 = vunpack.c.l.b16 %v883
        %v2031 = vunpack.c.h.b16 %v883
        %v2032 = vunpack.c.l.b16 %v884
        %v2033 = vunpack.c.h.b16 %v884
        %v2034 = vunpack.c.l.b16 %v885
        %v2035 = vunpack.c.h.b16 %v885
        %v2036 = vunpack.c.l.b16 %v886
        %v2037 = vunpack.c.h.b16 %v886
        %v2038 = vunpack.c.l.b16 %v887
        %v2039 = vunpack.c.h.b16 %v887
        %v2040 = vunpack.c.l.b16 %v888
        %v2041 = vunpack.c.h.b16 %v888
        %v2042 = vunpack.c.l.b16 %v889
        %v2043 = vunpack.c.h.b16 %v889
        %v2044 = vunpack.c.l.b16 %v890
        %v2045 = vunpack.c.h.b16 %v890
        %v2046 = vunpack.c.l.b16 %v891
        %v2047 = vunpack.c.h.b16 %v891
        %v2048 = vunpack.c.l.b16 %v892
        %v2049 = vunpack.c.h.b16 %v892
        %v2050 = vunpack.c.l.b16 %v893
        %v2051 = vunpack.c.h.b16 %v893
        %v2052 = vunpack.c.l.b16 %v894
        %v2053 = vunpack.c.h.b16 %v894
        %v2054 = vpack.c.b16 %v2024, %v2022
        %v2055 = vpack.c.b16 %v2025, %v2023
        %v2056 = vpack.c.b16 %v2028, %v2026
        %v2057 = vpack.c.b16 %v2029, %v2027
        %v2058 = vpack.c.b16 %v2032, %v2030
        %v2059 = vpack.c.b16 %v2033, %v2031
        %v2060 = vpack.c.b16 %v2036, %v2034
        %v2061 = vpack.c.b16 %v2037, %v2035
        %v2062 = vpack.c.b16 %v2040, %v2038
        %v2063 = vpack.c.b16 %v2041, %v2039
        %v2064 = vpack.c.b16 %v2044, %v2042
        %v2065 = vpack.c.b16 %v2045, %v2043
        %v2066 = vpack.c.b16 %v2048, %v2046
        %v2067 = vpack.c.b16 %v2049, %v2047
        %v2068 = vpack.c.b16 %v2052, %v2050
        %v2069 = vpack.c.b16 %v2053, %v2051
        %2086 = vmatprep.subr.bf16.mxu0 %v2069
        %2087 = vmatpush1.bf16.msra.mxu0 %v2068
        %2088 = vmatprep.subr.bf16.mxu0 %v2067
        %2089 = vmatpush1.bf16.msra.mxu0 %v2066
        %2090 = vmatprep.subr.bf16.mxu0 %v2065
        %2091 = vmatpush1.bf16.msra.mxu0 %v2064
        %2092 = vmatprep.subr.bf16.mxu0 %v2063
        %2093 = vmatpush1.bf16.msra.mxu0 %v2062
        %2094 = vmatprep.subr.bf16.mxu0 %v2061
        %2095 = vmatpush1.bf16.msra.mxu0 %v2060
        %2096 = vmatprep.subr.bf16.mxu0 %v2059
        %2097 = vmatpush1.bf16.msra.mxu0 %v2058
        %2098 = vmatprep.subr.bf16.mxu0 %v2057
        %2099 = vmatpush1.bf16.msra.mxu0 %v2056
        %2100 = vmatprep.subr.bf16.mxu0 %v2055
        %2101 = vmatpush1.bf16.msra.mxu0 %v2054
        %2102 = vmatprep.subr.bf16.mxu0 0
        %2103 = vmatpush2.bf16.msra.mxu0 0
        %2104 = vmatprep.subr.bf16.mxu0 0
        %2105 = vmatpush2.bf16.msra.mxu0 0
        %2106 = vmatprep.subr.bf16.mxu0 0
        %2107 = vmatpush2.bf16.msra.mxu0 0
        %2108 = vmatprep.subr.bf16.mxu0 0
        %2109 = vmatpush2.bf16.msra.mxu0 0
        %2110 = vmatprep.subr.bf16.mxu0 0
        %2111 = vmatpush2.bf16.msra.mxu0 0
        %2112 = vmatprep.subr.bf16.mxu0 0
        %2113 = vmatpush2.bf16.msra.mxu0 0
        %2114 = vmatprep.subr.bf16.mxu0 0
        %2115 = vmatpush2.bf16.msra.mxu0 0
        %2116 = vmatprep.subr.bf16.mxu0 0
        %2117 = vmatpush2.bf16.msra.mxu0 0
        %2118 = vmatprep.mubr.bf16.mxu0 0
        %2119 = vmatmul.mubr.bf16.gmra.mxu0 %v1780
        %v2120 = vpop.f32.mrf.mxu0
        %v2121 = vadd.f32 %v2000, %v2120
        %v2122 = vpop.f32.mrf.mxu0
        %v2123 = vadd.f32 %v2002, %v2122
        %v2124 = vpop.f32.mrf.mxu0
        %v2125 = vpop.f32.mrf.mxu0
        %2126 = vdwg.mxu0
        %v2127 = vlaneseq
        %v2128 = vshrl.u32 %v2127, 7
        %v2129 = vsub.s32 1, %v2128
        %v2130 = vrot.slane %v777, %v2129
        %v2131 = vlaneseq
        %v2132 = vshrl.u32 %v2131, 7
        %v2133 = vsub.s32 1, %v2132
        %v2134 = vrot.slane %v778, %v2133
        %v2135 = vadd.f32 %v2121, %v2130
        %v2136 = vadd.f32 %v2123, %v2134
        %v2137 = vadd.f32 %v2135, %v775
        %v2138 = vadd.f32 %v2136, %v776
        %v2139 = vadd.f32 %v2137, %v2138
        %2140 = vadd.xlane.f32.xlu0 %v2139
        %v2141 = vpop.xlane.xlu0 %2140
        %v2142 = vrcp.pop 256.0
        %v2143 = vmul.f32 %v2141, %v2142
        %v2144 = vsub.f32 %v2137, %v2143
        %v2145 = vsub.f32 %v2138, %v2143
        %v2146 = vmul.f32 %v2144, %v2144
        %v2147 = vmul.f32 %v2145, %v2145
        %v2148 = vadd.f32 %v2146, %v2147
        %2149 = vadd.xlane.f32.xlu0 %v2148
        %v2150 = vpop.xlane.xlu0 %2149
        %v2151 = vmul.f32 %v2150, %v2142
        %v2152 = vadd.f32 %v2151, 1e-12
        %v2153 = vrsqrt.pop %v2152
        %v2154 = vmul.f32 %v2144, %v2153
        %v2155 = vmul.f32 %v2145, %v2153
        %v2156 = vlaneseq
        %v2157 = vshrl.u32 %v2156, 7
        %v2158 = vsub.s32 2, %v2157
        %v2159 = vrot.slane %v777, %v2158
        %v2160 = vlaneseq
        %v2161 = vshrl.u32 %v2160, 7
        %v2162 = vsub.s32 2, %v2161
        %v2163 = vrot.slane %v778, %v2162
        %v2164 = vmul.f32 %v2154, %v2159
        %v2165 = vmul.f32 %v2155, %v2163
        %v2166 = vlaneseq
        %v2167 = vshrl.u32 %v2166, 7
        %v2168 = vsub.s32 3, %v2167
        %v2169 = vrot.slane %v777, %v2168
        %v2170 = vlaneseq
        %v2171 = vshrl.u32 %v2170, 7
        %v2172 = vsub.s32 3, %v2171
        %v2173 = vrot.slane %v778, %v2172
        %v2174 = vadd.f32 %v2164, %v2169
        %v2175 = vadd.f32 %v2165, %v2173
        %v2176 = vpack.c.bf16 %v2174, %v2174
        %v2177 = vpack.c.bf16 %v2175, %v2175
        %v2178 = vlaneseq
        %v2179 = vshrl.u32 %v2178, 7
        %v2180 = vsub.s32 4, %v2179
        %v2181 = vrot.slane %v777, %v2180
        %v2182 = vlaneseq
        %v2183 = vshrl.u32 %v2182, 7
        %v2184 = vsub.s32 4, %v2183
        %v2185 = vrot.slane %v778, %v2184
        %v2186 = vlaneseq
        %v2187 = vshrl.u32 %v2186, 7
        %v2188 = vsub.s32 4, %v2187
        %v2189 = vrot.slane %v779, %v2188
        %v2190 = vlaneseq
        %v2191 = vshrl.u32 %v2190, 7
        %v2192 = vsub.s32 4, %v2191
        %v2193 = vrot.slane %v780, %v2192
        %v2258 = vunpack.c.l.b16 %v911
        %v2259 = vunpack.c.h.b16 %v911
        %v2260 = vunpack.c.l.b16 %v912
        %v2261 = vunpack.c.h.b16 %v912
        %v2262 = vunpack.c.l.b16 %v913
        %v2263 = vunpack.c.h.b16 %v913
        %v2264 = vunpack.c.l.b16 %v914
        %v2265 = vunpack.c.h.b16 %v914
        %v2266 = vunpack.c.l.b16 %v915
        %v2267 = vunpack.c.h.b16 %v915
        %v2268 = vunpack.c.l.b16 %v916
        %v2269 = vunpack.c.h.b16 %v916
        %v2270 = vunpack.c.l.b16 %v917
        %v2271 = vunpack.c.h.b16 %v917
        %v2272 = vunpack.c.l.b16 %v918
        %v2273 = vunpack.c.h.b16 %v918
        %v2274 = vunpack.c.l.b16 %v919
        %v2275 = vunpack.c.h.b16 %v919
        %v2276 = vunpack.c.l.b16 %v920
        %v2277 = vunpack.c.h.b16 %v920
        %v2278 = vunpack.c.l.b16 %v921
        %v2279 = vunpack.c.h.b16 %v921
        %v2280 = vunpack.c.l.b16 %v922
        %v2281 = vunpack.c.h.b16 %v922
        %v2282 = vunpack.c.l.b16 %v923
        %v2283 = vunpack.c.h.b16 %v923
        %v2284 = vunpack.c.l.b16 %v924
        %v2285 = vunpack.c.h.b16 %v924
        %v2286 = vunpack.c.l.b16 %v925
        %v2287 = vunpack.c.h.b16 %v925
        %v2288 = vunpack.c.l.b16 %v926
        %v2289 = vunpack.c.h.b16 %v926
        %v2290 = vunpack.c.l.b16 %v927
        %v2291 = vunpack.c.h.b16 %v927
        %v2292 = vunpack.c.l.b16 %v928
        %v2293 = vunpack.c.h.b16 %v928
        %v2294 = vunpack.c.l.b16 %v929
        %v2295 = vunpack.c.h.b16 %v929
        %v2296 = vunpack.c.l.b16 %v930
        %v2297 = vunpack.c.h.b16 %v930
        %v2298 = vunpack.c.l.b16 %v931
        %v2299 = vunpack.c.h.b16 %v931
        %v2300 = vunpack.c.l.b16 %v932
        %v2301 = vunpack.c.h.b16 %v932
        %v2302 = vunpack.c.l.b16 %v933
        %v2303 = vunpack.c.h.b16 %v933
        %v2304 = vunpack.c.l.b16 %v934
        %v2305 = vunpack.c.h.b16 %v934
        %v2306 = vunpack.c.l.b16 %v935
        %v2307 = vunpack.c.h.b16 %v935
        %v2308 = vunpack.c.l.b16 %v936
        %v2309 = vunpack.c.h.b16 %v936
        %v2310 = vunpack.c.l.b16 %v937
        %v2311 = vunpack.c.h.b16 %v937
        %v2312 = vunpack.c.l.b16 %v938
        %v2313 = vunpack.c.h.b16 %v938
        %v2314 = vunpack.c.l.b16 %v939
        %v2315 = vunpack.c.h.b16 %v939
        %v2316 = vunpack.c.l.b16 %v940
        %v2317 = vunpack.c.h.b16 %v940
        %v2318 = vunpack.c.l.b16 %v941
        %v2319 = vunpack.c.h.b16 %v941
        %v2320 = vunpack.c.l.b16 %v942
        %v2321 = vunpack.c.h.b16 %v942
        %v2322 = vunpack.c.l.b16 %v943
        %v2323 = vunpack.c.h.b16 %v943
        %v2324 = vunpack.c.l.b16 %v944
        %v2325 = vunpack.c.h.b16 %v944
        %v2326 = vunpack.c.l.b16 %v945
        %v2327 = vunpack.c.h.b16 %v945
        %v2328 = vunpack.c.l.b16 %v946
        %v2329 = vunpack.c.h.b16 %v946
        %v2330 = vunpack.c.l.b16 %v947
        %v2331 = vunpack.c.h.b16 %v947
        %v2332 = vunpack.c.l.b16 %v948
        %v2333 = vunpack.c.h.b16 %v948
        %v2334 = vunpack.c.l.b16 %v949
        %v2335 = vunpack.c.h.b16 %v949
        %v2336 = vunpack.c.l.b16 %v950
        %v2337 = vunpack.c.h.b16 %v950
        %v2338 = vunpack.c.l.b16 %v951
        %v2339 = vunpack.c.h.b16 %v951
        %v2340 = vunpack.c.l.b16 %v952
        %v2341 = vunpack.c.h.b16 %v952
        %v2342 = vunpack.c.l.b16 %v953
        %v2343 = vunpack.c.h.b16 %v953
        %v2344 = vunpack.c.l.b16 %v954
        %v2345 = vunpack.c.h.b16 %v954
        %v2346 = vunpack.c.l.b16 %v955
        %v2347 = vunpack.c.h.b16 %v955
        %v2348 = vunpack.c.l.b16 %v956
        %v2349 = vunpack.c.h.b16 %v956
        %v2350 = vunpack.c.l.b16 %v957
        %v2351 = vunpack.c.h.b16 %v957
        %v2352 = vunpack.c.l.b16 %v958
        %v2353 = vunpack.c.h.b16 %v958
        %v2354 = vunpack.c.l.b16 %v959
        %v2355 = vunpack.c.h.b16 %v959
        %v2356 = vunpack.c.l.b16 %v960
        %v2357 = vunpack.c.h.b16 %v960
        %v2358 = vunpack.c.l.b16 %v961
        %v2359 = vunpack.c.h.b16 %v961
        %v2360 = vunpack.c.l.b16 %v962
        %v2361 = vunpack.c.h.b16 %v962
        %v2362 = vunpack.c.l.b16 %v963
        %v2363 = vunpack.c.h.b16 %v963
        %v2364 = vunpack.c.l.b16 %v964
        %v2365 = vunpack.c.h.b16 %v964
        %v2366 = vunpack.c.l.b16 %v965
        %v2367 = vunpack.c.h.b16 %v965
        %v2368 = vunpack.c.l.b16 %v966
        %v2369 = vunpack.c.h.b16 %v966
        %v2370 = vunpack.c.l.b16 %v967
        %v2371 = vunpack.c.h.b16 %v967
        %v2372 = vunpack.c.l.b16 %v968
        %v2373 = vunpack.c.h.b16 %v968
        %v2374 = vunpack.c.l.b16 %v969
        %v2375 = vunpack.c.h.b16 %v969
        %v2376 = vunpack.c.l.b16 %v970
        %v2377 = vunpack.c.h.b16 %v970
        %v2378 = vunpack.c.l.b16 %v971
        %v2379 = vunpack.c.h.b16 %v971
        %v2380 = vunpack.c.l.b16 %v972
        %v2381 = vunpack.c.h.b16 %v972
        %v2382 = vunpack.c.l.b16 %v973
        %v2383 = vunpack.c.h.b16 %v973
        %v2384 = vunpack.c.l.b16 %v974
        %v2385 = vunpack.c.h.b16 %v974
        %v2386 = vpack.c.b16 %v2262, %v2258
        %v2387 = vpack.c.b16 %v2263, %v2259
        %v2388 = vpack.c.b16 %v2264, %v2260
        %v2389 = vpack.c.b16 %v2265, %v2261
        %v2390 = vpack.c.b16 %v2270, %v2266
        %v2391 = vpack.c.b16 %v2271, %v2267
        %v2392 = vpack.c.b16 %v2272, %v2268
        %v2393 = vpack.c.b16 %v2273, %v2269
        %v2394 = vpack.c.b16 %v2278, %v2274
        %v2395 = vpack.c.b16 %v2279, %v2275
        %v2396 = vpack.c.b16 %v2280, %v2276
        %v2397 = vpack.c.b16 %v2281, %v2277
        %v2398 = vpack.c.b16 %v2286, %v2282
        %v2399 = vpack.c.b16 %v2287, %v2283
        %v2400 = vpack.c.b16 %v2288, %v2284
        %v2401 = vpack.c.b16 %v2289, %v2285
        %v2402 = vpack.c.b16 %v2294, %v2290
        %v2403 = vpack.c.b16 %v2295, %v2291
        %v2404 = vpack.c.b16 %v2296, %v2292
        %v2405 = vpack.c.b16 %v2297, %v2293
        %v2406 = vpack.c.b16 %v2302, %v2298
        %v2407 = vpack.c.b16 %v2303, %v2299
        %v2408 = vpack.c.b16 %v2304, %v2300
        %v2409 = vpack.c.b16 %v2305, %v2301
        %v2410 = vpack.c.b16 %v2310, %v2306
        %v2411 = vpack.c.b16 %v2311, %v2307
        %v2412 = vpack.c.b16 %v2312, %v2308
        %v2413 = vpack.c.b16 %v2313, %v2309
        %v2414 = vpack.c.b16 %v2318, %v2314
        %v2415 = vpack.c.b16 %v2319, %v2315
        %v2416 = vpack.c.b16 %v2320, %v2316
        %v2417 = vpack.c.b16 %v2321, %v2317
        %v2418 = vpack.c.b16 %v2326, %v2322
        %v2419 = vpack.c.b16 %v2327, %v2323
        %v2420 = vpack.c.b16 %v2328, %v2324
        %v2421 = vpack.c.b16 %v2329, %v2325
        %v2422 = vpack.c.b16 %v2334, %v2330
        %v2423 = vpack.c.b16 %v2335, %v2331
        %v2424 = vpack.c.b16 %v2336, %v2332
        %v2425 = vpack.c.b16 %v2337, %v2333
        %v2426 = vpack.c.b16 %v2342, %v2338
        %v2427 = vpack.c.b16 %v2343, %v2339
        %v2428 = vpack.c.b16 %v2344, %v2340
        %v2429 = vpack.c.b16 %v2345, %v2341
        %v2430 = vpack.c.b16 %v2350, %v2346
        %v2431 = vpack.c.b16 %v2351, %v2347
        %v2432 = vpack.c.b16 %v2352, %v2348
        %v2433 = vpack.c.b16 %v2353, %v2349
        %v2434 = vpack.c.b16 %v2358, %v2354
        %v2435 = vpack.c.b16 %v2359, %v2355
        %v2436 = vpack.c.b16 %v2360, %v2356
        %v2437 = vpack.c.b16 %v2361, %v2357
        %v2438 = vpack.c.b16 %v2366, %v2362
        %v2439 = vpack.c.b16 %v2367, %v2363
        %v2440 = vpack.c.b16 %v2368, %v2364
        %v2441 = vpack.c.b16 %v2369, %v2365
        %v2442 = vpack.c.b16 %v2374, %v2370
        %v2443 = vpack.c.b16 %v2375, %v2371
        %v2444 = vpack.c.b16 %v2376, %v2372
        %v2445 = vpack.c.b16 %v2377, %v2373
        %v2446 = vpack.c.b16 %v2382, %v2378
        %v2447 = vpack.c.b16 %v2383, %v2379
        %v2448 = vpack.c.b16 %v2384, %v2380
        %v2449 = vpack.c.b16 %v2385, %v2381
        %2514 = vmatprep.subr.bf16.mxu0 %v2415
        %2515 = vmatpush1.bf16.msra.mxu0 %v2414
        %2516 = vmatprep.subr.bf16.mxu0 %v2411
        %2517 = vmatpush1.bf16.msra.mxu0 %v2410
        %2518 = vmatprep.subr.bf16.mxu0 %v2407
        %2519 = vmatpush1.bf16.msra.mxu0 %v2406
        %2520 = vmatprep.subr.bf16.mxu0 %v2403
        %2521 = vmatpush1.bf16.msra.mxu0 %v2402
        %2522 = vmatprep.subr.bf16.mxu0 %v2399
        %2523 = vmatpush1.bf16.msra.mxu0 %v2398
        %2524 = vmatprep.subr.bf16.mxu0 %v2395
        %2525 = vmatpush1.bf16.msra.mxu0 %v2394
        %2526 = vmatprep.subr.bf16.mxu0 %v2391
        %2527 = vmatpush1.bf16.msra.mxu0 %v2390
        %2528 = vmatprep.subr.bf16.mxu0 %v2387
        %2529 = vmatpush1.bf16.msra.mxu0 %v2386
        %2530 = vmatprep.subr.bf16.mxu0 %v2447
        %2531 = vmatpush2.bf16.msra.mxu0 %v2446
        %2532 = vmatprep.subr.bf16.mxu0 %v2443
        %2533 = vmatpush2.bf16.msra.mxu0 %v2442
        %2534 = vmatprep.subr.bf16.mxu0 %v2439
        %2535 = vmatpush2.bf16.msra.mxu0 %v2438
        %2536 = vmatprep.subr.bf16.mxu0 %v2435
        %2537 = vmatpush2.bf16.msra.mxu0 %v2434
        %2538 = vmatprep.subr.bf16.mxu0 %v2431
        %2539 = vmatpush2.bf16.msra.mxu0 %v2430
        %2540 = vmatprep.subr.bf16.mxu0 %v2427
        %2541 = vmatpush2.bf16.msra.mxu0 %v2426
        %2542 = vmatprep.subr.bf16.mxu0 %v2423
        %2543 = vmatpush2.bf16.msra.mxu0 %v2422
        %2544 = vmatprep.subr.bf16.mxu0 %v2419
        %2545 = vmatpush2.bf16.msra.mxu0 %v2418
        %2546 = vmatprep.mubr.bf16.mxu0 %v2177
        %2547 = vmatmul.mubr.bf16.gmra.mxu0 %v2176
        %v2548 = vpop.f32.mrf.mxu0
        %v2549 = vadd.f32 %v2181, %v2548
        %v2550 = vpop.f32.mrf.mxu0
        %v2551 = vadd.f32 %v2185, %v2550
        %v2552 = vpop.f32.mrf.mxu0
        %v2553 = vpop.f32.mrf.mxu0
        %2554 = vdwg.mxu0
        %2555 = vmatprep.subr.bf16.mxu0 %v2417
        %2556 = vmatpush1.bf16.msra.mxu0 %v2416
        %2557 = vmatprep.subr.bf16.mxu0 %v2413
        %2558 = vmatpush1.bf16.msra.mxu0 %v2412
        %2559 = vmatprep.subr.bf16.mxu0 %v2409
        %2560 = vmatpush1.bf16.msra.mxu0 %v2408
        %2561 = vmatprep.subr.bf16.mxu0 %v2405
        %2562 = vmatpush1.bf16.msra.mxu0 %v2404
        %2563 = vmatprep.subr.bf16.mxu0 %v2401
        %2564 = vmatpush1.bf16.msra.mxu0 %v2400
        %2565 = vmatprep.subr.bf16.mxu0 %v2397
        %2566 = vmatpush1.bf16.msra.mxu0 %v2396
        %2567 = vmatprep.subr.bf16.mxu0 %v2393
        %2568 = vmatpush1.bf16.msra.mxu0 %v2392
        %2569 = vmatprep.subr.bf16.mxu0 %v2389
        %2570 = vmatpush1.bf16.msra.mxu0 %v2388
        %2571 = vmatprep.subr.bf16.mxu0 %v2449
        %2572 = vmatpush2.bf16.msra.mxu0 %v2448
        %2573 = vmatprep.subr.bf16.mxu0 %v2445
        %2574 = vmatpush2.bf16.msra.mxu0 %v2444
        %2575 = vmatprep.subr.bf16.mxu0 %v2441
        %2576 = vmatpush2.bf16.msra.mxu0 %v2440
        %2577 = vmatprep.subr.bf16.mxu0 %v2437
        %2578 = vmatpush2.bf16.msra.mxu0 %v2436
        %2579 = vmatprep.subr.bf16.mxu0 %v2433
        %2580 = vmatpush2.bf16.msra.mxu0 %v2432
        %2581 = vmatprep.subr.bf16.mxu0 %v2429
        %2582 = vmatpush2.bf16.msra.mxu0 %v2428
        %2583 = vmatprep.subr.bf16.mxu0 %v2425
        %2584 = vmatpush2.bf16.msra.mxu0 %v2424
        %2585 = vmatprep.subr.bf16.mxu0 %v2421
        %2586 = vmatpush2.bf16.msra.mxu0 %v2420
        %2587 = vmatprep.mubr.bf16.mxu0 %v2177
        %2588 = vmatmul.mubr.bf16.gmra.mxu0 %v2176
        %v2589 = vpop.f32.mrf.mxu0
        %v2590 = vadd.f32 %v2189, %v2589
        %v2591 = vpop.f32.mrf.mxu0
        %v2592 = vadd.f32 %v2193, %v2591
        %v2593 = vpop.f32.mrf.mxu0
        %v2594 = vpop.f32.mrf.mxu0
        %2595 = vdwg.mxu0
        %v2596 = vmul.f32 %v2549, 0.5
        %v2597 = vmul.f32 %v2551, 0.5
        %v2598 = vmul.f32 %v2590, 0.5
        %v2599 = vmul.f32 %v2592, 0.5
        %v2600 = vmul.f32 %v2549, 0.044715
        %v2601 = vmul.f32 %v2551, 0.044715
        %v2602 = vmul.f32 %v2590, 0.044715
        %v2603 = vmul.f32 %v2592, 0.044715
        %v2604 = vmul.f32 %v2600, %v2549
        %v2605 = vmul.f32 %v2601, %v2551
        %v2606 = vmul.f32 %v2602, %v2590
        %v2607 = vmul.f32 %v2603, %v2592
        %v2608 = vmul.f32 %v2604, %v2549
        %v2609 = vmul.f32 %v2605, %v2551
        %v2610 = vmul.f32 %v2606, %v2590
        %v2611 = vmul.f32 %v2607, %v2592
        %v2612 = vadd.f32 %v2549, %v2608
        %v2613 = vadd.f32 %v2551, %v2609
        %v2614 = vadd.f32 %v2590, %v2610
        %v2615 = vadd.f32 %v2592, %v2611
        %v2616 = vmul.f32 %v2612, 0.7978846
        %v2617 = vmul.f32 %v2613, 0.7978846
        %v2618 = vmul.f32 %v2614, 0.7978846
        %v2619 = vmul.f32 %v2615, 0.7978846
        %v2620 = vtanh.pop %v2616
        %v2621 = vtanh.pop %v2617
        %v2622 = vtanh.pop %v2618
        %v2623 = vtanh.pop %v2619
        %v2624 = vadd.f32 %v2620, 1.0
        %v2625 = vadd.f32 %v2621, 1.0
        %v2626 = vadd.f32 %v2622, 1.0
        %v2627 = vadd.f32 %v2623, 1.0
        %v2628 = vmul.f32 %v2596, %v2624
        %v2629 = vmul.f32 %v2597, %v2625
        %v2630 = vmul.f32 %v2598, %v2626
        %v2631 = vmul.f32 %v2599, %v2627
        %v2632 = vpack.c.bf16 %v2628, %v2628
        %v2633 = vpack.c.bf16 %v2629, %v2629
        %v2634 = vpack.c.bf16 %v2630, %v2630
        %v2635 = vpack.c.bf16 %v2631, %v2631
        %v2636 = vlaneseq
        %v2637 = vshrl.u32 %v2636, 7
        %v2638 = vsub.s32 5, %v2637
        %v2639 = vrot.slane %v777, %v2638
        %v2640 = vlaneseq
        %v2641 = vshrl.u32 %v2640, 7
        %v2642 = vsub.s32 5, %v2641
        %v2643 = vrot.slane %v778, %v2642
        %v2708 = vunpack.c.l.b16 %v975
        %v2709 = vunpack.c.h.b16 %v975
        %v2710 = vunpack.c.l.b16 %v976
        %v2711 = vunpack.c.h.b16 %v976
        %v2712 = vunpack.c.l.b16 %v977
        %v2713 = vunpack.c.h.b16 %v977
        %v2714 = vunpack.c.l.b16 %v978
        %v2715 = vunpack.c.h.b16 %v978
        %v2716 = vunpack.c.l.b16 %v979
        %v2717 = vunpack.c.h.b16 %v979
        %v2718 = vunpack.c.l.b16 %v980
        %v2719 = vunpack.c.h.b16 %v980
        %v2720 = vunpack.c.l.b16 %v981
        %v2721 = vunpack.c.h.b16 %v981
        %v2722 = vunpack.c.l.b16 %v982
        %v2723 = vunpack.c.h.b16 %v982
        %v2724 = vunpack.c.l.b16 %v983
        %v2725 = vunpack.c.h.b16 %v983
        %v2726 = vunpack.c.l.b16 %v984
        %v2727 = vunpack.c.h.b16 %v984
        %v2728 = vunpack.c.l.b16 %v985
        %v2729 = vunpack.c.h.b16 %v985
        %v2730 = vunpack.c.l.b16 %v986
        %v2731 = vunpack.c.h.b16 %v986
        %v2732 = vunpack.c.l.b16 %v987
        %v2733 = vunpack.c.h.b16 %v987
        %v2734 = vunpack.c.l.b16 %v988
        %v2735 = vunpack.c.h.b16 %v988
        %v2736 = vunpack.c.l.b16 %v989
        %v2737 = vunpack.c.h.b16 %v989
        %v2738 = vunpack.c.l.b16 %v990
        %v2739 = vunpack.c.h.b16 %v990
        %v2740 = vunpack.c.l.b16 %v991
        %v2741 = vunpack.c.h.b16 %v991
        %v2742 = vunpack.c.l.b16 %v992
        %v2743 = vunpack.c.h.b16 %v992
        %v2744 = vunpack.c.l.b16 %v993
        %v2745 = vunpack.c.h.b16 %v993
        %v2746 = vunpack.c.l.b16 %v994
        %v2747 = vunpack.c.h.b16 %v994
        %v2748 = vunpack.c.l.b16 %v995
        %v2749 = vunpack.c.h.b16 %v995
        %v2750 = vunpack.c.l.b16 %v996
        %v2751 = vunpack.c.h.b16 %v996
        %v2752 = vunpack.c.l.b16 %v997
        %v2753 = vunpack.c.h.b16 %v997
        %v2754 = vunpack.c.l.b16 %v998
        %v2755 = vunpack.c.h.b16 %v998
        %v2756 = vunpack.c.l.b16 %v999
        %v2757 = vunpack.c.h.b16 %v999
        %v2758 = vunpack.c.l.b16 %v1000
        %v2759 = vunpack.c.h.b16 %v1000
        %v2760 = vunpack.c.l.b16 %v1001
        %v2761 = vunpack.c.h.b16 %v1001
        %v2762 = vunpack.c.l.b16 %v1002
        %v2763 = vunpack.c.h.b16 %v1002
        %v2764 = vunpack.c.l.b16 %v1003
        %v2765 = vunpack.c.h.b16 %v1003
        %v2766 = vunpack.c.l.b16 %v1004
        %v2767 = vunpack.c.h.b16 %v1004
        %v2768 = vunpack.c.l.b16 %v1005
        %v2769 = vunpack.c.h.b16 %v1005
        %v2770 = vunpack.c.l.b16 %v1006
        %v2771 = vunpack.c.h.b16 %v1006
        %v2772 = vunpack.c.l.b16 %v1007
        %v2773 = vunpack.c.h.b16 %v1007
        %v2774 = vunpack.c.l.b16 %v1008
        %v2775 = vunpack.c.h.b16 %v1008
        %v2776 = vunpack.c.l.b16 %v1009
        %v2777 = vunpack.c.h.b16 %v1009
        %v2778 = vunpack.c.l.b16 %v1010
        %v2779 = vunpack.c.h.b16 %v1010
        %v2780 = vunpack.c.l.b16 %v1011
        %v2781 = vunpack.c.h.b16 %v1011
        %v2782 = vunpack.c.l.b16 %v1012
        %v2783 = vunpack.c.h.b16 %v1012
        %v2784 = vunpack.c.l.b16 %v1013
        %v2785 = vunpack.c.h.b16 %v1013
        %v2786 = vunpack.c.l.b16 %v1014
        %v2787 = vunpack.c.h.b16 %v1014
        %v2788 = vunpack.c.l.b16 %v1015
        %v2789 = vunpack.c.h.b16 %v1015
        %v2790 = vunpack.c.l.b16 %v1016
        %v2791 = vunpack.c.h.b16 %v1016
        %v2792 = vunpack.c.l.b16 %v1017
        %v2793 = vunpack.c.h.b16 %v1017
        %v2794 = vunpack.c.l.b16 %v1018
        %v2795 = vunpack.c.h.b16 %v1018
        %v2796 = vunpack.c.l.b16 %v1019
        %v2797 = vunpack.c.h.b16 %v1019
        %v2798 = vunpack.c.l.b16 %v1020
        %v2799 = vunpack.c.h.b16 %v1020
        %v2800 = vunpack.c.l.b16 %v1021
        %v2801 = vunpack.c.h.b16 %v1021
        %v2802 = vunpack.c.l.b16 %v1022
        %v2803 = vunpack.c.h.b16 %v1022
        %v2804 = vunpack.c.l.b16 %v1023
        %v2805 = vunpack.c.h.b16 %v1023
        %v2806 = vunpack.c.l.b16 %v1024
        %v2807 = vunpack.c.h.b16 %v1024
        %v2808 = vunpack.c.l.b16 %v1025
        %v2809 = vunpack.c.h.b16 %v1025
        %v2810 = vunpack.c.l.b16 %v1026
        %v2811 = vunpack.c.h.b16 %v1026
        %v2812 = vunpack.c.l.b16 %v1027
        %v2813 = vunpack.c.h.b16 %v1027
        %v2814 = vunpack.c.l.b16 %v1028
        %v2815 = vunpack.c.h.b16 %v1028
        %v2816 = vunpack.c.l.b16 %v1029
        %v2817 = vunpack.c.h.b16 %v1029
        %v2818 = vunpack.c.l.b16 %v1030
        %v2819 = vunpack.c.h.b16 %v1030
        %v2820 = vunpack.c.l.b16 %v1031
        %v2821 = vunpack.c.h.b16 %v1031
        %v2822 = vunpack.c.l.b16 %v1032
        %v2823 = vunpack.c.h.b16 %v1032
        %v2824 = vunpack.c.l.b16 %v1033
        %v2825 = vunpack.c.h.b16 %v1033
        %v2826 = vunpack.c.l.b16 %v1034
        %v2827 = vunpack.c.h.b16 %v1034
        %v2828 = vunpack.c.l.b16 %v1035
        %v2829 = vunpack.c.h.b16 %v1035
        %v2830 = vunpack.c.l.b16 %v1036
        %v2831 = vunpack.c.h.b16 %v1036
        %v2832 = vunpack.c.l.b16 %v1037
        %v2833 = vunpack.c.h.b16 %v1037
        %v2834 = vunpack.c.l.b16 %v1038
        %v2835 = vunpack.c.h.b16 %v1038
        %v2836 = vpack.c.b16 %v2710, %v2708
        %v2837 = vpack.c.b16 %v2711, %v2709
        %v2838 = vpack.c.b16 %v2714, %v2712
        %v2839 = vpack.c.b16 %v2715, %v2713
        %v2840 = vpack.c.b16 %v2718, %v2716
        %v2841 = vpack.c.b16 %v2719, %v2717
        %v2842 = vpack.c.b16 %v2722, %v2720
        %v2843 = vpack.c.b16 %v2723, %v2721
        %v2844 = vpack.c.b16 %v2726, %v2724
        %v2845 = vpack.c.b16 %v2727, %v2725
        %v2846 = vpack.c.b16 %v2730, %v2728
        %v2847 = vpack.c.b16 %v2731, %v2729
        %v2848 = vpack.c.b16 %v2734, %v2732
        %v2849 = vpack.c.b16 %v2735, %v2733
        %v2850 = vpack.c.b16 %v2738, %v2736
        %v2851 = vpack.c.b16 %v2739, %v2737
        %v2852 = vpack.c.b16 %v2742, %v2740
        %v2853 = vpack.c.b16 %v2743, %v2741
        %v2854 = vpack.c.b16 %v2746, %v2744
        %v2855 = vpack.c.b16 %v2747, %v2745
        %v2856 = vpack.c.b16 %v2750, %v2748
        %v2857 = vpack.c.b16 %v2751, %v2749
        %v2858 = vpack.c.b16 %v2754, %v2752
        %v2859 = vpack.c.b16 %v2755, %v2753
        %v2860 = vpack.c.b16 %v2758, %v2756
        %v2861 = vpack.c.b16 %v2759, %v2757
        %v2862 = vpack.c.b16 %v2762, %v2760
        %v2863 = vpack.c.b16 %v2763, %v2761
        %v2864 = vpack.c.b16 %v2766, %v2764
        %v2865 = vpack.c.b16 %v2767, %v2765
        %v2866 = vpack.c.b16 %v2770, %v2768
        %v2867 = vpack.c.b16 %v2771, %v2769
        %v2868 = vpack.c.b16 %v2774, %v2772
        %v2869 = vpack.c.b16 %v2775, %v2773
        %v2870 = vpack.c.b16 %v2778, %v2776
        %v2871 = vpack.c.b16 %v2779, %v2777
        %v2872 = vpack.c.b16 %v2782, %v2780
        %v2873 = vpack.c.b16 %v2783, %v2781
        %v2874 = vpack.c.b16 %v2786, %v2784
        %v2875 = vpack.c.b16 %v2787, %v2785
        %v2876 = vpack.c.b16 %v2790, %v2788
        %v2877 = vpack.c.b16 %v2791, %v2789
        %v2878 = vpack.c.b16 %v2794, %v2792
        %v2879 = vpack.c.b16 %v2795, %v2793
        %v2880 = vpack.c.b16 %v2798, %v2796
        %v2881 = vpack.c.b16 %v2799, %v2797
        %v2882 = vpack.c.b16 %v2802, %v2800
        %v2883 = vpack.c.b16 %v2803, %v2801
        %v2884 = vpack.c.b16 %v2806, %v2804
        %v2885 = vpack.c.b16 %v2807, %v2805
        %v2886 = vpack.c.b16 %v2810, %v2808
        %v2887 = vpack.c.b16 %v2811, %v2809
        %v2888 = vpack.c.b16 %v2814, %v2812
        %v2889 = vpack.c.b16 %v2815, %v2813
        %v2890 = vpack.c.b16 %v2818, %v2816
        %v2891 = vpack.c.b16 %v2819, %v2817
        %v2892 = vpack.c.b16 %v2822, %v2820
        %v2893 = vpack.c.b16 %v2823, %v2821
        %v2894 = vpack.c.b16 %v2826, %v2824
        %v2895 = vpack.c.b16 %v2827, %v2825
        %v2896 = vpack.c.b16 %v2830, %v2828
        %v2897 = vpack.c.b16 %v2831, %v2829
        %v2898 = vpack.c.b16 %v2834, %v2832
        %v2899 = vpack.c.b16 %v2835, %v2833
        %2964 = vmatprep.subr.bf16.mxu0 %v2851
        %2965 = vmatpush1.bf16.msra.mxu0 %v2850
        %2966 = vmatprep.subr.bf16.mxu0 %v2849
        %2967 = vmatpush1.bf16.msra.mxu0 %v2848
        %2968 = vmatprep.subr.bf16.mxu0 %v2847
        %2969 = vmatpush1.bf16.msra.mxu0 %v2846
        %2970 = vmatprep.subr.bf16.mxu0 %v2845
        %2971 = vmatpush1.bf16.msra.mxu0 %v2844
        %2972 = vmatprep.subr.bf16.mxu0 %v2843
        %2973 = vmatpush1.bf16.msra.mxu0 %v2842
        %2974 = vmatprep.subr.bf16.mxu0 %v2841
        %2975 = vmatpush1.bf16.msra.mxu0 %v2840
        %2976 = vmatprep.subr.bf16.mxu0 %v2839
        %2977 = vmatpush1.bf16.msra.mxu0 %v2838
        %2978 = vmatprep.subr.bf16.mxu0 %v2837
        %2979 = vmatpush1.bf16.msra.mxu0 %v2836
        %2980 = vmatprep.subr.bf16.mxu0 %v2867
        %2981 = vmatpush2.bf16.msra.mxu0 %v2866
        %2982 = vmatprep.subr.bf16.mxu0 %v2865
        %2983 = vmatpush2.bf16.msra.mxu0 %v2864
        %2984 = vmatprep.subr.bf16.mxu0 %v2863
        %2985 = vmatpush2.bf16.msra.mxu0 %v2862
        %2986 = vmatprep.subr.bf16.mxu0 %v2861
        %2987 = vmatpush2.bf16.msra.mxu0 %v2860
        %2988 = vmatprep.subr.bf16.mxu0 %v2859
        %2989 = vmatpush2.bf16.msra.mxu0 %v2858
        %2990 = vmatprep.subr.bf16.mxu0 %v2857
        %2991 = vmatpush2.bf16.msra.mxu0 %v2856
        %2992 = vmatprep.subr.bf16.mxu0 %v2855
        %2993 = vmatpush2.bf16.msra.mxu0 %v2854
        %2994 = vmatprep.subr.bf16.mxu0 %v2853
        %2995 = vmatpush2.bf16.msra.mxu0 %v2852
        %2996 = vmatprep.mubr.bf16.mxu0 %v2633
        %2997 = vmatmul.mubr.bf16.gmra.mxu0 %v2632
        %v2998 = vpop.f32.mrf.mxu0
        %v2999 = vadd.f32 %v2639, %v2998
        %v3000 = vpop.f32.mrf.mxu0
        %v3001 = vadd.f32 %v2643, %v3000
        %v3002 = vpop.f32.mrf.mxu0
        %v3003 = vpop.f32.mrf.mxu0
        %3004 = vdwg.mxu0
        %3005 = vmatprep.subr.bf16.mxu0 %v2883
        %3006 = vmatpush1.bf16.msra.mxu0 %v2882
        %3007 = vmatprep.subr.bf16.mxu0 %v2881
        %3008 = vmatpush1.bf16.msra.mxu0 %v2880
        %3009 = vmatprep.subr.bf16.mxu0 %v2879
        %3010 = vmatpush1.bf16.msra.mxu0 %v2878
        %3011 = vmatprep.subr.bf16.mxu0 %v2877
        %3012 = vmatpush1.bf16.msra.mxu0 %v2876
        %3013 = vmatprep.subr.bf16.mxu0 %v2875
        %3014 = vmatpush1.bf16.msra.mxu0 %v2874
        %3015 = vmatprep.subr.bf16.mxu0 %v2873
        %3016 = vmatpush1.bf16.msra.mxu0 %v2872
        %3017 = vmatprep.subr.bf16.mxu0 %v2871
        %3018 = vmatpush1.bf16.msra.mxu0 %v2870
        %3019 = vmatprep.subr.bf16.mxu0 %v2869
        %3020 = vmatpush1.bf16.msra.mxu0 %v2868
        %3021 = vmatprep.subr.bf16.mxu0 %v2899
        %3022 = vmatpush2.bf16.msra.mxu0 %v2898
        %3023 = vmatprep.subr.bf16.mxu0 %v2897
        %3024 = vmatpush2.bf16.msra.mxu0 %v2896
        %3025 = vmatprep.subr.bf16.mxu0 %v2895
        %3026 = vmatpush2.bf16.msra.mxu0 %v2894
        %3027 = vmatprep.subr.bf16.mxu0 %v2893
        %3028 = vmatpush2.bf16.msra.mxu0 %v2892
        %3029 = vmatprep.subr.bf16.mxu0 %v2891
        %3030 = vmatpush2.bf16.msra.mxu0 %v2890
        %3031 = vmatprep.subr.bf16.mxu0 %v2889
        %3032 = vmatpush2.bf16.msra.mxu0 %v2888
        %3033 = vmatprep.subr.bf16.mxu0 %v2887
        %3034 = vmatpush2.bf16.msra.mxu0 %v2886
        %3035 = vmatprep.subr.bf16.mxu0 %v2885
        %3036 = vmatpush2.bf16.msra.mxu0 %v2884
        %3037 = vmatprep.mubr.bf16.mxu0 %v2635
        %3038 = vmatmul.mubr.bf16.gmra.mxu0 %v2634
        %v3039 = vpop.f32.mrf.mxu0
        %v3040 = vadd.f32 %v2999, %v3039
        %v3041 = vpop.f32.mrf.mxu0
        %v3042 = vadd.f32 %v3001, %v3041
        %v3043 = vpop.f32.mrf.mxu0
        %v3044 = vpop.f32.mrf.mxu0
        %3045 = vdwg.mxu0
        %v3046 = vadd.f32 %v3040, %v2174
        %v3047 = vadd.f32 %v3042, %v2175
        %v3048 = vadd.f32 %v3046, %v3047
        %3049 = vadd.xlane.f32.xlu0 %v3048
        %v3050 = vpop.xlane.xlu0 %3049
        %v3051 = vmul.f32 %v3050, %v2142
        %v3052 = vsub.f32 %v3046, %v3051
        %v3053 = vsub.f32 %v3047, %v3051
        %v3054 = vmul.f32 %v3052, %v3052
        %v3055 = vmul.f32 %v3053, %v3053
        %v3056 = vadd.f32 %v3054, %v3055
        %3057 = vadd.xlane.f32.xlu0 %v3056
        %v3058 = vpop.xlane.xlu0 %3057
        %v3059 = vmul.f32 %v3058, %v2142
        %v3060 = vadd.f32 %v3059, 1e-12
        %v3061 = vrsqrt.pop %v3060
        %v3062 = vmul.f32 %v3052, %v3061
        %v3063 = vmul.f32 %v3053, %v3061
        %v3064 = vlaneseq
        %v3065 = vshrl.u32 %v3064, 7
        %v3066 = vsub.s32 6, %v3065
        %v3067 = vrot.slane %v777, %v3066
        %v3068 = vlaneseq
        %v3069 = vshrl.u32 %v3068, 7
        %v3070 = vsub.s32 6, %v3069
        %v3071 = vrot.slane %v778, %v3070
        %v3072 = vmul.f32 %v3062, %v3067
        %v3073 = vmul.f32 %v3063, %v3071
        %v3074 = vlaneseq
        %v3075 = vshrl.u32 %v3074, 7
        %v3076 = vsub.s32 7, %v3075
        %v3077 = vrot.slane %v777, %v3076
        %v3078 = vlaneseq
        %v3079 = vshrl.u32 %v3078, 7
        %v3080 = vsub.s32 7, %v3079
        %v3081 = vrot.slane %v778, %v3080
        %v3082 = vadd.f32 %v3072, %v3077
        %v3083 = vadd.f32 %v3073, %v3081
        %3084 = vst [vmem:[#allocation2] sm:$0xff] %v3082
        %3085 = vst [vmem:[#allocation2 + $0x8] sm:$0xff] %v3083
        %p3086 = scmp.eq.s32.totalorder %s45, 1
        // Predicated region
        $region113: #{tpu_custom_call.1} parent=71 // pred_check
          %p3087 = pneg %p3086
        $region114: #{tpu_custom_call.1} parent=71 // pred_check_branch
          %3089 = sbr.rel (%p3087) target = $region116
        $region115: #{tpu_custom_call.1} parent=71 // pred_region
          %v3090 = vpack.c.bf16 %v3082, %v3082
          %v3091 = vpack.c.bf16 %v3083, %v3083
          %v3092 = vld [vmem:[#allocation15] sm:$0xff]
          %v3093 = vld [vmem:[#allocation15 + $0x8] sm:$0xff]
          %v3094 = vld [vmem:[#allocation15 + $0x10] sm:$0xff]
          %v3095 = vld [vmem:[#allocation15 + $0x18] sm:$0xff]
          %v3096 = vld [vmem:[#allocation15 + $0x20] sm:$0xff]
          %v3097 = vld [vmem:[#allocation15 + $0x28] sm:$0xff]
          %v3098 = vld [vmem:[#allocation15 + $0x30] sm:$0xff]
          %v3099 = vld [vmem:[#allocation15 + $0x38] sm:$0xff]
          %v3100 = vld [vmem:[#allocation15 + $0x40] sm:$0xff]
          %v3101 = vld [vmem:[#allocation15 + $0x48] sm:$0xff]
          %v3102 = vld [vmem:[#allocation15 + $0x50] sm:$0xff]
          %v3103 = vld [vmem:[#allocation15 + $0x58] sm:$0xff]
          %v3104 = vld [vmem:[#allocation15 + $0x60] sm:$0xff]
          %v3105 = vld [vmem:[#allocation15 + $0x68] sm:$0xff]
          %v3106 = vld [vmem:[#allocation15 + $0x70] sm:$0xff]
          %v3107 = vld [vmem:[#allocation15 + $0x78] sm:$0xff]
          %v3108 = vld [vmem:[#allocation15 + $0x80] sm:$0xff]
          %v3109 = vld [vmem:[#allocation15 + $0x88] sm:$0xff]
          %v3110 = vld [vmem:[#allocation15 + $0x90] sm:$0xff]
          %v3111 = vld [vmem:[#allocation15 + $0x98] sm:$0xff]
          %v3112 = vld [vmem:[#allocation15 + $0xa0] sm:$0xff]
          %v3113 = vld [vmem:[#allocation15 + $0xa8] sm:$0xff]
          %v3114 = vld [vmem:[#allocation15 + $0xb0] sm:$0xff]
          %v3115 = vld [vmem:[#allocation15 + $0xb8] sm:$0xff]
          %v3116 = vld [vmem:[#allocation15 + $0xc0] sm:$0xff]
          %v3117 = vld [vmem:[#allocation15 + $0xc8] sm:$0xff]
          %v3118 = vld [vmem:[#allocation15 + $0xd0] sm:$0xff]
          %v3119 = vld [vmem:[#allocation15 + $0xd8] sm:$0xff]
          %v3120 = vld [vmem:[#allocation15 + $0xe0] sm:$0xff]
          %v3121 = vld [vmem:[#allocation15 + $0xe8] sm:$0xff]
          %v3122 = vld [vmem:[#allocation15 + $0xf0] sm:$0xff]
          %v3123 = vld [vmem:[#allocation15 + $0xf8] sm:$0xff]
          %v3124 = vld [vmem:[%s10] sm:$0x3]
          %v3157 = vunpack.c.l.b16 %v3092
          %v3158 = vunpack.c.h.b16 %v3092
          %v3159 = vunpack.c.l.b16 %v3093
          %v3160 = vunpack.c.h.b16 %v3093
          %v3161 = vunpack.c.l.b16 %v3094
          %v3162 = vunpack.c.h.b16 %v3094
          %v3163 = vunpack.c.l.b16 %v3095
          %v3164 = vunpack.c.h.b16 %v3095
          %v3165 = vunpack.c.l.b16 %v3096
          %v3166 = vunpack.c.h.b16 %v3096
          %v3167 = vunpack.c.l.b16 %v3097
          %v3168 = vunpack.c.h.b16 %v3097
          %v3169 = vunpack.c.l.b16 %v3098
          %v3170 = vunpack.c.h.b16 %v3098
          %v3171 = vunpack.c.l.b16 %v3099
          %v3172 = vunpack.c.h.b16 %v3099
          %v3173 = vunpack.c.l.b16 %v3100
          %v3174 = vunpack.c.h.b16 %v3100
          %v3175 = vunpack.c.l.b16 %v3101
          %v3176 = vunpack.c.h.b16 %v3101
          %v3177 = vunpack.c.l.b16 %v3102
          %v3178 = vunpack.c.h.b16 %v3102
          %v3179 = vunpack.c.l.b16 %v3103
          %v3180 = vunpack.c.h.b16 %v3103
          %v3181 = vunpack.c.l.b16 %v3104
          %v3182 = vunpack.c.h.b16 %v3104
          %v3183 = vunpack.c.l.b16 %v3105
          %v3184 = vunpack.c.h.b16 %v3105
          %v3185 = vunpack.c.l.b16 %v3106
          %v3186 = vunpack.c.h.b16 %v3106
          %v3187 = vunpack.c.l.b16 %v3107
          %v3188 = vunpack.c.h.b16 %v3107
          %v3189 = vunpack.c.l.b16 %v3108
          %v3190 = vunpack.c.h.b16 %v3108
          %v3191 = vunpack.c.l.b16 %v3109
          %v3192 = vunpack.c.h.b16 %v3109
          %v3193 = vunpack.c.l.b16 %v3110
          %v3194 = vunpack.c.h.b16 %v3110
          %v3195 = vunpack.c.l.b16 %v3111
          %v3196 = vunpack.c.h.b16 %v3111
          %v3197 = vunpack.c.l.b16 %v3112
          %v3198 = vunpack.c.h.b16 %v3112
          %v3199 = vunpack.c.l.b16 %v3113
          %v3200 = vunpack.c.h.b16 %v3113
          %v3201 = vunpack.c.l.b16 %v3114
          %v3202 = vunpack.c.h.b16 %v3114
          %v3203 = vunpack.c.l.b16 %v3115
          %v3204 = vunpack.c.h.b16 %v3115
          %v3205 = vunpack.c.l.b16 %v3116
          %v3206 = vunpack.c.h.b16 %v3116
          %v3207 = vunpack.c.l.b16 %v3117
          %v3208 = vunpack.c.h.b16 %v3117
          %v3209 = vunpack.c.l.b16 %v3118
          %v3210 = vunpack.c.h.b16 %v3118
          %v3211 = vunpack.c.l.b16 %v3119
          %v3212 = vunpack.c.h.b16 %v3119
          %v3213 = vunpack.c.l.b16 %v3120
          %v3214 = vunpack.c.h.b16 %v3120
          %v3215 = vunpack.c.l.b16 %v3121
          %v3216 = vunpack.c.h.b16 %v3121
          %v3217 = vunpack.c.l.b16 %v3122
          %v3218 = vunpack.c.h.b16 %v3122
          %v3219 = vunpack.c.l.b16 %v3123
          %v3220 = vunpack.c.h.b16 %v3123
          %v3221 = vpack.c.b16 %v3159, %v3157
          %v3222 = vpack.c.b16 %v3160, %v3158
          %v3223 = vpack.c.b16 %v3163, %v3161
          %v3224 = vpack.c.b16 %v3164, %v3162
          %v3225 = vpack.c.b16 %v3167, %v3165
          %v3226 = vpack.c.b16 %v3168, %v3166
          %v3227 = vpack.c.b16 %v3171, %v3169
          %v3228 = vpack.c.b16 %v3172, %v3170
          %v3229 = vpack.c.b16 %v3175, %v3173
          %v3230 = vpack.c.b16 %v3176, %v3174
          %v3231 = vpack.c.b16 %v3179, %v3177
          %v3232 = vpack.c.b16 %v3180, %v3178
          %v3233 = vpack.c.b16 %v3183, %v3181
          %v3234 = vpack.c.b16 %v3184, %v3182
          %v3235 = vpack.c.b16 %v3187, %v3185
          %v3236 = vpack.c.b16 %v3188, %v3186
          %v3237 = vpack.c.b16 %v3191, %v3189
          %v3238 = vpack.c.b16 %v3192, %v3190
          %v3239 = vpack.c.b16 %v3195, %v3193
          %v3240 = vpack.c.b16 %v3196, %v3194
          %v3241 = vpack.c.b16 %v3199, %v3197
          %v3242 = vpack.c.b16 %v3200, %v3198
          %v3243 = vpack.c.b16 %v3203, %v3201
          %v3244 = vpack.c.b16 %v3204, %v3202
          %v3245 = vpack.c.b16 %v3207, %v3205
          %v3246 = vpack.c.b16 %v3208, %v3206
          %v3247 = vpack.c.b16 %v3211, %v3209
          %v3248 = vpack.c.b16 %v3212, %v3210
          %v3249 = vpack.c.b16 %v3215, %v3213
          %v3250 = vpack.c.b16 %v3216, %v3214
          %v3251 = vpack.c.b16 %v3219, %v3217
          %v3252 = vpack.c.b16 %v3220, %v3218
          %v3286 = vlaneseq
          %v3287 = vshrl.u32 %v3286, 7
          %v3288 = vsub.s32 0, %v3287
          %v3289 = vrot.slane %v3124, %v3288
          %v3290 = vlaneseq
          %v3291 = vshrl.u32 %v3290, 7
          %v3292 = vsub.s32 1, %v3291
          %v3293 = vrot.slane %v3124, %v3292
          %3296 = vmatprep.subr.bf16.mxu0 %v3236
          %3297 = vmatpush1.bf16.msra.mxu0 %v3235
          %3298 = vmatprep.subr.bf16.mxu0 %v3234
          %3299 = vmatpush1.bf16.msra.mxu0 %v3233
          %3300 = vmatprep.subr.bf16.mxu0 %v3232
          %3301 = vmatpush1.bf16.msra.mxu0 %v3231
          %3302 = vmatprep.subr.bf16.mxu0 %v3230
          %3303 = vmatpush1.bf16.msra.mxu0 %v3229
          %3304 = vmatprep.subr.bf16.mxu0 %v3228
          %3305 = vmatpush1.bf16.msra.mxu0 %v3227
          %3306 = vmatprep.subr.bf16.mxu0 %v3226
          %3307 = vmatpush1.bf16.msra.mxu0 %v3225
          %3308 = vmatprep.subr.bf16.mxu0 %v3224
          %3309 = vmatpush1.bf16.msra.mxu0 %v3223
          %3310 = vmatprep.subr.bf16.mxu0 %v3222
          %3311 = vmatpush1.bf16.msra.mxu0 %v3221
          %3312 = vmatprep.subr.bf16.mxu0 %v3252
          %3313 = vmatpush2.bf16.msra.mxu0 %v3251
          %3314 = vmatprep.subr.bf16.mxu0 %v3250
          %3315 = vmatpush2.bf16.msra.mxu0 %v3249
          %3316 = vmatprep.subr.bf16.mxu0 %v3248
          %3317 = vmatpush2.bf16.msra.mxu0 %v3247
          %3318 = vmatprep.subr.bf16.mxu0 %v3246
          %3319 = vmatpush2.bf16.msra.mxu0 %v3245
          %3320 = vmatprep.subr.bf16.mxu0 %v3244
          %3321 = vmatpush2.bf16.msra.mxu0 %v3243
          %3322 = vmatprep.subr.bf16.mxu0 %v3242
          %3323 = vmatpush2.bf16.msra.mxu0 %v3241
          %3324 = vmatprep.subr.bf16.mxu0 %v3240
          %3325 = vmatpush2.bf16.msra.mxu0 %v3239
          %3326 = vmatprep.subr.bf16.mxu0 %v3238
          %3327 = vmatpush2.bf16.msra.mxu0 %v3237
          %3328 = vmatprep.mubr.bf16.mxu0 %v3091
          %3329 = vmatmul.mubr.bf16.gmra.mxu0 %v3090
          %v3330 = vpop.f32.mrf.mxu0
          %v3331 = vadd.f32 %v3289, %v3330
          %v3332 = vpop.f32.mrf.mxu0
          %v3333 = vadd.f32 %v3293, %v3332
          %v3334 = vpop.f32.mrf.mxu0
          %v3335 = vpop.f32.mrf.mxu0
          %3336 = vdwg.mxu0
          %v3337 = vtanh.pop %v3331
          %v3338 = vtanh.pop %v3333
          %v3339 = vpack.c.bf16 %v3337, %v3337
          %v3340 = vpack.c.bf16 %v3338, %v3338
          %v3341 = vld [vmem:[#allocation17] sm:$0xf]
          %v3342 = vld [vmem:[#allocation17 + $0x4] sm:$0xf]
          %v3343 = vld [vmem:[#allocation17 + $0x8] sm:$0xf]
          %v3344 = vld [vmem:[#allocation17 + $0xc] sm:$0xf]
          %v3345 = vld [vmem:[#allocation17 + $0x10] sm:$0xf]
          %v3346 = vld [vmem:[#allocation17 + $0x14] sm:$0xf]
          %v3347 = vld [vmem:[#allocation17 + $0x18] sm:$0xf]
          %v3348 = vld [vmem:[#allocation17 + $0x1c] sm:$0xf]
          %v3349 = vld [vmem:[#allocation17 + $0x20] sm:$0xf]
          %v3350 = vld [vmem:[#allocation17 + $0x24] sm:$0xf]
          %v3351 = vld [vmem:[#allocation17 + $0x28] sm:$0xf]
          %v3352 = vld [vmem:[#allocation17 + $0x2c] sm:$0xf]
          %v3353 = vld [vmem:[#allocation17 + $0x30] sm:$0xf]
          %v3354 = vld [vmem:[#allocation17 + $0x34] sm:$0xf]
          %v3355 = vld [vmem:[#allocation17 + $0x38] sm:$0xf]
          %v3356 = vld [vmem:[#allocation17 + $0x3c] sm:$0xf]
          %v3357 = vld [vmem:[#allocation17 + $0x40] sm:$0xf]
          %v3358 = vld [vmem:[#allocation17 + $0x44] sm:$0xf]
          %v3359 = vld [vmem:[#allocation17 + $0x48] sm:$0xf]
          %v3360 = vld [vmem:[#allocation17 + $0x4c] sm:$0xf]
          %v3361 = vld [vmem:[#allocation17 + $0x50] sm:$0xf]
          %v3362 = vld [vmem:[#allocation17 + $0x54] sm:$0xf]
          %v3363 = vld [vmem:[#allocation17 + $0x58] sm:$0xf]
          %v3364 = vld [vmem:[#allocation17 + $0x5c] sm:$0xf]
          %v3365 = vld [vmem:[#allocation17 + $0x60] sm:$0xf]
          %v3366 = vld [vmem:[#allocation17 + $0x64] sm:$0xf]
          %v3367 = vld [vmem:[#allocation17 + $0x68] sm:$0xf]
          %v3368 = vld [vmem:[#allocation17 + $0x6c] sm:$0xf]
          %v3369 = vld [vmem:[#allocation17 + $0x70] sm:$0xf]
          %v3370 = vld [vmem:[#allocation17 + $0x74] sm:$0xf]
          %v3371 = vld [vmem:[#allocation17 + $0x78] sm:$0xf]
          %v3372 = vld [vmem:[#allocation17 + $0x7c] sm:$0xf]
          %v3373 = vld [vmem:[%s12] sm:$0x1]
          %v3406 = vunpack.c.l.b16 %v3341
          %v3407 = vunpack.c.l.b16 %v3342
          %v3408 = vunpack.c.l.b16 %v3343
          %v3409 = vunpack.c.l.b16 %v3344
          %v3410 = vunpack.c.l.b16 %v3345
          %v3411 = vunpack.c.l.b16 %v3346
          %v3412 = vunpack.c.l.b16 %v3347
          %v3413 = vunpack.c.l.b16 %v3348
          %v3414 = vunpack.c.l.b16 %v3349
          %v3415 = vunpack.c.l.b16 %v3350
          %v3416 = vunpack.c.l.b16 %v3351
          %v3417 = vunpack.c.l.b16 %v3352
          %v3418 = vunpack.c.l.b16 %v3353
          %v3419 = vunpack.c.l.b16 %v3354
          %v3420 = vunpack.c.l.b16 %v3355
          %v3421 = vunpack.c.l.b16 %v3356
          %v3422 = vunpack.c.l.b16 %v3357
          %v3423 = vunpack.c.l.b16 %v3358
          %v3424 = vunpack.c.l.b16 %v3359
          %v3425 = vunpack.c.l.b16 %v3360
          %v3426 = vunpack.c.l.b16 %v3361
          %v3427 = vunpack.c.l.b16 %v3362
          %v3428 = vunpack.c.l.b16 %v3363
          %v3429 = vunpack.c.l.b16 %v3364
          %v3430 = vunpack.c.l.b16 %v3365
          %v3431 = vunpack.c.l.b16 %v3366
          %v3432 = vunpack.c.l.b16 %v3367
          %v3433 = vunpack.c.l.b16 %v3368
          %v3434 = vunpack.c.l.b16 %v3369
          %v3435 = vunpack.c.l.b16 %v3370
          %v3436 = vunpack.c.l.b16 %v3371
          %v3437 = vunpack.c.l.b16 %v3372
          %v3438 = vpack.c.b16 %v3407, %v3406
          %v3439 = vpack.c.b16 %v3409, %v3408
          %v3440 = vpack.c.b16 %v3411, %v3410
          %v3441 = vpack.c.b16 %v3413, %v3412
          %v3442 = vpack.c.b16 %v3415, %v3414
          %v3443 = vpack.c.b16 %v3417, %v3416
          %v3444 = vpack.c.b16 %v3419, %v3418
          %v3445 = vpack.c.b16 %v3421, %v3420
          %v3446 = vpack.c.b16 %v3423, %v3422
          %v3447 = vpack.c.b16 %v3425, %v3424
          %v3448 = vpack.c.b16 %v3427, %v3426
          %v3449 = vpack.c.b16 %v3429, %v3428
          %v3450 = vpack.c.b16 %v3431, %v3430
          %v3451 = vpack.c.b16 %v3433, %v3432
          %v3452 = vpack.c.b16 %v3435, %v3434
          %v3453 = vpack.c.b16 %v3437, %v3436
          %3470 = vmatprep.subr.bf16.mxu0 0
          %3471 = vmatpush1.bf16.msra.mxu0 %v3445
          %3472 = vmatprep.subr.bf16.mxu0 0
          %3473 = vmatpush1.bf16.msra.mxu0 %v3444
          %3474 = vmatprep.subr.bf16.mxu0 0
          %3475 = vmatpush1.bf16.msra.mxu0 %v3443
          %3476 = vmatprep.subr.bf16.mxu0 0
          %3477 = vmatpush1.bf16.msra.mxu0 %v3442
          %3478 = vmatprep.subr.bf16.mxu0 0
          %3479 = vmatpush1.bf16.msra.mxu0 %v3441
          %3480 = vmatprep.subr.bf16.mxu0 0
          %3481 = vmatpush1.bf16.msra.mxu0 %v3440
          %3482 = vmatprep.subr.bf16.mxu0 0
          %3483 = vmatpush1.bf16.msra.mxu0 %v3439
          %3484 = vmatprep.subr.bf16.mxu0 0
          %3485 = vmatpush1.bf16.msra.mxu0 %v3438
          %3486 = vmatprep.subr.bf16.mxu0 0
          %3487 = vmatpush2.bf16.msra.mxu0 %v3453
          %3488 = vmatprep.subr.bf16.mxu0 0
          %3489 = vmatpush2.bf16.msra.mxu0 %v3452
          %3490 = vmatprep.subr.bf16.mxu0 0
          %3491 = vmatpush2.bf16.msra.mxu0 %v3451
          %3492 = vmatprep.subr.bf16.mxu0 0
          %3493 = vmatpush2.bf16.msra.mxu0 %v3450
          %3494 = vmatprep.subr.bf16.mxu0 0
          %3495 = vmatpush2.bf16.msra.mxu0 %v3449
          %3496 = vmatprep.subr.bf16.mxu0 0
          %3497 = vmatpush2.bf16.msra.mxu0 %v3448
          %3498 = vmatprep.subr.bf16.mxu0 0
          %3499 = vmatpush2.bf16.msra.mxu0 %v3447
          %3500 = vmatprep.subr.bf16.mxu0 0
          %3501 = vmatpush2.bf16.msra.mxu0 %v3446
          %3502 = vmatprep.mubr.bf16.mxu0 %v3340
          %3503 = vmatmul.mubr.bf16.gmra.mxu0 %v3339
          %v3504 = vpop.f32.mrf.mxu0
          %v3505 = vadd.f32 %v3373, %v3504
          %v3506 = vpop.f32.mrf.mxu0
          %v3507 = vpop.f32.mrf.mxu0
          %v3508 = vpop.f32.mrf.mxu0
          %3509 = vdwg.mxu0
          %3510 = vst [vmem:[%s719] sm:$0x1] %v3505
        $region116: #{tpu_custom_call.1} parent=71 // pred_fallthru
          _
        %s3511 = sand.u32 %s368, 1
        %s3512 = scalar_lea.sflag [#allocation5], %s3511
        %s3513 = sand.u32 %s368, 1
        %s3514 = scalar_lea.vmem [#allocation18], %s3513
        // Predicated region
        $region117: #{tpu_custom_call.1} parent=71 // pred_check
          %p3515 = pneg %p378
        $region118: #{tpu_custom_call.1} parent=71 // pred_check_branch
          %3517 = sbr.rel (%p3515) target = $region120
        $region119: #{tpu_custom_call.1} parent=71 // pred_region
          %s3519 = ssub.s32 16, 16
          %3520 = vsyncadd %s3512, %s3519
          %s3521 = smul.addr %s44, 16
          %s3522 = scalar_lea.hbm %s13, %s3521
          %s3524 = sshll.u32 %s3514, 4
          %s3525 = int_to_ptr.vmem [resolvable:$true] %s3524
          %3527 = dma.vmem_to_hbm [thread:$0]  %s3525, 16, %s3522, %s3512
        $region120: #{tpu_custom_call.1} parent=71 // pred_fallthru
          _
      $region72: #{tpu_custom_call.1} parent=5 // pred_fallthru
        _
      %p3528 = scmp.le.s32.totalorder 2, %s35
      // Predicated region
      $region121: #{tpu_custom_call.1} parent=5 // pred_check
        %p3529 = pneg %p3528
      $region122: #{tpu_custom_call.1} parent=5 // pred_check_branch
        %3531 = sbr.rel (%p3529) target = $region124
      $region123: #{tpu_custom_call.1} parent=5 // pred_region
        %s3532 = ssub.s32 %s35, 2
        // Predicated region
        $region125: #{tpu_custom_call.1} parent=123 // pred_check
          %p3533 = pneg %p384
        $region126: #{tpu_custom_call.1} parent=123 // pred_check_branch
          %3535 = sbr.rel (%p3533) target = $region128
        $region127: #{tpu_custom_call.1} parent=123 // pred_region
          %s3536 = sand.u32 %s369, 1
          %s3537 = scalar_lea.sflag [#allocation5], %s3536
          %s3538 = sand.u32 %s369, 1
          %s3539 = scalar_lea.vmem [#allocation18], %s3538
          %3540 = dma.done %s3537, 16
        $region128: #{tpu_custom_call.1} parent=123 // pred_fallthru
          _
      $region124: #{tpu_custom_call.1} parent=5 // pred_fallthru
        _
    $region6: #{tpu_custom_call.1} parent=1 // loop_footer
      %s39 = sadd.s32 1, %s35
    $region7: #{tpu_custom_call.1} parent=1 // loop_footer_branch
      %34 = sbr.rel target = $region3
    $region8: #{tpu_custom_call.1} parent=1 // loop_exit
      _
    %3541 = vsyncpa [#allocation4], 1
    %s3542 = scalar_lea.sflag [#allocation4], 1
    %3543 = vsyncpa %s3542, 1
    %3544 = vsyncpa [#allocation7], 1
    %s3545 = scalar_lea.sflag [#allocation7], 1
    %3546 = vsyncpa %s3545, 1
    %3547 = vsyncpa [#allocation10], 1
    %s3548 = scalar_lea.sflag [#allocation10], 1
    %3549 = vsyncpa %s3548, 1
    %3550 = vsyncpa [#allocation13], 1
    %s3551 = scalar_lea.sflag [#allocation13], 1
    %3552 = vsyncpa %s3551, 1
    %3553 = vsyncpa [#allocation16], 1
    %3554 = vsyncpa [#allocation5], 1
    %s3555 = scalar_lea.sflag [#allocation5], 1
    %3556 = vsyncpa %s3555, 1

</llo_original>
